<compile_context>
chip_gen: v7x
topology: tpu7x:2x2x1
jax: 0.10.0
libtpu: 0.0.40
codegen_flags: <defaults>
</compile_context>

<pallas_src>
import functools

import numpy as np
import jax
import jax.numpy as jnp
from jax.experimental import pallas as pl
from jax.experimental.pallas import tpu as pltpu


# ----------------------------- in-kernel helpers ----------------------------


def _ln(x, g, b, eps):
    x = x.astype(jnp.float32)
    mu = jnp.mean(x, axis=-1, keepdims=True)
    var = jnp.mean(jnp.square(x - mu), axis=-1, keepdims=True)
    return (x - mu) * jax.lax.rsqrt(var + eps) * g + b


def _gelu_tanh(x):
    # TODO(synk): HF Swinv2 uses exact erf GELU; tanh approximation used here.
    c = 0.7978845608028654  # sqrt(2/pi)
    return 0.5 * x * (1.0 + jnp.tanh(c * (x + 0.044715 * x * x * x)))


# ----------------------------- Pallas kernels -------------------------------


def _swin_block_kernel(x_ref, qkv_w_ref, qkv_b_ref, proj_w_ref, proj_b_ref,
                       bias_ref, scale_ref, ln1_g_ref, ln1_b_ref,
                       fc1_w_ref, fc1_b_ref, fc2_w_ref, fc2_b_ref,
                       ln2_g_ref, ln2_b_ref, o_ref, *, num_heads, eps):
    # One grid step == one (window, batch) element.  Everything stays in VMEM.
    x = x_ref[0].astype(jnp.float32)                       # (L, C)
    L, C = x.shape
    hd = C // num_heads

    # Fused QKV projection: bf16 MXU operands, f32 accumulation.
    qkv = jnp.dot(x.astype(jnp.bfloat16), qkv_w_ref[...],
                  preferred_element_type=jnp.float32) + qkv_b_ref[...]
    q, k, v = qkv[:, :C], qkv[:, C:2 * C], qkv[:, 2 * C:]

    # Swin-v2 cosine attention (per head, statically unrolled; nh is 2 or 4).
    ctx_parts = []
    for h in range(num_heads):
        sl = slice(h * hd, (h + 1) * hd)
        qh, kh, vh = q[:, sl], k[:, sl], v[:, sl]
        qn = qh * jax.lax.rsqrt(
            jnp.maximum(jnp.sum(qh * qh, axis=-1, keepdims=True), 1e-24))
        kn = kh * jax.lax.rsqrt(
            jnp.maximum(jnp.sum(kh * kh, axis=-1, keepdims=True), 1e-24))
        s = jnp.einsum("qd,kd->qk",
                       qn.astype(jnp.bfloat16), kn.astype(jnp.bfloat16),
                       preferred_element_type=jnp.float32)
        s = s * scale_ref[h] + bias_ref[h]                 # in-kernel broadcast
        m = jnp.max(s, axis=-1, keepdims=True)
        p = jnp.exp(s - m)
        p = p * pl.reciprocal(jnp.sum(p, axis=-1, keepdims=True), approx=True)
        ctx_parts.append(jnp.dot(p.astype(jnp.bfloat16), vh.astype(jnp.bfloat16),
                                 preferred_element_type=jnp.float32))
    ctx = jnp.concatenate(ctx_parts, axis=-1)              # (L, C) lane-dense

    attn = jnp.dot(ctx.astype(jnp.bfloat16), proj_w_ref[...],
                   preferred_element_type=jnp.float32) + proj_b_ref[...]
    # res-post-norm residual (LN fused with residual add)
    hidden = x + _ln(attn, ln1_g_ref[...], ln1_b_ref[...], eps)

    # Fused MLP: fc1 -> GELU -> fc2 -> LN -> residual, no HBM round trip.
    h1 = jnp.dot(hidden.astype(jnp.bfloat16), fc1_w_ref[...],
                 preferred_element_type=jnp.float32) + fc1_b_ref[...]
    h1 = _gelu_tanh(h1)
    h2 = jnp.dot(h1.astype(jnp.bfloat16), fc2_w_ref[...],
                 preferred_element_type=jnp.float32) + fc2_b_ref[...]
    out = hidden + _ln(h2, ln2_g_ref[...], ln2_b_ref[...], eps)
    o_ref[0] = out.astype(o_ref.dtype)


def pallas_swin_block(xw, blk, num_heads, eps):
    nWB, L, C = xw.shape

    def rep(a):  # whole-array block, same block every grid step
        nd = a.ndim
        return pl.BlockSpec(a.shape, lambda i, nd=nd: (0,) * nd)

    args = (xw.astype(jnp.float32),
            blk["qkv_w"], blk["qkv_b"], blk["proj_w"], blk["proj_b"],
            blk["attn_bias"], blk["attn_scale"], blk["ln1_g"], blk["ln1_b"],
            blk["fc1_w"], blk["fc1_b"], blk["fc2_w"], blk["fc2_b"],
            blk["ln2_g"], blk["ln2_b"])
    in_specs = ([pl.BlockSpec((1, L, C), lambda i: (i, 0, 0))]
                + [rep(a) for a in args[1:]])
    return pl.pallas_call(
        functools.partial(_swin_block_kernel, num_heads=num_heads, eps=eps),
        out_shape=jax.ShapeDtypeStruct((nWB, L, C), jnp.float32),
        grid_spec=pltpu.PrefetchScalarGridSpec(
            num_scalar_prefetch=0,
            grid=(nWB,),
            in_specs=in_specs,
            out_specs=pl.BlockSpec((1, L, C), lambda i: (i, 0, 0))),
        compiler_params=pltpu.CompilerParams(
            dimension_semantics=("parallel",)),   # shards windows across v7x TCs
    )(*args)


def _linear_ln_kernel(x_ref, w_ref, b_ref, g_ref, beta_ref, o_ref, *, eps):
    y = jnp.dot(x_ref[...].astype(jnp.bfloat16), w_ref[...],
                preferred_element_type=jnp.float32) + b_ref[...]
    o_ref[...] = _ln(y, g_ref[...], beta_ref[...], eps).astype(o_ref.dtype)


def pallas_linear_ln(x, w, b, g, beta, eps):
    M = x.shape[0]
    N = w.shape[1]
    return pl.pallas_call(
        functools.partial(_linear_ln_kernel, eps=eps),
        out_shape=jax.ShapeDtypeStruct((M, N), jnp.float32),
        in_specs=[pl.BlockSpec(memory_space=pltpu.MemorySpace.VMEM)
                  for _ in range(5)],
        out_specs=pl.BlockSpec(memory_space=pltpu.MemorySpace.VMEM),
    )(x.astype(jnp.float32), w, b, g, beta)


def _head_kernel(x_ref, g_ref, b_ref, w_ref, cb_ref, o_ref, *, eps):
    # final LayerNorm -> mean pool over sequence -> classifier, fused.
    x = x_ref[...].astype(jnp.float32)                     # (B, L, C)
    xn = _ln(x, g_ref[...], b_ref[...], eps)
    pooled = jnp.mean(xn, axis=1)                          # (B, C)
    o_ref[...] = (jnp.dot(pooled.astype(jnp.bfloat16), w_ref[...],
                          preferred_element_type=jnp.float32)
                  + cb_ref[...]).astype(o_ref.dtype)


def pallas_head(x, g, b, w, cb, eps):
    B, L, C = x.shape
    N = w.shape[1]
    return pl.pallas_call(
        functools.partial(_head_kernel, eps=eps),
        out_shape=jax.ShapeDtypeStruct((B, N), jnp.float32),
        in_specs=[pl.BlockSpec(memory_space=pltpu.MemorySpace.VMEM)
                  for _ in range(5)],
        out_specs=pl.BlockSpec(memory_space=pltpu.MemorySpace.VMEM),
    )(x.astype(jnp.float32), g, b, w, cb)


# ------------------------- static Swin-v2 tables ----------------------------


def make_rel_coords_table(ws):
    h = np.arange(-(ws - 1), ws, dtype=np.float32)
    w = np.arange(-(ws - 1), ws, dtype=np.float32)
    table = np.stack(np.meshgrid(h, w, indexing="ij"), axis=-1)
    if ws > 1:
        table[:, :, 0] /= ws - 1
        table[:, :, 1] /= ws - 1
    table *= 8.0
    table = np.sign(table) * np.log2(np.abs(table) + 1.0) / np.log2(8.0)
    return table.reshape(-1, 2).astype(np.float32)          # ((2ws-1)^2, 2)


def make_rel_pos_index(ws):
    coords = np.stack(np.meshgrid(np.arange(ws), np.arange(ws), indexing="ij"))
    flat = coords.reshape(2, -1)
    rel = flat[:, :, None] - flat[:, None, :]
    rel = rel.transpose(1, 2, 0).astype(np.int64)
    rel[:, :, 0] += ws - 1
    rel[:, :, 1] += ws - 1
    rel[:, :, 0] *= 2 * ws - 1
    return rel.sum(-1)                                       # (L, L)


def cpb_bias(ws, nh, w1, b1, w2):
    # Depends only on weights & static window size -> computed once at init.
    table = jnp.asarray(make_rel_coords_table(ws))           # (T, 2)
    idx = make_rel_pos_index(ws).reshape(-1)                 # static numpy
    hid = jax.nn.relu(table @ w1 + b1)
    out = hid @ w2                                           # (T, nh)
    L = ws * ws
    bias = out[idx].reshape(L, L, nh).transpose(2, 0, 1)
    return (16.0 * jax.nn.sigmoid(bias)).astype(jnp.float32)  # (nh, L, L)


def window_partition(x, ws):
    B, H, W, C = x.shape
    x = x.reshape(B, H // ws, ws, W // ws, ws, C)
    return x.transpose(0, 1, 3, 2, 4, 5).reshape(-1, ws * ws, C)


def window_reverse(windows, ws, H, W):
    B = windows.shape[0] // ((H // ws) * (W // ws))
    x = windows.reshape(B, H // ws, W // ws, ws, ws, -1)
    return x.transpose(0, 1, 3, 2, 4, 5).reshape(B, H, W, -1)


# ------------------------------ parameters ----------------------------------


CFG = dict(
    image_size=16, patch_size=4, num_channels=4, embed_dim=32,
    depths=(2, 2), num_heads=(2, 4), window_size=8, mlp_ratio=4.0,
    layer_norm_eps=1e-5, num_labels=10,
)


class KeyGen:
    def __init__(self, seed):
        self.key = jax.random.PRNGKey(seed)

    def __call__(self):
        self.key, sub = jax.random.split(self.key)
        return sub


def dense_w(kg, fan_in, fan_out):
    return jax.random.normal(kg(), (fan_in, fan_out), jnp.float32) * 0.02


def init_params(cfg, seed=0):
    kg = KeyGen(seed)
    p = {}
    C0, ps, nc = cfg["embed_dim"], cfg["patch_size"], cfg["num_channels"]
    p["patch_w"] = dense_w(kg, nc * ps * ps, C0).astype(jnp.bfloat16)
    p["patch_b"] = jnp.zeros((1, C0), jnp.float32)
    p["embed_ln_g"] = jnp.ones((1, C0), jnp.float32)
    p["embed_ln_b"] = jnp.zeros((1, C0), jnp.float32)

    res = cfg["image_size"] // ps
    dim = C0
    stages = []
    for si, (depth, nh) in enumerate(zip(cfg["depths"], cfg["num_heads"])):
        ws = min(cfg["window_size"], res)  # HF clips window to resolution -> shift 0
        blocks = []
        for _ in range(depth):
            b = {}
            q_w = dense_w(kg, dim, dim)
            k_w = dense_w(kg, dim, dim)           # key has no bias in Swin-v2
            v_w = dense_w(kg, dim, dim)
            b["qkv_w"] = jnp.concatenate([q_w, k_w, v_w], axis=1).astype(jnp.bfloat16)
            b["qkv_b"] = jnp.zeros((1, 3 * dim), jnp.float32)
            b["proj_w"] = dense_w(kg, dim, dim).astype(jnp.bfloat16)
            b["proj_b"] = jnp.zeros((1, dim), jnp.float32)
            logit_scale = jnp.full((nh,), float(np.log(10.0)), jnp.float32)
            b["attn_scale"] = jnp.exp(
                jnp.minimum(logit_scale, float(np.log(100.0)))).reshape(nh, 1, 1)
            cpb_w1 = dense_w(kg, 2, 512)
            cpb_b1 = jnp.zeros((512,), jnp.float32)
            cpb_w2 = dense_w(kg, 512, nh)
            b["attn_bias"] = cpb_bias(ws, nh, cpb_w1, cpb_b1, cpb_w2)
            b["ln1_g"] = jnp.ones((1, dim), jnp.float32)
            b["ln1_b"] = jnp.zeros((1, dim), jnp.float32)
            hid = int(dim * cfg["mlp_ratio"])
            b["fc1_w"] = dense_w(kg, dim, hid).astype(jnp.bfloat16)
            b["fc1_b"] = jnp.zeros((1, hid), jnp.float32)
            b["fc2_w"] = dense_w(kg, hid, dim).astype(jnp.bfloat16)
            b["fc2_b"] = jnp.zeros((1, dim), jnp.float32)
            b["ln2_g"] = jnp.ones((1, dim), jnp.float32)
            b["ln2_b"] = jnp.zeros((1, dim), jnp.float32)
            blocks.append(b)
        stage = {"blocks": blocks, "window_size": ws, "num_heads": nh, "dim": dim}
        if si < len(cfg["depths"]) - 1:
            stage["downsample"] = {
                "red_w": dense_w(kg, 4 * dim, 2 * dim).astype(jnp.bfloat16),
                "red_b": jnp.zeros((1, 2 * dim), jnp.float32),
                "ln_g": jnp.ones((1, 2 * dim), jnp.float32),
                "ln_b": jnp.zeros((1, 2 * dim), jnp.float32),
            }
            dim *= 2
            res //= 2
        stages.append(stage)
    p["stages"] = stages
    p["final_ln_g"] = jnp.ones((1, dim), jnp.float32)
    p["final_ln_b"] = jnp.zeros((1, dim), jnp.float32)
    p["cls_w"] = dense_w(kg, dim, cfg["num_labels"]).astype(jnp.bfloat16)
    p["cls_b"] = jnp.zeros((1, cfg["num_labels"]), jnp.float32)
    return p


# ------------------------------ forward pass --------------------------------


def swinv2_forward(params, cfg, x):
    B, Cin, H, W = x.shape
    ps = cfg["patch_size"]
    Hp, Wp = H // ps, W // ps
    # patch-embed conv (kernel=stride=patch) as patch-flatten + fused matmul+LN
    patches = x.reshape(B, Cin, Hp, ps, Wp, ps).transpose(0, 2, 4, 1, 3, 5)
    patches = patches.reshape(B * Hp * Wp, Cin * ps * ps)
    emb = pallas_linear_ln(patches, params["patch_w"], params["patch_b"],
                           params["embed_ln_g"], params["embed_ln_b"],
                           cfg["layer_norm_eps"])
    hidden = emb.reshape(B, Hp * Wp, cfg["embed_dim"])

    res = (Hp, Wp)
    for stage in params["stages"]:
        ws, nh, C = stage["window_size"], stage["num_heads"], stage["dim"]
        Hc, Wc = res
        for blk in stage["blocks"]:
            # shift_size == 0 here (window == resolution), so no roll / mask.
            xw = window_partition(hidden.reshape(B, Hc, Wc, C), ws)
            out = pallas_swin_block(xw, blk, nh, cfg["layer_norm_eps"])
            hidden = window_reverse(out.reshape(-1, ws, ws, C), ws, Hc, Wc)
            hidden = hidden.reshape(B, Hc * Wc, C)
        if "downsample" in stage:
            dp = stage["downsample"]
            xi = hidden.reshape(B, Hc, Wc, C)
            xc = jnp.concatenate(
                [xi[:, 0::2, 0::2, :], xi[:, 1::2, 0::2, :],
                 xi[:, 0::2, 1::2, :], xi[:, 1::2, 1::2, :]], axis=-1)
            xc = xc.reshape(B * (Hc // 2) * (Wc // 2), 4 * C)
            y = pallas_linear_ln(xc, dp["red_w"], dp["red_b"],
                                 dp["ln_g"], dp["ln_b"], cfg["layer_norm_eps"])
            hidden = y.reshape(B, (Hc // 2) * (Wc // 2), 2 * C)
            res = (Hc // 2, Wc // 2)

    # fused final LayerNorm + AdaptiveAvgPool1d(1) + classifier
    logits = pallas_head(hidden, params["final_ln_g"], params["final_ln_b"],
                         params["cls_w"], params["cls_b"], cfg["layer_norm_eps"])
    return logits


# ---------------------------------- main -------------------------------------

if __name__ == "__main__":
    params = init_params(CFG, seed=0)
    key = jax.random.PRNGKey(0)
    x = jax.random.normal(
        key, (2, CFG["num_channels"], CFG["image_size"], CFG["image_size"]),
        jnp.float32)

    fwd = jax.jit(lambda inp: swinv2_forward(params, CFG, inp))
    logits = fwd(x)
    jax.block_until_ready(logits)
    assert logits.shape == (2, CFG["num_labels"])
    assert bool(jnp.all(jnp.isfinite(logits)))
    print("KERNEL_OK")
</pallas_src>

<mosaic_0001>
module attributes {stable_mosaic.version = 11 : i64} {
  func.func @_linear_ln_kernel(%arg0: memref<32x64xf32, #tpu.memory_space<vmem>>, %arg1: memref<64x32xbf16, #tpu.memory_space<vmem>>, %arg2: memref<1x32xf32, #tpu.memory_space<vmem>>, %arg3: memref<1x32xf32, #tpu.memory_space<vmem>>, %arg4: memref<1x32xf32, #tpu.memory_space<vmem>>, %arg5: memref<32x32xf32, #tpu.memory_space<vmem>>) attributes {dimension_semantics = [], scalar_prefetch = 0 : i64, scratch_operands = 0 : i64, tpu.core_type = #tpu.core_type<tc>} {
    %c0 = arith.constant 0 : index
    %c0_0 = arith.constant 0 : index
    %0 = vector.load %arg0[%c0, %c0_0] : memref<32x64xf32, #tpu.memory_space<vmem>>, vector<32x64xf32>
    %1 = arith.truncf %0 : vector<32x64xf32> to vector<32x64xbf16>
    %c0_1 = arith.constant 0 : index
    %c0_2 = arith.constant 0 : index
    %2 = vector.load %arg1[%c0_1, %c0_2] : memref<64x32xbf16, #tpu.memory_space<vmem>>, vector<64x32xbf16>
    %cst = arith.constant dense<0.000000e+00> : vector<32x32xf32>
    %3 = tpu.matmul %1, %2, %cst {dimension_numbers = #tpu.dot_dimension_numbers<[1], [0], [0], [1], [0, 0, 1, 1], [], []>} : vector<32x64xbf16>, vector<64x32xbf16>, vector<32x32xf32> -> vector<32x32xf32>
    %c0_3 = arith.constant 0 : index
    %c0_4 = arith.constant 0 : index
    %4 = vector.load %arg2[%c0_3, %c0_4] : memref<1x32xf32, #tpu.memory_space<vmem>>, vector<1x32xf32>
    %5 = vector.broadcast %4 : vector<1x32xf32> to vector<32x32xf32>
    %6 = arith.addf %3, %5 : vector<32x32xf32>
    %c0_5 = arith.constant 0 : index
    %c0_6 = arith.constant 0 : index
    %7 = vector.load %arg3[%c0_5, %c0_6] : memref<1x32xf32, #tpu.memory_space<vmem>>, vector<1x32xf32>
    %c0_7 = arith.constant 0 : index
    %c0_8 = arith.constant 0 : index
    %8 = vector.load %arg4[%c0_7, %c0_8] : memref<1x32xf32, #tpu.memory_space<vmem>>, vector<1x32xf32>
    %cst_9 = arith.constant dense<0.000000e+00> : vector<32xf32>
    %9 = vector.multi_reduction <add>, %6, %cst_9 [1] : vector<32x32xf32> to vector<32xf32>
    %10 = vector.shape_cast %9 : vector<32xf32> to vector<32x1xf32>
    %cst_10 = arith.constant 3.200000e+01 : f32
    %11 = vector.broadcast %cst_10 : f32 to vector<32x1xf32>
    %12 = arith.divf %10, %11 : vector<32x1xf32>
    %13 = vector.broadcast %12 : vector<32x1xf32> to vector<32x32xf32>
    %14 = arith.subf %6, %13 : vector<32x32xf32>
    %15 = arith.mulf %14, %14 : vector<32x32xf32>
    %cst_11 = arith.constant dense<0.000000e+00> : vector<32xf32>
    %16 = vector.multi_reduction <add>, %15, %cst_11 [1] : vector<32x32xf32> to vector<32xf32>
    %17 = vector.shape_cast %16 : vector<32xf32> to vector<32x1xf32>
    %cst_12 = arith.constant 3.200000e+01 : f32
    %18 = vector.broadcast %cst_12 : f32 to vector<32x1xf32>
    %19 = arith.divf %17, %18 : vector<32x1xf32>
    %20 = vector.broadcast %12 : vector<32x1xf32> to vector<32x32xf32>
    %21 = arith.subf %6, %20 : vector<32x32xf32>
    %cst_13 = arith.constant 9.99999974E-6 : f32
    %22 = vector.broadcast %cst_13 : f32 to vector<32x1xf32>
    %23 = arith.addf %19, %22 : vector<32x1xf32>
    %24 = math.rsqrt %23 : vector<32x1xf32>
    %25 = vector.broadcast %24 : vector<32x1xf32> to vector<32x32xf32>
    %26 = arith.mulf %21, %25 : vector<32x32xf32>
    %27 = vector.broadcast %7 : vector<1x32xf32> to vector<32x32xf32>
    %28 = arith.mulf %26, %27 : vector<32x32xf32>
    %29 = vector.broadcast %8 : vector<1x32xf32> to vector<32x32xf32>
    %30 = arith.addf %28, %29 : vector<32x32xf32>
    %c0_14 = arith.constant 0 : index
    %c0_15 = arith.constant 0 : index
    %31 = vector.load %arg5[%c0_14, %c0_15] : memref<32x32xf32, #tpu.memory_space<vmem>>, vector<32x32xf32>
    tpu.vector_store %arg5[%c0_14, %c0_15], %30 {strides = array<i32>} : memref<32x32xf32, #tpu.memory_space<vmem>>, vector<32x32xf32>,
    return
  }
}

module attributes {stable_mosaic.version = 11 : i64} {
  func.func @_swin_block_kernel(%arg0: i32, %arg1: memref<1x16x32xf32, #tpu.memory_space<vmem>>, %arg2: memref<32x96xbf16, #tpu.memory_space<vmem>>, %arg3: memref<1x96xf32, #tpu.memory_space<vmem>>, %arg4: memref<32x32xbf16, #tpu.memory_space<vmem>>, %arg5: memref<1x32xf32, #tpu.memory_space<vmem>>, %arg6: memref<2x16x16xf32, #tpu.memory_space<vmem>>, %arg7: memref<2x1x1xf32, #tpu.memory_space<vmem>>, %arg8: memref<1x32xf32, #tpu.memory_space<vmem>>, %arg9: memref<1x32xf32, #tpu.memory_space<vmem>>, %arg10: memref<32x128xbf16, #tpu.memory_space<vmem>>, %arg11: memref<1x128xf32, #tpu.memory_space<vmem>>, %arg12: memref<128x32xbf16, #tpu.memory_space<vmem>>, %arg13: memref<1x32xf32, #tpu.memory_space<vmem>>, %arg14: memref<1x32xf32, #tpu.memory_space<vmem>>, %arg15: memref<1x32xf32, #tpu.memory_space<vmem>>, %arg16: memref<1x16x32xf32, #tpu.memory_space<vmem>>) attributes {dimension_semantics = [#tpu.dimension_semantics<parallel>], iteration_bounds = array<i64: 2>, scalar_prefetch = 0 : i64, scratch_operands = 0 : i64, tpu.core_type = #tpu.core_type<tc>, window_params = [{transform_indices = @transform_0, window_bounds = array<i64: 1, 16, 32>}, {pipeline_mode = #tpu.pipeline_mode<synchronous>, transform_indices = @transform_1, window_bounds = array<i64: 32, 96>}, {pipeline_mode = #tpu.pipeline_mode<synchronous>, transform_indices = @transform_2, window_bounds = array<i64: 1, 96>}, {pipeline_mode = #tpu.pipeline_mode<synchronous>, transform_indices = @transform_3, window_bounds = array<i64: 32, 32>}, {pipeline_mode = #tpu.pipeline_mode<synchronous>, transform_indices = @transform_4, window_bounds = array<i64: 1, 32>}, {pipeline_mode = #tpu.pipeline_mode<synchronous>, transform_indices = @transform_5, window_bounds = array<i64: 2, 16, 16>}, {pipeline_mode = #tpu.pipeline_mode<synchronous>, transform_indices = @transform_6, window_bounds = array<i64: 2, 1, 1>}, {pipeline_mode = #tpu.pipeline_mode<synchronous>, transform_indices = @transform_7, window_bounds = array<i64: 1, 32>}, {pipeline_mode = #tpu.pipeline_mode<synchronous>, transform_indices = @transform_8, window_bounds = array<i64: 1, 32>}, {pipeline_mode = #tpu.pipeline_mode<synchronous>, transform_indices = @transform_9, window_bounds = array<i64: 32, 128>}, {pipeline_mode = #tpu.pipeline_mode<synchronous>, transform_indices = @transform_10, window_bounds = array<i64: 1, 128>}, {pipeline_mode = #tpu.pipeline_mode<synchronous>, transform_indices = @transform_11, window_bounds = array<i64: 128, 32>}, {pipeline_mode = #tpu.pipeline_mode<synchronous>, transform_indices = @transform_12, window_bounds = array<i64: 1, 32>}, {pipeline_mode = #tpu.pipeline_mode<synchronous>, transform_indices = @transform_13, window_bounds = array<i64: 1, 32>}, {pipeline_mode = #tpu.pipeline_mode<synchronous>, transform_indices = @transform_14, window_bounds = array<i64: 1, 32>}, {transform_indices = @transform_15, window_bounds = array<i64: 1, 16, 32>}]} {
    %c0 = arith.constant 0 : index
    %c0_0 = arith.constant 0 : index
    %c0_1 = arith.constant 0 : index
    %0 = vector.load %arg1[%c0, %c0_0, %c0_1] : memref<1x16x32xf32, #tpu.memory_space<vmem>>, vector<1x16x32xf32>
    %1 = vector.shape_cast %0 : vector<1x16x32xf32> to vector<16x32xf32>
    %2 = arith.truncf %1 : vector<16x32xf32> to vector<16x32xbf16>
    %c0_2 = arith.constant 0 : index
    %c0_3 = arith.constant 0 : index
    %3 = vector.load %arg2[%c0_2, %c0_3] : memref<32x96xbf16, #tpu.memory_space<vmem>>, vector<32x96xbf16>
    %cst = arith.constant dense<0.000000e+00> : vector<16x96xf32>
    %4 = tpu.matmul %2, %3, %cst {dimension_numbers = #tpu.dot_dimension_numbers<[1], [0], [0], [1], [0, 0, 1, 1], [], []>} : vector<16x32xbf16>, vector<32x96xbf16>, vector<16x96xf32> -> vector<16x96xf32>
    %c0_4 = arith.constant 0 : index
    %c0_5 = arith.constant 0 : index
    %5 = vector.load %arg3[%c0_4, %c0_5] : memref<1x96xf32, #tpu.memory_space<vmem>>, vector<1x96xf32>
    %6 = vector.broadcast %5 : vector<1x96xf32> to vector<16x96xf32>
    %7 = arith.addf %4, %6 : vector<16x96xf32>
    %8 = vector.extract_strided_slice %7 {offsets = [0, 0], sizes = [16, 32], strides = [1, 1]} : vector<16x96xf32> to vector<16x32xf32>
    %9 = vector.extract_strided_slice %7 {offsets = [0, 32], sizes = [16, 32], strides = [1, 1]} : vector<16x96xf32> to vector<16x32xf32>
    %10 = vector.extract_strided_slice %7 {offsets = [0, 64], sizes = [16, 32], strides = [1, 1]} : vector<16x96xf32> to vector<16x32xf32>
    %11 = vector.extract_strided_slice %8 {offsets = [0, 0], sizes = [16, 16], strides = [1, 1]} : vector<16x32xf32> to vector<16x16xf32>
    %12 = vector.extract_strided_slice %9 {offsets = [0, 0], sizes = [16, 16], strides = [1, 1]} : vector<16x32xf32> to vector<16x16xf32>
    %13 = vector.extract_strided_slice %10 {offsets = [0, 0], sizes = [16, 16], strides = [1, 1]} : vector<16x32xf32> to vector<16x16xf32>
    %14 = arith.mulf %11, %11 : vector<16x16xf32>
    %cst_6 = arith.constant dense<0.000000e+00> : vector<16xf32>
    %15 = vector.multi_reduction <add>, %14, %cst_6 [1] : vector<16x16xf32> to vector<16xf32>
    %16 = vector.shape_cast %15 : vector<16xf32> to vector<16x1xf32>
    %cst_7 = arith.constant 1.000000e-24 : f32
    %17 = vector.broadcast %cst_7 : f32 to vector<16x1xf32>
    %18 = arith.maximumf %16, %17 : vector<16x1xf32>
    %19 = math.rsqrt %18 : vector<16x1xf32>
    %20 = vector.broadcast %19 : vector<16x1xf32> to vector<16x16xf32>
    %21 = arith.mulf %11, %20 : vector<16x16xf32>
    %22 = arith.mulf %12, %12 : vector<16x16xf32>
    %cst_8 = arith.constant dense<0.000000e+00> : vector<16xf32>
    %23 = vector.multi_reduction <add>, %22, %cst_8 [1] : vector<16x16xf32> to vector<16xf32>
    %24 = vector.shape_cast %23 : vector<16xf32> to vector<16x1xf32>
    %cst_9 = arith.constant 1.000000e-24 : f32
    %25 = vector.broadcast %cst_9 : f32 to vector<16x1xf32>
    %26 = arith.maximumf %24, %25 : vector<16x1xf32>
    %27 = math.rsqrt %26 : vector<16x1xf32>
    %28 = vector.broadcast %27 : vector<16x1xf32> to vector<16x16xf32>
    %29 = arith.mulf %12, %28 : vector<16x16xf32>
    %30 = arith.truncf %21 : vector<16x16xf32> to vector<16x16xbf16>
    %31 = arith.truncf %29 : vector<16x16xf32> to vector<16x16xbf16>
    "tpu.trace_start"() <{level = 10 : i32, message = "qd,kd->qk"}> : () -> ()
    %cst_10 = arith.constant dense<0.000000e+00> : vector<16x16xf32>
    %32 = tpu.matmul %30, %31, %cst_10 {dimension_numbers = #tpu.dot_dimension_numbers<[1], [1], [0], [0], [0, 0, 1, 0], [], []>} : vector<16x16xbf16>, vector<16x16xbf16>, vector<16x16xf32> -> vector<16x16xf32>
    "tpu.trace_stop"() : () -> ()
    %c0_11 = arith.constant 0 : index
    %c0_12 = arith.constant 0 : index
    %c0_13 = arith.constant 0 : index
    %33 = vector.load %arg7[%c0_11, %c0_12, %c0_13] : memref<2x1x1xf32, #tpu.memory_space<vmem>>, vector<1x1x1xf32>
    %34 = vector.shape_cast %33 : vector<1x1x1xf32> to vector<1x1xf32>
    %35 = vector.broadcast %34 : vector<1x1xf32> to vector<16x16xf32>
    %36 = arith.mulf %32, %35 : vector<16x16xf32>
    %c0_14 = arith.constant 0 : index
    %c0_15 = arith.constant 0 : index
    %c0_16 = arith.constant 0 : index
    %37 = vector.load %arg6[%c0_14, %c0_15, %c0_16] : memref<2x16x16xf32, #tpu.memory_space<vmem>>, vector<1x16x16xf32>
    %38 = vector.shape_cast %37 : vector<1x16x16xf32> to vector<16x16xf32>
    %39 = arith.addf %36, %38 : vector<16x16xf32>
    %cst_17 = arith.constant dense<0xFF800000> : vector<16xf32>
    %40 = vector.multi_reduction <maximumf>, %39, %cst_17 [1] : vector<16x16xf32> to vector<16xf32>
    %41 = vector.shape_cast %40 : vector<16xf32> to vector<16x1xf32>
    %42 = vector.broadcast %41 : vector<16x1xf32> to vector<16x16xf32>
    %43 = arith.subf %39, %42 : vector<16x16xf32>
    %44 = math.exp %43 : vector<16x16xf32>
    %cst_18 = arith.constant dense<0.000000e+00> : vector<16xf32>
    %45 = vector.multi_reduction <add>, %44, %cst_18 [1] : vector<16x16xf32> to vector<16xf32>
    %46 = vector.shape_cast %45 : vector<16xf32> to vector<16x1xf32>
    %47 = tpu.reciprocal %46 {approx = true} : vector<16x1xf32> -> vector<16x1xf32>
    %48 = vector.broadcast %47 : vector<16x1xf32> to vector<16x16xf32>
    %49 = arith.mulf %44, %48 : vector<16x16xf32>
    %50 = arith.truncf %49 : vector<16x16xf32> to vector<16x16xbf16>
    %51 = arith.truncf %13 : vector<16x16xf32> to vector<16x16xbf16>
    %cst_19 = arith.constant dense<0.000000e+00> : vector<16x16xf32>
    %52 = tpu.matmul %50, %51, %cst_19 {dimension_numbers = #tpu.dot_dimension_numbers<[1], [0], [0], [1], [0, 0, 1, 1], [], []>} : vector<16x16xbf16>, vector<16x16xbf16>, vector<16x16xf32> -> vector<16x16xf32>
    %53 = vector.extract_strided_slice %8 {offsets = [0, 16], sizes = [16, 16], strides = [1, 1]} : vector<16x32xf32> to vector<16x16xf32>
    %54 = vector.extract_strided_slice %9 {offsets = [0, 16], sizes = [16, 16], strides = [1, 1]} : vector<16x32xf32> to vector<16x16xf32>
    %55 = vector.extract_strided_slice %10 {offsets = [0, 16], sizes = [16, 16], strides = [1, 1]} : vector<16x32xf32> to vector<16x16xf32>
    %56 = arith.mulf %53, %53 : vector<16x16xf32>
    %cst_20 = arith.constant dense<0.000000e+00> : vector<16xf32>
    %57 = vector.multi_reduction <add>, %56, %cst_20 [1] : vector<16x16xf32> to vector<16xf32>
    %58 = vector.shape_cast %57 : vector<16xf32> to vector<16x1xf32>
    %cst_21 = arith.constant 1.000000e-24 : f32
    %59 = vector.broadcast %cst_21 : f32 to vector<16x1xf32>
    %60 = arith.maximumf %58, %59 : vector<16x1xf32>
    %61 = math.rsqrt %60 : vector<16x1xf32>
    %62 = vector.broadcast %61 : vector<16x1xf32> to vector<16x16xf32>
    %63 = arith.mulf %53, %62 : vector<16x16xf32>
    %64 = arith.mulf %54, %54 : vector<16x16xf32>
    %cst_22 = arith.constant dense<0.000000e+00> : vector<16xf32>
    %65 = vector.multi_reduction <add>, %64, %cst_22 [1] : vector<16x16xf32> to vector<16xf32>
    %66 = vector.shape_cast %65 : vector<16xf32> to vector<16x1xf32>
    %cst_23 = arith.constant 1.000000e-24 : f32
    %67 = vector.broadcast %cst_23 : f32 to vector<16x1xf32>
    %68 = arith.maximumf %66, %67 : vector<16x1xf32>
    %69 = math.rsqrt %68 : vector<16x1xf32>
    %70 = vector.broadcast %69 : vector<16x1xf32> to vector<16x16xf32>
    %71 = arith.mulf %54, %70 : vector<16x16xf32>
    %72 = arith.truncf %63 : vector<16x16xf32> to vector<16x16xbf16>
    %73 = arith.truncf %71 : vector<16x16xf32> to vector<16x16xbf16>
    "tpu.trace_start"() <{level = 10 : i32, message = "qd,kd->qk"}> : () -> ()
    %cst_24 = arith.constant dense<0.000000e+00> : vector<16x16xf32>
    %74 = tpu.matmul %72, %73, %cst_24 {dimension_numbers = #tpu.dot_dimension_numbers<[1], [1], [0], [0], [0, 0, 1, 0], [], []>} : vector<16x16xbf16>, vector<16x16xbf16>, vector<16x16xf32> -> vector<16x16xf32>
    "tpu.trace_stop"() : () -> ()
    %c1 = arith.constant 1 : index
    %c0_25 = arith.constant 0 : index
    %c0_26 = arith.constant 0 : index
    %75 = vector.load %arg7[%c1, %c0_25, %c0_26] : memref<2x1x1xf32, #tpu.memory_space<vmem>>, vector<1x1x1xf32>
    %76 = vector.shape_cast %75 : vector<1x1x1xf32> to vector<1x1xf32>
    %77 = vector.broadcast %76 : vector<1x1xf32> to vector<16x16xf32>
    %78 = arith.mulf %74, %77 : vector<16x16xf32>
    %c1_27 = arith.constant 1 : index
    %c0_28 = arith.constant 0 : index
    %c0_29 = arith.constant 0 : index
    %79 = vector.load %arg6[%c1_27, %c0_28, %c0_29] : memref<2x16x16xf32, #tpu.memory_space<vmem>>, vector<1x16x16xf32>
    %80 = vector.shape_cast %79 : vector<1x16x16xf32> to vector<16x16xf32>
    %81 = arith.addf %78, %80 : vector<16x16xf32>
    %cst_30 = arith.constant dense<0xFF800000> : vector<16xf32>
    %82 = vector.multi_reduction <maximumf>, %81, %cst_30 [1] : vector<16x16xf32> to vector<16xf32>
    %83 = vector.shape_cast %82 : vector<16xf32> to vector<16x1xf32>
    %84 = vector.broadcast %83 : vector<16x1xf32> to vector<16x16xf32>
    %85 = arith.subf %81, %84 : vector<16x16xf32>
    %86 = math.exp %85 : vector<16x16xf32>
    %cst_31 = arith.constant dense<0.000000e+00> : vector<16xf32>
    %87 = vector.multi_reduction <add>, %86, %cst_31 [1] : vector<16x16xf32> to vector<16xf32>
    %88 = vector.shape_cast %87 : vector<16xf32> to vector<16x1xf32>
    %89 = tpu.reciprocal %88 {approx = true} : vector<16x1xf32> -> vector<16x1xf32>
    %90 = vector.broadcast %89 : vector<16x1xf32> to vector<16x16xf32>
    %91 = arith.mulf %86, %90 : vector<16x16xf32>
    %92 = arith.truncf %91 : vector<16x16xf32> to vector<16x16xbf16>
    %93 = arith.truncf %55 : vector<16x16xf32> to vector<16x16xbf16>
    %cst_32 = arith.constant dense<0.000000e+00> : vector<16x16xf32>
    %94 = tpu.matmul %92, %93, %cst_32 {dimension_numbers = #tpu.dot_dimension_numbers<[1], [0], [0], [1], [0, 0, 1, 1], [], []>} : vector<16x16xbf16>, vector<16x16xbf16>, vector<16x16xf32> -> vector<16x16xf32>
    %95 = tpu.concatenate %52, %94 in 1 : vector<16x16xf32>, vector<16x16xf32> -> vector<16x32xf32>
    %96 = arith.truncf %95 : vector<16x32xf32> to vector<16x32xbf16>
    %c0_33 = arith.constant 0 : index
    %c0_34 = arith.constant 0 : index
    %97 = vector.load %arg4[%c0_33, %c0_34] : memref<32x32xbf16, #tpu.memory_space<vmem>>, vector<32x32xbf16>
    %cst_35 = arith.constant dense<0.000000e+00> : vector<16x32xf32>
    %98 = tpu.matmul %96, %97, %cst_35 {dimension_numbers = #tpu.dot_dimension_numbers<[1], [0], [0], [1], [0, 0, 1, 1], [], []>} : vector<16x32xbf16>, vector<32x32xbf16>, vector<16x32xf32> -> vector<16x32xf32>
    %c0_36 = arith.constant 0 : index
    %c0_37 = arith.constant 0 : index
    %99 = vector.load %arg5[%c0_36, %c0_37] : memref<1x32xf32, #tpu.memory_space<vmem>>, vector<1x32xf32>
    %100 = vector.broadcast %99 : vector<1x32xf32> to vector<16x32xf32>
    %101 = arith.addf %98, %100 : vector<16x32xf32>
    %c0_38 = arith.constant 0 : index
    %c0_39 = arith.constant 0 : index
    %102 = vector.load %arg8[%c0_38, %c0_39] : memref<1x32xf32, #tpu.memory_space<vmem>>, vector<1x32xf32>
    %c0_40 = arith.constant 0 : index
    %c0_41 = arith.constant 0 : index
    %103 = vector.load %arg9[%c0_40, %c0_41] : memref<1x32xf32, #tpu.memory_space<vmem>>, vector<1x32xf32>
    %cst_42 = arith.constant dense<0.000000e+00> : vector<16xf32>
    %104 = vector.multi_reduction <add>, %101, %cst_42 [1] : vector<16x32xf32> to vector<16xf32>
    %105 = vector.shape_cast %104 : vector<16xf32> to vector<16x1xf32>
    %cst_43 = arith.constant 3.200000e+01 : f32
    %106 = vector.broadcast %cst_43 : f32 to vector<16x1xf32>
    %107 = arith.divf %105, %106 : vector<16x1xf32>
    %108 = vector.broadcast %107 : vector<16x1xf32> to vector<16x32xf32>
    %109 = arith.subf %101, %108 : vector<16x32xf32>
    %110 = arith.mulf %109, %109 : vector<16x32xf32>
    %cst_44 = arith.constant dense<0.000000e+00> : vector<16xf32>
    %111 = vector.multi_reduction <add>, %110, %cst_44 [1] : vector<16x32xf32> to vector<16xf32>
    %112 = vector.shape_cast %111 : vector<16xf32> to vector<16x1xf32>
    %cst_45 = arith.constant 3.200000e+01 : f32
    %113 = vector.broadcast %cst_45 : f32 to vector<16x1xf32>
    %114 = arith.divf %112, %113 : vector<16x1xf32>
    %115 = vector.broadcast %107 : vector<16x1xf32> to vector<16x32xf32>
    %116 = arith.subf %101, %115 : vector<16x32xf32>
    %cst_46 = arith.constant 9.99999974E-6 : f32
    %117 = vector.broadcast %cst_46 : f32 to vector<16x1xf32>
    %118 = arith.addf %114, %117 : vector<16x1xf32>
    %119 = math.rsqrt %118 : vector<16x1xf32>
    %120 = vector.broadcast %119 : vector<16x1xf32> to vector<16x32xf32>
    %121 = arith.mulf %116, %120 : vector<16x32xf32>
    %122 = vector.broadcast %102 : vector<1x32xf32> to vector<16x32xf32>
    %123 = arith.mulf %121, %122 : vector<16x32xf32>
    %124 = vector.broadcast %103 : vector<1x32xf32> to vector<16x32xf32>
    %125 = arith.addf %123, %124 : vector<16x32xf32>
    %126 = arith.addf %1, %125 : vector<16x32xf32>
    %127 = arith.truncf %126 : vector<16x32xf32> to vector<16x32xbf16>
    %c0_47 = arith.constant 0 : index
    %c0_48 = arith.constant 0 : index
    %128 = vector.load %arg10[%c0_47, %c0_48] : memref<32x128xbf16, #tpu.memory_space<vmem>>, vector<32x128xbf16>
    %cst_49 = arith.constant dense<0.000000e+00> : vector<16x128xf32>
    %129 = tpu.matmul %127, %128, %cst_49 {dimension_numbers = #tpu.dot_dimension_numbers<[1], [0], [0], [1], [0, 0, 1, 1], [], []>} : vector<16x32xbf16>, vector<32x128xbf16>, vector<16x128xf32> -> vector<16x128xf32>
    %c0_50 = arith.constant 0 : index
    %c0_51 = arith.constant 0 : index
    %130 = vector.load %arg11[%c0_50, %c0_51] : memref<1x128xf32, #tpu.memory_space<vmem>>, vector<1x128xf32>
    %131 = vector.broadcast %130 : vector<1x128xf32> to vector<16x128xf32>
    %132 = arith.addf %129, %131 : vector<16x128xf32>
    %cst_52 = arith.constant 5.000000e-01 : f32
    %133 = vector.broadcast %cst_52 : f32 to vector<16x128xf32>
    %134 = arith.mulf %133, %132 : vector<16x128xf32>
    %cst_53 = arith.constant 4.471500e-02 : f32
    %135 = vector.broadcast %cst_53 : f32 to vector<16x128xf32>
    %136 = arith.mulf %135, %132 : vector<16x128xf32>
    %137 = arith.mulf %136, %132 : vector<16x128xf32>
    %138 = arith.mulf %137, %132 : vector<16x128xf32>
    %139 = arith.addf %132, %138 : vector<16x128xf32>
    %cst_54 = arith.constant 0.797884583 : f32
    %140 = vector.broadcast %cst_54 : f32 to vector<16x128xf32>
    %141 = arith.mulf %140, %139 : vector<16x128xf32>
    %142 = math.tanh %141 : vector<16x128xf32>
    %cst_55 = arith.constant 1.000000e+00 : f32
    %143 = vector.broadcast %cst_55 : f32 to vector<16x128xf32>
    %144 = arith.addf %143, %142 : vector<16x128xf32>
    %145 = arith.mulf %134, %144 : vector<16x128xf32>
    %146 = arith.truncf %145 : vector<16x128xf32> to vector<16x128xbf16>
    %c0_56 = arith.constant 0 : index
    %c0_57 = arith.constant 0 : index
    %147 = vector.load %arg12[%c0_56, %c0_57] : memref<128x32xbf16, #tpu.memory_space<vmem>>, vector<128x32xbf16>
    %cst_58 = arith.constant dense<0.000000e+00> : vector<16x32xf32>
    %148 = tpu.matmul %146, %147, %cst_58 {dimension_numbers = #tpu.dot_dimension_numbers<[1], [0], [0], [1], [0, 0, 1, 1], [], []>} : vector<16x128xbf16>, vector<128x32xbf16>, vector<16x32xf32> -> vector<16x32xf32>
    %c0_59 = arith.constant 0 : index
    %c0_60 = arith.constant 0 : index
    %149 = vector.load %arg13[%c0_59, %c0_60] : memref<1x32xf32, #tpu.memory_space<vmem>>, vector<1x32xf32>
    %150 = vector.broadcast %149 : vector<1x32xf32> to vector<16x32xf32>
    %151 = arith.addf %148, %150 : vector<16x32xf32>
    %c0_61 = arith.constant 0 : index
    %c0_62 = arith.constant 0 : index
    %152 = vector.load %arg14[%c0_61, %c0_62] : memref<1x32xf32, #tpu.memory_space<vmem>>, vector<1x32xf32>
    %c0_63 = arith.constant 0 : index
    %c0_64 = arith.constant 0 : index
    %153 = vector.load %arg15[%c0_63, %c0_64] : memref<1x32xf32, #tpu.memory_space<vmem>>, vector<1x32xf32>
    %cst_65 = arith.constant dense<0.000000e+00> : vector<16xf32>
    %154 = vector.multi_reduction <add>, %151, %cst_65 [1] : vector<16x32xf32> to vector<16xf32>
    %155 = vector.shape_cast %154 : vector<16xf32> to vector<16x1xf32>
    %cst_66 = arith.constant 3.200000e+01 : f32
    %156 = vector.broadcast %cst_66 : f32 to vector<16x1xf32>
    %157 = arith.divf %155, %156 : vector<16x1xf32>
    %158 = vector.broadcast %157 : vector<16x1xf32> to vector<16x32xf32>
    %159 = arith.subf %151, %158 : vector<16x32xf32>
    %160 = arith.mulf %159, %159 : vector<16x32xf32>
    %cst_67 = arith.constant dense<0.000000e+00> : vector<16xf32>
    %161 = vector.multi_reduction <add>, %160, %cst_67 [1] : vector<16x32xf32> to vector<16xf32>
    %162 = vector.shape_cast %161 : vector<16xf32> to vector<16x1xf32>
    %cst_68 = arith.constant 3.200000e+01 : f32
    %163 = vector.broadcast %cst_68 : f32 to vector<16x1xf32>
    %164 = arith.divf %162, %163 : vector<16x1xf32>
    %165 = vector.broadcast %157 : vector<16x1xf32> to vector<16x32xf32>
    %166 = arith.subf %151, %165 : vector<16x32xf32>
    %cst_69 = arith.constant 9.99999974E-6 : f32
    %167 = vector.broadcast %cst_69 : f32 to vector<16x1xf32>
    %168 = arith.addf %164, %167 : vector<16x1xf32>
    %169 = math.rsqrt %168 : vector<16x1xf32>
    %170 = vector.broadcast %169 : vector<16x1xf32> to vector<16x32xf32>
    %171 = arith.mulf %166, %170 : vector<16x32xf32>
    %172 = vector.broadcast %152 : vector<1x32xf32> to vector<16x32xf32>
    %173 = arith.mulf %171, %172 : vector<16x32xf32>
    %174 = vector.broadcast %153 : vector<1x32xf32> to vector<16x32xf32>
    %175 = arith.addf %173, %174 : vector<16x32xf32>
    %176 = arith.addf %126, %175 : vector<16x32xf32>
    %c0_70 = arith.constant 0 : index
    %c0_71 = arith.constant 0 : index
    %c0_72 = arith.constant 0 : index
    %177 = vector.load %arg16[%c0_70, %c0_71, %c0_72] : memref<1x16x32xf32, #tpu.memory_space<vmem>>, vector<1x16x32xf32>
    %178 = vector.shape_cast %177 : vector<1x16x32xf32> to vector<16x32xf32>
    %179 = vector.shape_cast %176 : vector<16x32xf32> to vector<1x16x32xf32>
    tpu.vector_store %arg16[%c0_70, %c0_71, %c0_72], %179 {strides = array<i32>} : memref<1x16x32xf32, #tpu.memory_space<vmem>>, vector<1x16x32xf32>,
    return
  }
  func.func @transform_0(%arg0: i32) -> (i32, i32, i32) {
    %c0_i32 = arith.constant 0 : i32
    %c0_i32_0 = arith.constant 0 : i32
    %c0_i32_1 = arith.constant 0 : i32
    return %arg0, %c0_i32, %c0_i32_0 : i32, i32, i32
  }
  func.func @transform_1(%arg0: i32) -> (i32, i32) {
    %c0_i32 = arith.constant 0 : i32
    %c0_i32_0 = arith.constant 0 : i32
    %c0_i32_1 = arith.constant 0 : i32
    return %c0_i32, %c0_i32_0 : i32, i32
  }
  func.func @transform_2(%arg0: i32) -> (i32, i32) {
    %c0_i32 = arith.constant 0 : i32
    %c0_i32_0 = arith.constant 0 : i32
    %c0_i32_1 = arith.constant 0 : i32
    return %c0_i32, %c0_i32_0 : i32, i32
  }
  func.func @transform_3(%arg0: i32) -> (i32, i32) {
    %c0_i32 = arith.constant 0 : i32
    %c0_i32_0 = arith.constant 0 : i32
    %c0_i32_1 = arith.constant 0 : i32
    return %c0_i32, %c0_i32_0 : i32, i32
  }
  func.func @transform_4(%arg0: i32) -> (i32, i32) {
    %c0_i32 = arith.constant 0 : i32
    %c0_i32_0 = arith.constant 0 : i32
    %c0_i32_1 = arith.constant 0 : i32
    return %c0_i32, %c0_i32_0 : i32, i32
  }
  func.func @transform_5(%arg0: i32) -> (i32, i32, i32) {
    %c0_i32 = arith.constant 0 : i32
    %c0_i32_0 = arith.constant 0 : i32
    %c0_i32_1 = arith.constant 0 : i32
    %c0_i32_2 = arith.constant 0 : i32
    return %c0_i32, %c0_i32_0, %c0_i32_1 : i32, i32, i32
  }
  func.func @transform_6(%arg0: i32) -> (i32, i32, i32) {
    %c0_i32 = arith.constant 0 : i32
    %c0_i32_0 = arith.constant 0 : i32
    %c0_i32_1 = arith.constant 0 : i32
    %c0_i32_2 = arith.constant 0 : i32
    return %c0_i32, %c0_i32_0, %c0_i32_1 : i32, i32, i32
  }
  func.func @transform_7(%arg0: i32) -> (i32, i32) {
    %c0_i32 = arith.constant 0 : i32
    %c0_i32_0 = arith.constant 0 : i32
    %c0_i32_1 = arith.constant 0 : i32
    return %c0_i32, %c0_i32_0 : i32, i32
  }
  func.func @transform_8(%arg0: i32) -> (i32, i32) {
    %c0_i32 = arith.constant 0 : i32
    %c0_i32_0 = arith.constant 0 : i32
    %c0_i32_1 = arith.constant 0 : i32
    return %c0_i32, %c0_i32_0 : i32, i32
  }
  func.func @transform_9(%arg0: i32) -> (i32, i32) {
    %c0_i32 = arith.constant 0 : i32
    %c0_i32_0 = arith.constant 0 : i32
    %c0_i32_1 = arith.constant 0 : i32
    return %c0_i32, %c0_i32_0 : i32, i32
  }
  func.func @transform_10(%arg0: i32) -> (i32, i32) {
    %c0_i32 = arith.constant 0 : i32
    %c0_i32_0 = arith.constant 0 : i32
    %c0_i32_1 = arith.constant 0 : i32
    return %c0_i32, %c0_i32_0 : i32, i32
  }
  func.func @transform_11(%arg0: i32) -> (i32, i32) {
    %c0_i32 = arith.constant 0 : i32
    %c0_i32_0 = arith.constant 0 : i32
    %c0_i32_1 = arith.constant 0 : i32
    return %c0_i32, %c0_i32_0 : i32, i32
  }
  func.func @transform_12(%arg0: i32) -> (i32, i32) {
    %c0_i32 = arith.constant 0 : i32
    %c0_i32_0 = arith.constant 0 : i32
    %c0_i32_1 = arith.constant 0 : i32
    return %c0_i32, %c0_i32_0 : i32, i32
  }
  func.func @transform_13(%arg0: i32) -> (i32, i32) {
    %c0_i32 = arith.constant 0 : i32
    %c0_i32_0 = arith.constant 0 : i32
    %c0_i32_1 = arith.constant 0 : i32
    return %c0_i32, %c0_i32_0 : i32, i32
  }
  func.func @transform_14(%arg0: i32) -> (i32, i32) {
    %c0_i32 = arith.constant 0 : i32
    %c0_i32_0 = arith.constant 0 : i32
    %c0_i32_1 = arith.constant 0 : i32
    return %c0_i32, %c0_i32_0 : i32, i32
  }
  func.func @transform_15(%arg0: i32) -> (i32, i32, i32) {
    %c0_i32 = arith.constant 0 : i32
    %c0_i32_0 = arith.constant 0 : i32
    %c0_i32_1 = arith.constant 0 : i32
    return %arg0, %c0_i32, %c0_i32_0 : i32, i32, i32
  }
}

module attributes {stable_mosaic.version = 11 : i64} {
  func.func @_linear_ln_kernel(%arg0: memref<8x128xf32, #tpu.memory_space<vmem>>, %arg1: memref<128x64xbf16, #tpu.memory_space<vmem>>, %arg2: memref<1x64xf32, #tpu.memory_space<vmem>>, %arg3: memref<1x64xf32, #tpu.memory_space<vmem>>, %arg4: memref<1x64xf32, #tpu.memory_space<vmem>>, %arg5: memref<8x64xf32, #tpu.memory_space<vmem>>) attributes {dimension_semantics = [], scalar_prefetch = 0 : i64, scratch_operands = 0 : i64, tpu.core_type = #tpu.core_type<tc>} {
    %c0 = arith.constant 0 : index
    %c0_0 = arith.constant 0 : index
    %0 = vector.load %arg0[%c0, %c0_0] : memref<8x128xf32, #tpu.memory_space<vmem>>, vector<8x128xf32>
    %1 = arith.truncf %0 : vector<8x128xf32> to vector<8x128xbf16>
    %c0_1 = arith.constant 0 : index
    %c0_2 = arith.constant 0 : index
    %2 = vector.load %arg1[%c0_1, %c0_2] : memref<128x64xbf16, #tpu.memory_space<vmem>>, vector<128x64xbf16>
    %cst = arith.constant dense<0.000000e+00> : vector<8x64xf32>
    %3 = tpu.matmul %1, %2, %cst {dimension_numbers = #tpu.dot_dimension_numbers<[1], [0], [0], [1], [0, 0, 1, 1], [], []>} : vector<8x128xbf16>, vector<128x64xbf16>, vector<8x64xf32> -> vector<8x64xf32>
    %c0_3 = arith.constant 0 : index
    %c0_4 = arith.constant 0 : index
    %4 = vector.load %arg2[%c0_3, %c0_4] : memref<1x64xf32, #tpu.memory_space<vmem>>, vector<1x64xf32>
    %5 = vector.broadcast %4 : vector<1x64xf32> to vector<8x64xf32>
    %6 = arith.addf %3, %5 : vector<8x64xf32>
    %c0_5 = arith.constant 0 : index
    %c0_6 = arith.constant 0 : index
    %7 = vector.load %arg3[%c0_5, %c0_6] : memref<1x64xf32, #tpu.memory_space<vmem>>, vector<1x64xf32>
    %c0_7 = arith.constant 0 : index
    %c0_8 = arith.constant 0 : index
    %8 = vector.load %arg4[%c0_7, %c0_8] : memref<1x64xf32, #tpu.memory_space<vmem>>, vector<1x64xf32>
    %cst_9 = arith.constant dense<0.000000e+00> : vector<8xf32>
    %9 = vector.multi_reduction <add>, %6, %cst_9 [1] : vector<8x64xf32> to vector<8xf32>
    %10 = vector.shape_cast %9 : vector<8xf32> to vector<8x1xf32>
    %cst_10 = arith.constant 6.400000e+01 : f32
    %11 = vector.broadcast %cst_10 : f32 to vector<8x1xf32>
    %12 = arith.divf %10, %11 : vector<8x1xf32>
    %13 = vector.broadcast %12 : vector<8x1xf32> to vector<8x64xf32>
    %14 = arith.subf %6, %13 : vector<8x64xf32>
    %15 = arith.mulf %14, %14 : vector<8x64xf32>
    %cst_11 = arith.constant dense<0.000000e+00> : vector<8xf32>
    %16 = vector.multi_reduction <add>, %15, %cst_11 [1] : vector<8x64xf32> to vector<8xf32>
    %17 = vector.shape_cast %16 : vector<8xf32> to vector<8x1xf32>
    %cst_12 = arith.constant 6.400000e+01 : f32
    %18 = vector.broadcast %cst_12 : f32 to vector<8x1xf32>
    %19 = arith.divf %17, %18 : vector<8x1xf32>
    %20 = vector.broadcast %12 : vector<8x1xf32> to vector<8x64xf32>
    %21 = arith.subf %6, %20 : vector<8x64xf32>
    %cst_13 = arith.constant 9.99999974E-6 : f32
    %22 = vector.broadcast %cst_13 : f32 to vector<8x1xf32>
    %23 = arith.addf %19, %22 : vector<8x1xf32>
    %24 = math.rsqrt %23 : vector<8x1xf32>
    %25 = vector.broadcast %24 : vector<8x1xf32> to vector<8x64xf32>
    %26 = arith.mulf %21, %25 : vector<8x64xf32>
    %27 = vector.broadcast %7 : vector<1x64xf32> to vector<8x64xf32>
    %28 = arith.mulf %26, %27 : vector<8x64xf32>
    %29 = vector.broadcast %8 : vector<1x64xf32> to vector<8x64xf32>
    %30 = arith.addf %28, %29 : vector<8x64xf32>
    %c0_14 = arith.constant 0 : index
    %c0_15 = arith.constant 0 : index
    %31 = vector.load %arg5[%c0_14, %c0_15] : memref<8x64xf32, #tpu.memory_space<vmem>>, vector<8x64xf32>
    tpu.vector_store %arg5[%c0_14, %c0_15], %30 {strides = array<i32>} : memref<8x64xf32, #tpu.memory_space<vmem>>, vector<8x64xf32>,
    return
  }
}

module attributes {stable_mosaic.version = 11 : i64} {
  func.func @_swin_block_kernel(%arg0: i32, %arg1: memref<1x4x64xf32, #tpu.memory_space<vmem>>, %arg2: memref<64x192xbf16, #tpu.memory_space<vmem>>, %arg3: memref<1x192xf32, #tpu.memory_space<vmem>>, %arg4: memref<64x64xbf16, #tpu.memory_space<vmem>>, %arg5: memref<1x64xf32, #tpu.memory_space<vmem>>, %arg6: memref<4x4x4xf32, #tpu.memory_space<vmem>>, %arg7: memref<4x1x1xf32, #tpu.memory_space<vmem>>, %arg8: memref<1x64xf32, #tpu.memory_space<vmem>>, %arg9: memref<1x64xf32, #tpu.memory_space<vmem>>, %arg10: memref<64x256xbf16, #tpu.memory_space<vmem>>, %arg11: memref<1x256xf32, #tpu.memory_space<vmem>>, %arg12: memref<256x64xbf16, #tpu.memory_space<vmem>>, %arg13: memref<1x64xf32, #tpu.memory_space<vmem>>, %arg14: memref<1x64xf32, #tpu.memory_space<vmem>>, %arg15: memref<1x64xf32, #tpu.memory_space<vmem>>, %arg16: memref<1x4x64xf32, #tpu.memory_space<vmem>>) attributes {dimension_semantics = [#tpu.dimension_semantics<parallel>], iteration_bounds = array<i64: 2>, scalar_prefetch = 0 : i64, scratch_operands = 0 : i64, tpu.core_type = #tpu.core_type<tc>, window_params = [{transform_indices = @transform_0, window_bounds = array<i64: 1, 4, 64>}, {pipeline_mode = #tpu.pipeline_mode<synchronous>, transform_indices = @transform_1, window_bounds = array<i64: 64, 192>}, {pipeline_mode = #tpu.pipeline_mode<synchronous>, transform_indices = @transform_2, window_bounds = array<i64: 1, 192>}, {pipeline_mode = #tpu.pipeline_mode<synchronous>, transform_indices = @transform_3, window_bounds = array<i64: 64, 64>}, {pipeline_mode = #tpu.pipeline_mode<synchronous>, transform_indices = @transform_4, window_bounds = array<i64: 1, 64>}, {pipeline_mode = #tpu.pipeline_mode<synchronous>, transform_indices = @transform_5, window_bounds = array<i64: 4, 4, 4>}, {pipeline_mode = #tpu.pipeline_mode<synchronous>, transform_indices = @transform_6, window_bounds = array<i64: 4, 1, 1>}, {pipeline_mode = #tpu.pipeline_mode<synchronous>, transform_indices = @transform_7, window_bounds = array<i64: 1, 64>}, {pipeline_mode = #tpu.pipeline_mode<synchronous>, transform_indices = @transform_8, window_bounds = array<i64: 1, 64>}, {pipeline_mode = #tpu.pipeline_mode<synchronous>, transform_indices = @transform_9, window_bounds = array<i64: 64, 256>}, {pipeline_mode = #tpu.pipeline_mode<synchronous>, transform_indices = @transform_10, window_bounds = array<i64: 1, 256>}, {pipeline_mode = #tpu.pipeline_mode<synchronous>, transform_indices = @transform_11, window_bounds = array<i64: 256, 64>}, {pipeline_mode = #tpu.pipeline_mode<synchronous>, transform_indices = @transform_12, window_bounds = array<i64: 1, 64>}, {pipeline_mode = #tpu.pipeline_mode<synchronous>, transform_indices = @transform_13, window_bounds = array<i64: 1, 64>}, {pipeline_mode = #tpu.pipeline_mode<synchronous>, transform_indices = @transform_14, window_bounds = array<i64: 1, 64>}, {transform_indices = @transform_15, window_bounds = array<i64: 1, 4, 64>}]} {
    %c0 = arith.constant 0 : index
    %c0_0 = arith.constant 0 : index
    %c0_1 = arith.constant 0 : index
    %0 = vector.load %arg1[%c0, %c0_0, %c0_1] : memref<1x4x64xf32, #tpu.memory_space<vmem>>, vector<1x4x64xf32>
    %1 = vector.shape_cast %0 : vector<1x4x64xf32> to vector<4x64xf32>
    %2 = arith.truncf %1 : vector<4x64xf32> to vector<4x64xbf16>
    %c0_2 = arith.constant 0 : index
    %c0_3 = arith.constant 0 : index
    %3 = vector.load %arg2[%c0_2, %c0_3] : memref<64x192xbf16, #tpu.memory_space<vmem>>, vector<64x192xbf16>
    %cst = arith.constant dense<0.000000e+00> : vector<4x192xf32>
    %4 = tpu.matmul %2, %3, %cst {dimension_numbers = #tpu.dot_dimension_numbers<[1], [0], [0], [1], [0, 0, 1, 1], [], []>} : vector<4x64xbf16>, vector<64x192xbf16>, vector<4x192xf32> -> vector<4x192xf32>
    %c0_4 = arith.constant 0 : index
    %c0_5 = arith.constant 0 : index
    %5 = vector.load %arg3[%c0_4, %c0_5] : memref<1x192xf32, #tpu.memory_space<vmem>>, vector<1x192xf32>
    %6 = vector.broadcast %5 : vector<1x192xf32> to vector<4x192xf32>
    %7 = arith.addf %4, %6 : vector<4x192xf32>
    %8 = vector.extract_strided_slice %7 {offsets = [0, 0], sizes = [4, 64], strides = [1, 1]} : vector<4x192xf32> to vector<4x64xf32>
    %9 = vector.extract_strided_slice %7 {offsets = [0, 64], sizes = [4, 64], strides = [1, 1]} : vector<4x192xf32> to vector<4x64xf32>
    %10 = vector.extract_strided_slice %7 {offsets = [0, 128], sizes = [4, 64], strides = [1, 1]} : vector<4x192xf32> to vector<4x64xf32>
    %11 = vector.extract_strided_slice %8 {offsets = [0, 0], sizes = [4, 16], strides = [1, 1]} : vector<4x64xf32> to vector<4x16xf32>
    %12 = vector.extract_strided_slice %9 {offsets = [0, 0], sizes = [4, 16], strides = [1, 1]} : vector<4x64xf32> to vector<4x16xf32>
    %13 = vector.extract_strided_slice %10 {offsets = [0, 0], sizes = [4, 16], strides = [1, 1]} : vector<4x64xf32> to vector<4x16xf32>
    %14 = arith.mulf %11, %11 : vector<4x16xf32>
    %cst_6 = arith.constant dense<0.000000e+00> : vector<4xf32>
    %15 = vector.multi_reduction <add>, %14, %cst_6 [1] : vector<4x16xf32> to vector<4xf32>
    %16 = vector.shape_cast %15 : vector<4xf32> to vector<4x1xf32>
    %cst_7 = arith.constant 1.000000e-24 : f32
    %17 = vector.broadcast %cst_7 : f32 to vector<4x1xf32>
    %18 = arith.maximumf %16, %17 : vector<4x1xf32>
    %19 = math.rsqrt %18 : vector<4x1xf32>
    %20 = vector.broadcast %19 : vector<4x1xf32> to vector<4x16xf32>
    %21 = arith.mulf %11, %20 : vector<4x16xf32>
    %22 = arith.mulf %12, %12 : vector<4x16xf32>
    %cst_8 = arith.constant dense<0.000000e+00> : vector<4xf32>
    %23 = vector.multi_reduction <add>, %22, %cst_8 [1] : vector<4x16xf32> to vector<4xf32>
    %24 = vector.shape_cast %23 : vector<4xf32> to vector<4x1xf32>
    %cst_9 = arith.constant 1.000000e-24 : f32
    %25 = vector.broadcast %cst_9 : f32 to vector<4x1xf32>
    %26 = arith.maximumf %24, %25 : vector<4x1xf32>
    %27 = math.rsqrt %26 : vector<4x1xf32>
    %28 = vector.broadcast %27 : vector<4x1xf32> to vector<4x16xf32>
    %29 = arith.mulf %12, %28 : vector<4x16xf32>
    %30 = arith.truncf %21 : vector<4x16xf32> to vector<4x16xbf16>
    %31 = arith.truncf %29 : vector<4x16xf32> to vector<4x16xbf16>
    "tpu.trace_start"() <{level = 10 : i32, message = "qd,kd->qk"}> : () -> ()
    %cst_10 = arith.constant dense<0.000000e+00> : vector<4x4xf32>
    %32 = tpu.matmul %30, %31, %cst_10 {dimension_numbers = #tpu.dot_dimension_numbers<[1], [1], [0], [0], [0, 0, 1, 0], [], []>} : vector<4x16xbf16>, vector<4x16xbf16>, vector<4x4xf32> -> vector<4x4xf32>
    "tpu.trace_stop"() : () -> ()
    %c0_11 = arith.constant 0 : index
    %c0_12 = arith.constant 0 : index
    %c0_13 = arith.constant 0 : index
    %33 = vector.load %arg7[%c0_11, %c0_12, %c0_13] : memref<4x1x1xf32, #tpu.memory_space<vmem>>, vector<1x1x1xf32>
    %34 = vector.shape_cast %33 : vector<1x1x1xf32> to vector<1x1xf32>
    %35 = vector.broadcast %34 : vector<1x1xf32> to vector<4x4xf32>
    %36 = arith.mulf %32, %35 : vector<4x4xf32>
    %c0_14 = arith.constant 0 : index
    %c0_15 = arith.constant 0 : index
    %c0_16 = arith.constant 0 : index
    %37 = vector.load %arg6[%c0_14, %c0_15, %c0_16] : memref<4x4x4xf32, #tpu.memory_space<vmem>>, vector<1x4x4xf32>
    %38 = vector.shape_cast %37 : vector<1x4x4xf32> to vector<4x4xf32>
    %39 = arith.addf %36, %38 : vector<4x4xf32>
    %cst_17 = arith.constant dense<0xFF800000> : vector<4xf32>
    %40 = vector.multi_reduction <maximumf>, %39, %cst_17 [1] : vector<4x4xf32> to vector<4xf32>
    %41 = vector.shape_cast %40 : vector<4xf32> to vector<4x1xf32>
    %42 = vector.broadcast %41 : vector<4x1xf32> to vector<4x4xf32>
    %43 = arith.subf %39, %42 : vector<4x4xf32>
    %44 = math.exp %43 : vector<4x4xf32>
    %cst_18 = arith.constant dense<0.000000e+00> : vector<4xf32>
    %45 = vector.multi_reduction <add>, %44, %cst_18 [1] : vector<4x4xf32> to vector<4xf32>
    %46 = vector.shape_cast %45 : vector<4xf32> to vector<4x1xf32>
    %47 = tpu.reciprocal %46 {approx = true} : vector<4x1xf32> -> vector<4x1xf32>
    %48 = vector.broadcast %47 : vector<4x1xf32> to vector<4x4xf32>
    %49 = arith.mulf %44, %48 : vector<4x4xf32>
    %50 = arith.truncf %49 : vector<4x4xf32> to vector<4x4xbf16>
    %51 = arith.truncf %13 : vector<4x16xf32> to vector<4x16xbf16>
    %cst_19 = arith.constant dense<0.000000e+00> : vector<4x16xf32>
    %52 = tpu.matmul %50, %51, %cst_19 {dimension_numbers = #tpu.dot_dimension_numbers<[1], [0], [0], [1], [0, 0, 1, 1], [], []>} : vector<4x4xbf16>, vector<4x16xbf16>, vector<4x16xf32> -> vector<4x16xf32>
    %53 = vector.extract_strided_slice %8 {offsets = [0, 16], sizes = [4, 16], strides = [1, 1]} : vector<4x64xf32> to vector<4x16xf32>
    %54 = vector.extract_strided_slice %9 {offsets = [0, 16], sizes = [4, 16], strides = [1, 1]} : vector<4x64xf32> to vector<4x16xf32>
    %55 = vector.extract_strided_slice %10 {offsets = [0, 16], sizes = [4, 16], strides = [1, 1]} : vector<4x64xf32> to vector<4x16xf32>
    %56 = arith.mulf %53, %53 : vector<4x16xf32>
    %cst_20 = arith.constant dense<0.000000e+00> : vector<4xf32>
    %57 = vector.multi_reduction <add>, %56, %cst_20 [1] : vector<4x16xf32> to vector<4xf32>
    %58 = vector.shape_cast %57 : vector<4xf32> to vector<4x1xf32>
    %cst_21 = arith.constant 1.000000e-24 : f32
    %59 = vector.broadcast %cst_21 : f32 to vector<4x1xf32>
    %60 = arith.maximumf %58, %59 : vector<4x1xf32>
    %61 = math.rsqrt %60 : vector<4x1xf32>
    %62 = vector.broadcast %61 : vector<4x1xf32> to vector<4x16xf32>
    %63 = arith.mulf %53, %62 : vector<4x16xf32>
    %64 = arith.mulf %54, %54 : vector<4x16xf32>
    %cst_22 = arith.constant dense<0.000000e+00> : vector<4xf32>
    %65 = vector.multi_reduction <add>, %64, %cst_22 [1] : vector<4x16xf32> to vector<4xf32>
    %66 = vector.shape_cast %65 : vector<4xf32> to vector<4x1xf32>
    %cst_23 = arith.constant 1.000000e-24 : f32
    %67 = vector.broadcast %cst_23 : f32 to vector<4x1xf32>
    %68 = arith.maximumf %66, %67 : vector<4x1xf32>
    %69 = math.rsqrt %68 : vector<4x1xf32>
    %70 = vector.broadcast %69 : vector<4x1xf32> to vector<4x16xf32>
    %71 = arith.mulf %54, %70 : vector<4x16xf32>
    %72 = arith.truncf %63 : vector<4x16xf32> to vector<4x16xbf16>
    %73 = arith.truncf %71 : vector<4x16xf32> to vector<4x16xbf16>
    "tpu.trace_start"() <{level = 10 : i32, message = "qd,kd->qk"}> : () -> ()
    %cst_24 = arith.constant dense<0.000000e+00> : vector<4x4xf32>
    %74 = tpu.matmul %72, %73, %cst_24 {dimension_numbers = #tpu.dot_dimension_numbers<[1], [1], [0], [0], [0, 0, 1, 0], [], []>} : vector<4x16xbf16>, vector<4x16xbf16>, vector<4x4xf32> -> vector<4x4xf32>
    "tpu.trace_stop"() : () -> ()
    %c1 = arith.constant 1 : index
    %c0_25 = arith.constant 0 : index
    %c0_26 = arith.constant 0 : index
    %75 = vector.load %arg7[%c1, %c0_25, %c0_26] : memref<4x1x1xf32, #tpu.memory_space<vmem>>, vector<1x1x1xf32>
    %76 = vector.shape_cast %75 : vector<1x1x1xf32> to vector<1x1xf32>
    %77 = vector.broadcast %76 : vector<1x1xf32> to vector<4x4xf32>
    %78 = arith.mulf %74, %77 : vector<4x4xf32>
    %c1_27 = arith.constant 1 : index
    %c0_28 = arith.constant 0 : index
    %c0_29 = arith.constant 0 : index
    %79 = vector.load %arg6[%c1_27, %c0_28, %c0_29] : memref<4x4x4xf32, #tpu.memory_space<vmem>>, vector<1x4x4xf32>
    %80 = vector.shape_cast %79 : vector<1x4x4xf32> to vector<4x4xf32>
    %81 = arith.addf %78, %80 : vector<4x4xf32>
    %cst_30 = arith.constant dense<0xFF800000> : vector<4xf32>
    %82 = vector.multi_reduction <maximumf>, %81, %cst_30 [1] : vector<4x4xf32> to vector<4xf32>
    %83 = vector.shape_cast %82 : vector<4xf32> to vector<4x1xf32>
    %84 = vector.broadcast %83 : vector<4x1xf32> to vector<4x4xf32>
    %85 = arith.subf %81, %84 : vector<4x4xf32>
    %86 = math.exp %85 : vector<4x4xf32>
    %cst_31 = arith.constant dense<0.000000e+00> : vector<4xf32>
    %87 = vector.multi_reduction <add>, %86, %cst_31 [1] : vector<4x4xf32> to vector<4xf32>
    %88 = vector.shape_cast %87 : vector<4xf32> to vector<4x1xf32>
    %89 = tpu.reciprocal %88 {approx = true} : vector<4x1xf32> -> vector<4x1xf32>
    %90 = vector.broadcast %89 : vector<4x1xf32> to vector<4x4xf32>
    %91 = arith.mulf %86, %90 : vector<4x4xf32>
    %92 = arith.truncf %91 : vector<4x4xf32> to vector<4x4xbf16>
    %93 = arith.truncf %55 : vector<4x16xf32> to vector<4x16xbf16>
    %cst_32 = arith.constant dense<0.000000e+00> : vector<4x16xf32>
    %94 = tpu.matmul %92, %93, %cst_32 {dimension_numbers = #tpu.dot_dimension_numbers<[1], [0], [0], [1], [0, 0, 1, 1], [], []>} : vector<4x4xbf16>, vector<4x16xbf16>, vector<4x16xf32> -> vector<4x16xf32>
    %95 = vector.extract_strided_slice %8 {offsets = [0, 32], sizes = [4, 16], strides = [1, 1]} : vector<4x64xf32> to vector<4x16xf32>
    %96 = vector.extract_strided_slice %9 {offsets = [0, 32], sizes = [4, 16], strides = [1, 1]} : vector<4x64xf32> to vector<4x16xf32>
    %97 = vector.extract_strided_slice %10 {offsets = [0, 32], sizes = [4, 16], strides = [1, 1]} : vector<4x64xf32> to vector<4x16xf32>
    %98 = arith.mulf %95, %95 : vector<4x16xf32>
    %cst_33 = arith.constant dense<0.000000e+00> : vector<4xf32>
    %99 = vector.multi_reduction <add>, %98, %cst_33 [1] : vector<4x16xf32> to vector<4xf32>
    %100 = vector.shape_cast %99 : vector<4xf32> to vector<4x1xf32>
    %cst_34 = arith.constant 1.000000e-24 : f32
    %101 = vector.broadcast %cst_34 : f32 to vector<4x1xf32>
    %102 = arith.maximumf %100, %101 : vector<4x1xf32>
    %103 = math.rsqrt %102 : vector<4x1xf32>
    %104 = vector.broadcast %103 : vector<4x1xf32> to vector<4x16xf32>
    %105 = arith.mulf %95, %104 : vector<4x16xf32>
    %106 = arith.mulf %96, %96 : vector<4x16xf32>
    %cst_35 = arith.constant dense<0.000000e+00> : vector<4xf32>
    %107 = vector.multi_reduction <add>, %106, %cst_35 [1] : vector<4x16xf32> to vector<4xf32>
    %108 = vector.shape_cast %107 : vector<4xf32> to vector<4x1xf32>
    %cst_36 = arith.constant 1.000000e-24 : f32
    %109 = vector.broadcast %cst_36 : f32 to vector<4x1xf32>
    %110 = arith.maximumf %108, %109 : vector<4x1xf32>
    %111 = math.rsqrt %110 : vector<4x1xf32>
    %112 = vector.broadcast %111 : vector<4x1xf32> to vector<4x16xf32>
    %113 = arith.mulf %96, %112 : vector<4x16xf32>
    %114 = arith.truncf %105 : vector<4x16xf32> to vector<4x16xbf16>
    %115 = arith.truncf %113 : vector<4x16xf32> to vector<4x16xbf16>
    "tpu.trace_start"() <{level = 10 : i32, message = "qd,kd->qk"}> : () -> ()
    %cst_37 = arith.constant dense<0.000000e+00> : vector<4x4xf32>
    %116 = tpu.matmul %114, %115, %cst_37 {dimension_numbers = #tpu.dot_dimension_numbers<[1], [1], [0], [0], [0, 0, 1, 0], [], []>} : vector<4x16xbf16>, vector<4x16xbf16>, vector<4x4xf32> -> vector<4x4xf32>
    "tpu.trace_stop"() : () -> ()
    %c2 = arith.constant 2 : index
    %c0_38 = arith.constant 0 : index
    %c0_39 = arith.constant 0 : index
    %117 = vector.load %arg7[%c2, %c0_38, %c0_39] : memref<4x1x1xf32, #tpu.memory_space<vmem>>, vector<1x1x1xf32>
    %118 = vector.shape_cast %117 : vector<1x1x1xf32> to vector<1x1xf32>
    %119 = vector.broadcast %118 : vector<1x1xf32> to vector<4x4xf32>
    %120 = arith.mulf %116, %119 : vector<4x4xf32>
    %c2_40 = arith.constant 2 : index
    %c0_41 = arith.constant 0 : index
    %c0_42 = arith.constant 0 : index
    %121 = vector.load %arg6[%c2_40, %c0_41, %c0_42] : memref<4x4x4xf32, #tpu.memory_space<vmem>>, vector<1x4x4xf32>
    %122 = vector.shape_cast %121 : vector<1x4x4xf32> to vector<4x4xf32>
    %123 = arith.addf %120, %122 : vector<4x4xf32>
    %cst_43 = arith.constant dense<0xFF800000> : vector<4xf32>
    %124 = vector.multi_reduction <maximumf>, %123, %cst_43 [1] : vector<4x4xf32> to vector<4xf32>
    %125 = vector.shape_cast %124 : vector<4xf32> to vector<4x1xf32>
    %126 = vector.broadcast %125 : vector<4x1xf32> to vector<4x4xf32>
    %127 = arith.subf %123, %126 : vector<4x4xf32>
    %128 = math.exp %127 : vector<4x4xf32>
    %cst_44 = arith.constant dense<0.000000e+00> : vector<4xf32>
    %129 = vector.multi_reduction <add>, %128, %cst_44 [1] : vector<4x4xf32> to vector<4xf32>
    %130 = vector.shape_cast %129 : vector<4xf32> to vector<4x1xf32>
    %131 = tpu.reciprocal %130 {approx = true} : vector<4x1xf32> -> vector<4x1xf32>
    %132 = vector.broadcast %131 : vector<4x1xf32> to vector<4x4xf32>
    %133 = arith.mulf %128, %132 : vector<4x4xf32>
    %134 = arith.truncf %133 : vector<4x4xf32> to vector<4x4xbf16>
    %135 = arith.truncf %97 : vector<4x16xf32> to vector<4x16xbf16>
    %cst_45 = arith.constant dense<0.000000e+00> : vector<4x16xf32>
    %136 = tpu.matmul %134, %135, %cst_45 {dimension_numbers = #tpu.dot_dimension_numbers<[1], [0], [0], [1], [0, 0, 1, 1], [], []>} : vector<4x4xbf16>, vector<4x16xbf16>, vector<4x16xf32> -> vector<4x16xf32>
    %137 = vector.extract_strided_slice %8 {offsets = [0, 48], sizes = [4, 16], strides = [1, 1]} : vector<4x64xf32> to vector<4x16xf32>
    %138 = vector.extract_strided_slice %9 {offsets = [0, 48], sizes = [4, 16], strides = [1, 1]} : vector<4x64xf32> to vector<4x16xf32>
    %139 = vector.extract_strided_slice %10 {offsets = [0, 48], sizes = [4, 16], strides = [1, 1]} : vector<4x64xf32> to vector<4x16xf32>
    %140 = arith.mulf %137, %137 : vector<4x16xf32>
    %cst_46 = arith.constant dense<0.000000e+00> : vector<4xf32>
    %141 = vector.multi_reduction <add>, %140, %cst_46 [1] : vector<4x16xf32> to vector<4xf32>
    %142 = vector.shape_cast %141 : vector<4xf32> to vector<4x1xf32>
    %cst_47 = arith.constant 1.000000e-24 : f32
    %143 = vector.broadcast %cst_47 : f32 to vector<4x1xf32>
    %144 = arith.maximumf %142, %143 : vector<4x1xf32>
    %145 = math.rsqrt %144 : vector<4x1xf32>
    %146 = vector.broadcast %145 : vector<4x1xf32> to vector<4x16xf32>
    %147 = arith.mulf %137, %146 : vector<4x16xf32>
    %148 = arith.mulf %138, %138 : vector<4x16xf32>
    %cst_48 = arith.constant dense<0.000000e+00> : vector<4xf32>
    %149 = vector.multi_reduction <add>, %148, %cst_48 [1] : vector<4x16xf32> to vector<4xf32>
    %150 = vector.shape_cast %149 : vector<4xf32> to vector<4x1xf32>
    %cst_49 = arith.constant 1.000000e-24 : f32
    %151 = vector.broadcast %cst_49 : f32 to vector<4x1xf32>
    %152 = arith.maximumf %150, %151 : vector<4x1xf32>
    %153 = math.rsqrt %152 : vector<4x1xf32>
    %154 = vector.broadcast %153 : vector<4x1xf32> to vector<4x16xf32>
    %155 = arith.mulf %138, %154 : vector<4x16xf32>
    %156 = arith.truncf %147 : vector<4x16xf32> to vector<4x16xbf16>
    %157 = arith.truncf %155 : vector<4x16xf32> to vector<4x16xbf16>
    "tpu.trace_start"() <{level = 10 : i32, message = "qd,kd->qk"}> : () -> ()
    %cst_50 = arith.constant dense<0.000000e+00> : vector<4x4xf32>
    %158 = tpu.matmul %156, %157, %cst_50 {dimension_numbers = #tpu.dot_dimension_numbers<[1], [1], [0], [0], [0, 0, 1, 0], [], []>} : vector<4x16xbf16>, vector<4x16xbf16>, vector<4x4xf32> -> vector<4x4xf32>
    "tpu.trace_stop"() : () -> ()
    %c3 = arith.constant 3 : index
    %c0_51 = arith.constant 0 : index
    %c0_52 = arith.constant 0 : index
    %159 = vector.load %arg7[%c3, %c0_51, %c0_52] : memref<4x1x1xf32, #tpu.memory_space<vmem>>, vector<1x1x1xf32>
    %160 = vector.shape_cast %159 : vector<1x1x1xf32> to vector<1x1xf32>
    %161 = vector.broadcast %160 : vector<1x1xf32> to vector<4x4xf32>
    %162 = arith.mulf %158, %161 : vector<4x4xf32>
    %c3_53 = arith.constant 3 : index
    %c0_54 = arith.constant 0 : index
    %c0_55 = arith.constant 0 : index
    %163 = vector.load %arg6[%c3_53, %c0_54, %c0_55] : memref<4x4x4xf32, #tpu.memory_space<vmem>>, vector<1x4x4xf32>
    %164 = vector.shape_cast %163 : vector<1x4x4xf32> to vector<4x4xf32>
    %165 = arith.addf %162, %164 : vector<4x4xf32>
    %cst_56 = arith.constant dense<0xFF800000> : vector<4xf32>
    %166 = vector.multi_reduction <maximumf>, %165, %cst_56 [1] : vector<4x4xf32> to vector<4xf32>
    %167 = vector.shape_cast %166 : vector<4xf32> to vector<4x1xf32>
    %168 = vector.broadcast %167 : vector<4x1xf32> to vector<4x4xf32>
    %169 = arith.subf %165, %168 : vector<4x4xf32>
    %170 = math.exp %169 : vector<4x4xf32>
    %cst_57 = arith.constant dense<0.000000e+00> : vector<4xf32>
    %171 = vector.multi_reduction <add>, %170, %cst_57 [1] : vector<4x4xf32> to vector<4xf32>
    %172 = vector.shape_cast %171 : vector<4xf32> to vector<4x1xf32>
    %173 = tpu.reciprocal %172 {approx = true} : vector<4x1xf32> -> vector<4x1xf32>
    %174 = vector.broadcast %173 : vector<4x1xf32> to vector<4x4xf32>
    %175 = arith.mulf %170, %174 : vector<4x4xf32>
    %176 = arith.truncf %175 : vector<4x4xf32> to vector<4x4xbf16>
    %177 = arith.truncf %139 : vector<4x16xf32> to vector<4x16xbf16>
    %cst_58 = arith.constant dense<0.000000e+00> : vector<4x16xf32>
    %178 = tpu.matmul %176, %177, %cst_58 {dimension_numbers = #tpu.dot_dimension_numbers<[1], [0], [0], [1], [0, 0, 1, 1], [], []>} : vector<4x4xbf16>, vector<4x16xbf16>, vector<4x16xf32> -> vector<4x16xf32>
    %179 = tpu.concatenate %52, %94, %136, %178 in 1 : vector<4x16xf32>, vector<4x16xf32>, vector<4x16xf32>, vector<4x16xf32> -> vector<4x64xf32>
    %180 = arith.truncf %179 : vector<4x64xf32> to vector<4x64xbf16>
    %c0_59 = arith.constant 0 : index
    %c0_60 = arith.constant 0 : index
    %181 = vector.load %arg4[%c0_59, %c0_60] : memref<64x64xbf16, #tpu.memory_space<vmem>>, vector<64x64xbf16>
    %cst_61 = arith.constant dense<0.000000e+00> : vector<4x64xf32>
    %182 = tpu.matmul %180, %181, %cst_61 {dimension_numbers = #tpu.dot_dimension_numbers<[1], [0], [0], [1], [0, 0, 1, 1], [], []>} : vector<4x64xbf16>, vector<64x64xbf16>, vector<4x64xf32> -> vector<4x64xf32>
    %c0_62 = arith.constant 0 : index
    %c0_63 = arith.constant 0 : index
    %183 = vector.load %arg5[%c0_62, %c0_63] : memref<1x64xf32, #tpu.memory_space<vmem>>, vector<1x64xf32>
    %184 = vector.broadcast %183 : vector<1x64xf32> to vector<4x64xf32>
    %185 = arith.addf %182, %184 : vector<4x64xf32>
    %c0_64 = arith.constant 0 : index
    %c0_65 = arith.constant 0 : index
    %186 = vector.load %arg8[%c0_64, %c0_65] : memref<1x64xf32, #tpu.memory_space<vmem>>, vector<1x64xf32>
    %c0_66 = arith.constant 0 : index
    %c0_67 = arith.constant 0 : index
    %187 = vector.load %arg9[%c0_66, %c0_67] : memref<1x64xf32, #tpu.memory_space<vmem>>, vector<1x64xf32>
    %cst_68 = arith.constant dense<0.000000e+00> : vector<4xf32>
    %188 = vector.multi_reduction <add>, %185, %cst_68 [1] : vector<4x64xf32> to vector<4xf32>
    %189 = vector.shape_cast %188 : vector<4xf32> to vector<4x1xf32>
    %cst_69 = arith.constant 6.400000e+01 : f32
    %190 = vector.broadcast %cst_69 : f32 to vector<4x1xf32>
    %191 = arith.divf %189, %190 : vector<4x1xf32>
    %192 = vector.broadcast %191 : vector<4x1xf32> to vector<4x64xf32>
    %193 = arith.subf %185, %192 : vector<4x64xf32>
    %194 = arith.mulf %193, %193 : vector<4x64xf32>
    %cst_70 = arith.constant dense<0.000000e+00> : vector<4xf32>
    %195 = vector.multi_reduction <add>, %194, %cst_70 [1] : vector<4x64xf32> to vector<4xf32>
    %196 = vector.shape_cast %195 : vector<4xf32> to vector<4x1xf32>
    %cst_71 = arith.constant 6.400000e+01 : f32
    %197 = vector.broadcast %cst_71 : f32 to vector<4x1xf32>
    %198 = arith.divf %196, %197 : vector<4x1xf32>
    %199 = vector.broadcast %191 : vector<4x1xf32> to vector<4x64xf32>
    %200 = arith.subf %185, %199 : vector<4x64xf32>
    %cst_72 = arith.constant 9.99999974E-6 : f32
    %201 = vector.broadcast %cst_72 : f32 to vector<4x1xf32>
    %202 = arith.addf %198, %201 : vector<4x1xf32>
    %203 = math.rsqrt %202 : vector<4x1xf32>
    %204 = vector.broadcast %203 : vector<4x1xf32> to vector<4x64xf32>
    %205 = arith.mulf %200, %204 : vector<4x64xf32>
    %206 = vector.broadcast %186 : vector<1x64xf32> to vector<4x64xf32>
    %207 = arith.mulf %205, %206 : vector<4x64xf32>
    %208 = vector.broadcast %187 : vector<1x64xf32> to vector<4x64xf32>
    %209 = arith.addf %207, %208 : vector<4x64xf32>
    %210 = arith.addf %1, %209 : vector<4x64xf32>
    %211 = arith.truncf %210 : vector<4x64xf32> to vector<4x64xbf16>
    %c0_73 = arith.constant 0 : index
    %c0_74 = arith.constant 0 : index
    %212 = vector.load %arg10[%c0_73, %c0_74] : memref<64x256xbf16, #tpu.memory_space<vmem>>, vector<64x256xbf16>
    %cst_75 = arith.constant dense<0.000000e+00> : vector<4x256xf32>
    %213 = tpu.matmul %211, %212, %cst_75 {dimension_numbers = #tpu.dot_dimension_numbers<[1], [0], [0], [1], [0, 0, 1, 1], [], []>} : vector<4x64xbf16>, vector<64x256xbf16>, vector<4x256xf32> -> vector<4x256xf32>
    %c0_76 = arith.constant 0 : index
    %c0_77 = arith.constant 0 : index
    %214 = vector.load %arg11[%c0_76, %c0_77] : memref<1x256xf32, #tpu.memory_space<vmem>>, vector<1x256xf32>
    %215 = vector.broadcast %214 : vector<1x256xf32> to vector<4x256xf32>
    %216 = arith.addf %213, %215 : vector<4x256xf32>
    %cst_78 = arith.constant 5.000000e-01 : f32
    %217 = vector.broadcast %cst_78 : f32 to vector<4x256xf32>
    %218 = arith.mulf %217, %216 : vector<4x256xf32>
    %cst_79 = arith.constant 4.471500e-02 : f32
    %219 = vector.broadcast %cst_79 : f32 to vector<4x256xf32>
    %220 = arith.mulf %219, %216 : vector<4x256xf32>
    %221 = arith.mulf %220, %216 : vector<4x256xf32>
    %222 = arith.mulf %221, %216 : vector<4x256xf32>
    %223 = arith.addf %216, %222 : vector<4x256xf32>
    %cst_80 = arith.constant 0.797884583 : f32
    %224 = vector.broadcast %cst_80 : f32 to vector<4x256xf32>
    %225 = arith.mulf %224, %223 : vector<4x256xf32>
    %226 = math.tanh %225 : vector<4x256xf32>
    %cst_81 = arith.constant 1.000000e+00 : f32
    %227 = vector.broadcast %cst_81 : f32 to vector<4x256xf32>
    %228 = arith.addf %227, %226 : vector<4x256xf32>
    %229 = arith.mulf %218, %228 : vector<4x256xf32>
    %230 = arith.truncf %229 : vector<4x256xf32> to vector<4x256xbf16>
    %c0_82 = arith.constant 0 : index
    %c0_83 = arith.constant 0 : index
    %231 = vector.load %arg12[%c0_82, %c0_83] : memref<256x64xbf16, #tpu.memory_space<vmem>>, vector<256x64xbf16>
    %cst_84 = arith.constant dense<0.000000e+00> : vector<4x64xf32>
    %232 = tpu.matmul %230, %231, %cst_84 {dimension_numbers = #tpu.dot_dimension_numbers<[1], [0], [0], [1], [0, 0, 1, 1], [], []>} : vector<4x256xbf16>, vector<256x64xbf16>, vector<4x64xf32> -> vector<4x64xf32>
    %c0_85 = arith.constant 0 : index
    %c0_86 = arith.constant 0 : index
    %233 = vector.load %arg13[%c0_85, %c0_86] : memref<1x64xf32, #tpu.memory_space<vmem>>, vector<1x64xf32>
    %234 = vector.broadcast %233 : vector<1x64xf32> to vector<4x64xf32>
    %235 = arith.addf %232, %234 : vector<4x64xf32>
    %c0_87 = arith.constant 0 : index
    %c0_88 = arith.constant 0 : index
    %236 = vector.load %arg14[%c0_87, %c0_88] : memref<1x64xf32, #tpu.memory_space<vmem>>, vector<1x64xf32>
    %c0_89 = arith.constant 0 : index
    %c0_90 = arith.constant 0 : index
    %237 = vector.load %arg15[%c0_89, %c0_90] : memref<1x64xf32, #tpu.memory_space<vmem>>, vector<1x64xf32>
    %cst_91 = arith.constant dense<0.000000e+00> : vector<4xf32>
    %238 = vector.multi_reduction <add>, %235, %cst_91 [1] : vector<4x64xf32> to vector<4xf32>
    %239 = vector.shape_cast %238 : vector<4xf32> to vector<4x1xf32>
    %cst_92 = arith.constant 6.400000e+01 : f32
    %240 = vector.broadcast %cst_92 : f32 to vector<4x1xf32>
    %241 = arith.divf %239, %240 : vector<4x1xf32>
    %242 = vector.broadcast %241 : vector<4x1xf32> to vector<4x64xf32>
    %243 = arith.subf %235, %242 : vector<4x64xf32>
    %244 = arith.mulf %243, %243 : vector<4x64xf32>
    %cst_93 = arith.constant dense<0.000000e+00> : vector<4xf32>
    %245 = vector.multi_reduction <add>, %244, %cst_93 [1] : vector<4x64xf32> to vector<4xf32>
    %246 = vector.shape_cast %245 : vector<4xf32> to vector<4x1xf32>
    %cst_94 = arith.constant 6.400000e+01 : f32
    %247 = vector.broadcast %cst_94 : f32 to vector<4x1xf32>
    %248 = arith.divf %246, %247 : vector<4x1xf32>
    %249 = vector.broadcast %241 : vector<4x1xf32> to vector<4x64xf32>
    %250 = arith.subf %235, %249 : vector<4x64xf32>
    %cst_95 = arith.constant 9.99999974E-6 : f32
    %251 = vector.broadcast %cst_95 : f32 to vector<4x1xf32>
    %252 = arith.addf %248, %251 : vector<4x1xf32>
    %253 = math.rsqrt %252 : vector<4x1xf32>
    %254 = vector.broadcast %253 : vector<4x1xf32> to vector<4x64xf32>
    %255 = arith.mulf %250, %254 : vector<4x64xf32>
    %256 = vector.broadcast %236 : vector<1x64xf32> to vector<4x64xf32>
    %257 = arith.mulf %255, %256 : vector<4x64xf32>
    %258 = vector.broadcast %237 : vector<1x64xf32> to vector<4x64xf32>
    %259 = arith.addf %257, %258 : vector<4x64xf32>
    %260 = arith.addf %210, %259 : vector<4x64xf32>
    %c0_96 = arith.constant 0 : index
    %c0_97 = arith.constant 0 : index
    %c0_98 = arith.constant 0 : index
    %261 = vector.load %arg16[%c0_96, %c0_97, %c0_98] : memref<1x4x64xf32, #tpu.memory_space<vmem>>, vector<1x4x64xf32>
    %262 = vector.shape_cast %261 : vector<1x4x64xf32> to vector<4x64xf32>
    %263 = vector.shape_cast %260 : vector<4x64xf32> to vector<1x4x64xf32>
    tpu.vector_store %arg16[%c0_96, %c0_97, %c0_98], %263 {strides = array<i32>} : memref<1x4x64xf32, #tpu.memory_space<vmem>>, vector<1x4x64xf32>,
    return
  }
  func.func @transform_0(%arg0: i32) -> (i32, i32, i32) {
    %c0_i32 = arith.constant 0 : i32
    %c0_i32_0 = arith.constant 0 : i32
    %c0_i32_1 = arith.constant 0 : i32
    return %arg0, %c0_i32, %c0_i32_0 : i32, i32, i32
  }
  func.func @transform_1(%arg0: i32) -> (i32, i32) {
    %c0_i32 = arith.constant 0 : i32
    %c0_i32_0 = arith.constant 0 : i32
    %c0_i32_1 = arith.constant 0 : i32
    return %c0_i32, %c0_i32_0 : i32, i32
  }
  func.func @transform_2(%arg0: i32) -> (i32, i32) {
    %c0_i32 = arith.constant 0 : i32
    %c0_i32_0 = arith.constant 0 : i32
    %c0_i32_1 = arith.constant 0 : i32
    return %c0_i32, %c0_i32_0 : i32, i32
  }
  func.func @transform_3(%arg0: i32) -> (i32, i32) {
    %c0_i32 = arith.constant 0 : i32
    %c0_i32_0 = arith.constant 0 : i32
    %c0_i32_1 = arith.constant 0 : i32
    return %c0_i32, %c0_i32_0 : i32, i32
  }
  func.func @transform_4(%arg0: i32) -> (i32, i32) {
    %c0_i32 = arith.constant 0 : i32
    %c0_i32_0 = arith.constant 0 : i32
    %c0_i32_1 = arith.constant 0 : i32
    return %c0_i32, %c0_i32_0 : i32, i32
  }
  func.func @transform_5(%arg0: i32) -> (i32, i32, i32) {
    %c0_i32 = arith.constant 0 : i32
    %c0_i32_0 = arith.constant 0 : i32
    %c0_i32_1 = arith.constant 0 : i32
    %c0_i32_2 = arith.constant 0 : i32
    return %c0_i32, %c0_i32_0, %c0_i32_1 : i32, i32, i32
  }
  func.func @transform_6(%arg0: i32) -> (i32, i32, i32) {
    %c0_i32 = arith.constant 0 : i32
    %c0_i32_0 = arith.constant 0 : i32
    %c0_i32_1 = arith.constant 0 : i32
    %c0_i32_2 = arith.constant 0 : i32
    return %c0_i32, %c0_i32_0, %c0_i32_1 : i32, i32, i32
  }
  func.func @transform_7(%arg0: i32) -> (i32, i32) {
    %c0_i32 = arith.constant 0 : i32
    %c0_i32_0 = arith.constant 0 : i32
    %c0_i32_1 = arith.constant 0 : i32
    return %c0_i32, %c0_i32_0 : i32, i32
  }
  func.func @transform_8(%arg0: i32) -> (i32, i32) {
    %c0_i32 = arith.constant 0 : i32
    %c0_i32_0 = arith.constant 0 : i32
    %c0_i32_1 = arith.constant 0 : i32
    return %c0_i32, %c0_i32_0 : i32, i32
  }
  func.func @transform_9(%arg0: i32) -> (i32, i32) {
    %c0_i32 = arith.constant 0 : i32
    %c0_i32_0 = arith.constant 0 : i32
    %c0_i32_1 = arith.constant 0 : i32
    return %c0_i32, %c0_i32_0 : i32, i32
  }
  func.func @transform_10(%arg0: i32) -> (i32, i32) {
    %c0_i32 = arith.constant 0 : i32
    %c0_i32_0 = arith.constant 0 : i32
    %c0_i32_1 = arith.constant 0 : i32
    return %c0_i32, %c0_i32_0 : i32, i32
  }
  func.func @transform_11(%arg0: i32) -> (i32, i32) {
    %c0_i32 = arith.constant 0 : i32
    %c0_i32_0 = arith.constant 0 : i32
    %c0_i32_1 = arith.constant 0 : i32
    return %c0_i32, %c0_i32_0 : i32, i32
  }
  func.func @transform_12(%arg0: i32) -> (i32, i32) {
    %c0_i32 = arith.constant 0 : i32
    %c0_i32_0 = arith.constant 0 : i32
    %c0_i32_1 = arith.constant 0 : i32
    return %c0_i32, %c0_i32_0 : i32, i32
  }
  func.func @transform_13(%arg0: i32) -> (i32, i32) {
    %c0_i32 = arith.constant 0 : i32
    %c0_i32_0 = arith.constant 0 : i32
    %c0_i32_1 = arith.constant 0 : i32
    return %c0_i32, %c0_i32_0 : i32, i32
  }
  func.func @transform_14(%arg0: i32) -> (i32, i32) {
    %c0_i32 = arith.constant 0 : i32
    %c0_i32_0 = arith.constant 0 : i32
    %c0_i32_1 = arith.constant 0 : i32
    return %c0_i32, %c0_i32_0 : i32, i32
  }
  func.func @transform_15(%arg0: i32) -> (i32, i32, i32) {
    %c0_i32 = arith.constant 0 : i32
    %c0_i32_0 = arith.constant 0 : i32
    %c0_i32_1 = arith.constant 0 : i32
    return %arg0, %c0_i32, %c0_i32_0 : i32, i32, i32
  }
}

module attributes {stable_mosaic.version = 11 : i64} {
  func.func @_head_kernel(%arg0: memref<2x4x64xf32, #tpu.memory_space<vmem>>, %arg1: memref<1x64xf32, #tpu.memory_space<vmem>>, %arg2: memref<1x64xf32, #tpu.memory_space<vmem>>, %arg3: memref<64x10xbf16, #tpu.memory_space<vmem>>, %arg4: memref<1x10xf32, #tpu.memory_space<vmem>>, %arg5: memref<2x10xf32, #tpu.memory_space<vmem>>) attributes {dimension_semantics = [], scalar_prefetch = 0 : i64, scratch_operands = 0 : i64, tpu.core_type = #tpu.core_type<tc>} {
    %c0 = arith.constant 0 : index
    %c0_0 = arith.constant 0 : index
    %c0_1 = arith.constant 0 : index
    %0 = vector.load %arg0[%c0, %c0_0, %c0_1] : memref<2x4x64xf32, #tpu.memory_space<vmem>>, vector<2x4x64xf32>
    %c0_2 = arith.constant 0 : index
    %c0_3 = arith.constant 0 : index
    %1 = vector.load %arg1[%c0_2, %c0_3] : memref<1x64xf32, #tpu.memory_space<vmem>>, vector<1x64xf32>
    %c0_4 = arith.constant 0 : index
    %c0_5 = arith.constant 0 : index
    %2 = vector.load %arg2[%c0_4, %c0_5] : memref<1x64xf32, #tpu.memory_space<vmem>>, vector<1x64xf32>
    %cst = arith.constant dense<0.000000e+00> : vector<2x4xf32>
    %3 = vector.multi_reduction <add>, %0, %cst [2] : vector<2x4x64xf32> to vector<2x4xf32>
    %4 = vector.shape_cast %3 : vector<2x4xf32> to vector<2x4x1xf32>
    %cst_6 = arith.constant 6.400000e+01 : f32
    %5 = vector.broadcast %cst_6 : f32 to vector<2x4x1xf32>
    %6 = arith.divf %4, %5 : vector<2x4x1xf32>
    %7 = vector.broadcast %6 : vector<2x4x1xf32> to vector<2x4x64xf32>
    %8 = arith.subf %0, %7 : vector<2x4x64xf32>
    %9 = arith.mulf %8, %8 : vector<2x4x64xf32>
    %cst_7 = arith.constant dense<0.000000e+00> : vector<2x4xf32>
    %10 = vector.multi_reduction <add>, %9, %cst_7 [2] : vector<2x4x64xf32> to vector<2x4xf32>
    %11 = vector.shape_cast %10 : vector<2x4xf32> to vector<2x4x1xf32>
    %cst_8 = arith.constant 6.400000e+01 : f32
    %12 = vector.broadcast %cst_8 : f32 to vector<2x4x1xf32>
    %13 = arith.divf %11, %12 : vector<2x4x1xf32>
    %14 = vector.broadcast %6 : vector<2x4x1xf32> to vector<2x4x64xf32>
    %15 = arith.subf %0, %14 : vector<2x4x64xf32>
    %cst_9 = arith.constant 9.99999974E-6 : f32
    %16 = vector.broadcast %cst_9 : f32 to vector<2x4x1xf32>
    %17 = arith.addf %13, %16 : vector<2x4x1xf32>
    %18 = math.rsqrt %17 : vector<2x4x1xf32>
    %19 = vector.broadcast %18 : vector<2x4x1xf32> to vector<2x4x64xf32>
    %20 = arith.mulf %15, %19 : vector<2x4x64xf32>
    %21 = vector.shape_cast %1 : vector<1x64xf32> to vector<1x1x64xf32>
    %22 = vector.broadcast %21 : vector<1x1x64xf32> to vector<2x4x64xf32>
    %23 = arith.mulf %20, %22 : vector<2x4x64xf32>
    %24 = vector.shape_cast %2 : vector<1x64xf32> to vector<1x1x64xf32>
    %25 = vector.broadcast %24 : vector<1x1x64xf32> to vector<2x4x64xf32>
    %26 = arith.addf %23, %25 : vector<2x4x64xf32>
    %cst_10 = arith.constant dense<0.000000e+00> : vector<2x64xf32>
    %27 = vector.multi_reduction <add>, %26, %cst_10 [1] : vector<2x4x64xf32> to vector<2x64xf32>
    %cst_11 = arith.constant 4.000000e+00 : f32
    %28 = vector.broadcast %cst_11 : f32 to vector<2x64xf32>
    %29 = arith.divf %27, %28 : vector<2x64xf32>
    %30 = arith.truncf %29 : vector<2x64xf32> to vector<2x64xbf16>
    %c0_12 = arith.constant 0 : index
    %c0_13 = arith.constant 0 : index
    %31 = vector.load %arg3[%c0_12, %c0_13] : memref<64x10xbf16, #tpu.memory_space<vmem>>, vector<64x10xbf16>
    %cst_14 = arith.constant dense<0.000000e+00> : vector<2x10xf32>
    %32 = tpu.matmul %30, %31, %cst_14 {dimension_numbers = #tpu.dot_dimension_numbers<[1], [0], [0], [1], [0, 0, 1, 1], [], []>} : vector<2x64xbf16>, vector<64x10xbf16>, vector<2x10xf32> -> vector<2x10xf32>
    %c0_15 = arith.constant 0 : index
    %c0_16 = arith.constant 0 : index
    %33 = vector.load %arg4[%c0_15, %c0_16] : memref<1x10xf32, #tpu.memory_space<vmem>>, vector<1x10xf32>
    %34 = vector.broadcast %33 : vector<1x10xf32> to vector<2x10xf32>
    %35 = arith.addf %32, %34 : vector<2x10xf32>
    %c0_17 = arith.constant 0 : index
    %c0_18 = arith.constant 0 : index
    %36 = vector.load %arg5[%c0_17, %c0_18] : memref<2x10xf32, #tpu.memory_space<vmem>>, vector<2x10xf32>
    tpu.vector_store %arg5[%c0_17, %c0_18], %35 {strides = array<i32>} : memref<2x10xf32, #tpu.memory_space<vmem>>, vector<2x10xf32>,
    return
  }
}

</mosaic_0001>

<llo_original>
// kernel: _lambda_.7
$region0: #{_lambda_.7}
  #allocation0 [shape = 'u32[]', space=smem, size = 0x4, offset = 0x4, fixed_abs, tag = 'smem constant byte address 0x4 - core index']
  #allocation1 [shape = 'u32[144,128]{1,0:T(1,128)}', space=vmem, size = 0x12000, scoped, tag = 'internal scratch']
  %s0 = inlined_call_operand.vmem [shape: f32[32,64], index: 0, kind: input, shape index: {}]
  %s1 = inlined_call_operand.vmem [shape: bf16[64,32], index: 1, kind: input, shape index: {}]
  %s2 = inlined_call_operand.vmem [shape: f32[1,32], index: 2, kind: input, shape index: {}, may-alias: {2,4}]
  %s3 = inlined_call_operand.vmem [shape: f32[1,32], index: 3, kind: input, shape index: {}]
  %s4 = inlined_call_operand.vmem [shape: f32[1,32], index: 4, kind: input, shape index: {}, may-alias: {2,4}]
  %s5 = inlined_call_operand.vmem [shape: f32[32,32], index: 5, kind: output, shape index: {}]
  %s6 = sld [smem:[#allocation0]]
  $region30: #{_lambda_.7} parent=0
    _
  %s8 = ssub.s32 1, %s6
  %s9 = scalar_select 0, %s8, %s6
  // Predicated region
  $region2: #{_lambda_.7} parent=0 // pred_check
    _
  $region3: #{_lambda_.7} parent=0 // pred_check_branch
    %11 = sbr.rel (0) target = $region5
  $region4: #{_lambda_.7} parent=0 // pred_region
    _
  $region5: #{_lambda_.7} parent=0 // pred_fallthru
    _
  // Predicated region
  $region6: #{_lambda_.7} parent=0 // pred_check
    _
  $region7: #{_lambda_.7} parent=0 // pred_check_branch
    %13 = sbr.rel (0) target = $region9
  $region8: #{_lambda_.7} parent=0 // pred_region
    _
  $region9: #{_lambda_.7} parent=0 // pred_fallthru
    _
  // Predicated region
  $region10: #{_lambda_.7} parent=0 // pred_check
    _
  $region11: #{_lambda_.7} parent=0 // pred_check_branch
    %15 = sbr.rel (0) target = $region13
  $region12: #{_lambda_.7} parent=0 // pred_region
    _
  $region13: #{_lambda_.7} parent=0 // pred_fallthru
    _
  // Predicated region
  $region14: #{_lambda_.7} parent=0 // pred_check
    _
  $region15: #{_lambda_.7} parent=0 // pred_check_branch
    %17 = sbr.rel (0) target = $region17
  $region16: #{_lambda_.7} parent=0 // pred_region
    _
  $region17: #{_lambda_.7} parent=0 // pred_fallthru
    _
  // Predicated region
  $region18: #{_lambda_.7} parent=0 // pred_check
    _
  $region19: #{_lambda_.7} parent=0 // pred_check_branch
    %19 = sbr.rel (0) target = $region21
  $region20: #{_lambda_.7} parent=0 // pred_region
    _
  $region21: #{_lambda_.7} parent=0 // pred_fallthru
    _
  %v21 = vld [vmem:[%s0] sm:$0xff]
  %v22 = vld [vmem:[%s0 + $0x8] sm:$0xff]
  %v23 = vld [vmem:[%s0 + $0x10] sm:$0xff]
  %v24 = vld [vmem:[%s0 + $0x18] sm:$0xff]
  %v25 = vpack.c.bf16 %v22, %v21
  %v26 = vpack.c.bf16 %v24, %v23
  %v27 = vld [vmem:[%s1] sm:$0xf]
  %v28 = vld [vmem:[%s1 + $0x4] sm:$0xf]
  %v29 = vld [vmem:[%s1 + $0x8] sm:$0xf]
  %v30 = vld [vmem:[%s1 + $0xc] sm:$0xf]
  %v31 = vld [vmem:[%s1 + $0x10] sm:$0xf]
  %v32 = vld [vmem:[%s1 + $0x14] sm:$0xf]
  %v33 = vld [vmem:[%s1 + $0x18] sm:$0xf]
  %v34 = vld [vmem:[%s1 + $0x1c] sm:$0xf]
  %v35 = vld [vmem:[%s2] sm:$0x1]
  %v37 = vlaneseq
  %v38 = vshrl.u32 %v37, 7
  %v39 = vsub.s32 0, %v38
  %v40 = vrot.slane %v35, %v39
  %v50 = vunpack.c.l.b16 %v27
  %v51 = vunpack.c.l.b16 %v28
  %v52 = vunpack.c.l.b16 %v29
  %v53 = vunpack.c.l.b16 %v30
  %v54 = vunpack.c.l.b16 %v31
  %v55 = vunpack.c.l.b16 %v32
  %v56 = vunpack.c.l.b16 %v33
  %v57 = vunpack.c.l.b16 %v34
  %v58 = vpack.c.b16 %v51, %v50
  %v59 = vpack.c.b16 %v53, %v52
  %v60 = vpack.c.b16 %v55, %v54
  %v61 = vpack.c.b16 %v57, %v56
  %vm66 = vcmask 523264
  %v68 = vsel %vm66, %v25, 0
  %v71 = vsel %vm66, %v26, 0
  %73 = vmatprep.subr.bf16.mxu0 0
  %74 = vmatpush1.bf16.msra.mxu0 %v58
  %75 = vmatprep.subr.bf16.mxu0 0
  %76 = vmatpush1.bf16.msra.mxu0 %v59
  %77 = vmatprep.subr.bf16.mxu0 0
  %78 = vmatpush1.bf16.msra.mxu0 %v60
  %79 = vmatprep.subr.bf16.mxu0 0
  %80 = vmatpush1.bf16.msra.mxu0 %v61
  %81 = vmatprep.subr.bf16.mxu0 0
  %82 = vmatpush1.bf16.msra.mxu0 0
  %83 = vmatprep.subr.bf16.mxu0 0
  %84 = vmatpush1.bf16.msra.mxu0 0
  %85 = vmatprep.subr.bf16.mxu0 0
  %86 = vmatpush1.bf16.msra.mxu0 0
  %87 = vmatprep.subr.bf16.mxu0 0
  %88 = vmatpush1.bf16.msra.mxu0 0
  %89 = vmatprep.subr.bf16.mxu0 0
  %90 = vmatpush1.bf16.msra.mxu0 0
  %91 = vmatprep.subr.bf16.mxu0 0
  %92 = vmatpush1.bf16.msra.mxu0 0
  %93 = vmatprep.subr.bf16.mxu0 0
  %94 = vmatpush1.bf16.msra.mxu0 0
  %95 = vmatprep.subr.bf16.mxu0 0
  %96 = vmatpush1.bf16.msra.mxu0 0
  %97 = vmatprep.subr.bf16.mxu0 0
  %98 = vmatpush1.bf16.msra.mxu0 0
  %99 = vmatprep.subr.bf16.mxu0 0
  %100 = vmatpush1.bf16.msra.mxu0 0
  %101 = vmatprep.subr.bf16.mxu0 0
  %102 = vmatpush1.bf16.msra.mxu0 0
  %103 = vmatprep.subr.bf16.mxu0 0
  %104 = vmatpush1.bf16.msra.mxu0 0
  %105 = vmatprep.mubr.bf16.mxu0 0
  %106 = vmatmul.mubr.bf16.gmra.mrb[0].mxu0 %v68
  %v107 = vpop.f32.mrb[0].mxu0
  %v108 = vadd.f32 %v40, %v107
  %v109 = vpop.f32.mrb[0].mxu0
  %v110 = vpop.f32.mrb[0].mxu0
  %v111 = vadd.f32 %v40, %v110
  %v112 = vpop.f32.mrb[0].mxu0
  %113 = vmatprep.mubr.bf16.mxu0 0
  %114 = vmatmul.mubr.bf16.gmra.mrb[0].mxu0 %v71
  %v115 = vpop.f32.mrb[0].mxu0
  %v116 = vadd.f32 %v40, %v115
  %v117 = vpop.f32.mrb[0].mxu0
  %v118 = vpop.f32.mrb[0].mxu0
  %v119 = vadd.f32 %v40, %v118
  %v120 = vpop.f32.mrb[0].mxu0
  %121 = vdwg.mxu0
  %v122 = vld [vmem:[%s3] sm:$0x1]
  %v123 = vld [vmem:[%s4] sm:$0x1]
  %vm124 = vcmask 261120
  %v125 = vsel %vm124, %v108, 0.0
  %126 = vadd.xlane.f32.xlu0 %v125
  %v127 = vpop.xlane.xlu0 %126
  %v128 = vsel %vm124, %v111, 0.0
  %129 = vadd.xlane.f32.xlu0 %v128
  %v130 = vpop.xlane.xlu0 %129
  %v131 = vsel %vm124, %v116, 0.0
  %132 = vadd.xlane.f32.xlu0 %v131
  %v133 = vpop.xlane.xlu0 %132
  %v134 = vsel %vm124, %v119, 0.0
  %135 = vadd.xlane.f32.xlu0 %v134
  %v136 = vpop.xlane.xlu0 %135
  %v137 = vrcp.pop 32.0
  %v138 = vmul.f32 %v127, %v137
  %v139 = vmul.f32 %v130, %v137
  %v140 = vmul.f32 %v133, %v137
  %v141 = vmul.f32 %v136, %v137
  %v142 = vsub.f32 %v108, %v138
  %v143 = vsub.f32 %v111, %v139
  %v144 = vsub.f32 %v116, %v140
  %v145 = vsub.f32 %v119, %v141
  %v146 = vmul.f32 %v142, %v142
  %v147 = vmul.f32 %v143, %v143
  %v148 = vmul.f32 %v144, %v144
  %v149 = vmul.f32 %v145, %v145
  %v150 = vsel %vm124, %v146, 0.0
  %151 = vadd.xlane.f32.xlu0 %v150
  %v152 = vpop.xlane.xlu0 %151
  %v153 = vsel %vm124, %v147, 0.0
  %154 = vadd.xlane.f32.xlu0 %v153
  %v155 = vpop.xlane.xlu0 %154
  %v156 = vsel %vm124, %v148, 0.0
  %157 = vadd.xlane.f32.xlu0 %v156
  %v158 = vpop.xlane.xlu0 %157
  %v159 = vsel %vm124, %v149, 0.0
  %160 = vadd.xlane.f32.xlu0 %v159
  %v161 = vpop.xlane.xlu0 %160
  %v162 = vmul.f32 %v152, %v137
  %v163 = vmul.f32 %v155, %v137
  %v164 = vmul.f32 %v158, %v137
  %v165 = vmul.f32 %v161, %v137
  %v166 = vadd.f32 %v162, 1e-05
  %v167 = vadd.f32 %v163, 1e-05
  %v168 = vadd.f32 %v164, 1e-05
  %v169 = vadd.f32 %v165, 1e-05
  %v170 = vrsqrt.pop %v166
  %v171 = vrsqrt.pop %v167
  %v172 = vrsqrt.pop %v168
  %v173 = vrsqrt.pop %v169
  %v174 = vmul.f32 %v142, %v170
  %v175 = vmul.f32 %v143, %v171
  %v176 = vmul.f32 %v144, %v172
  %v177 = vmul.f32 %v145, %v173
  %v179 = vlaneseq
  %v180 = vshrl.u32 %v179, 7
  %v181 = vsub.s32 0, %v180
  %v182 = vrot.slane %v122, %v181
  %v184 = vmul.f32 %v174, %v182
  %v185 = vmul.f32 %v175, %v182
  %v186 = vmul.f32 %v176, %v182
  %v187 = vmul.f32 %v177, %v182
  %v189 = vlaneseq
  %v190 = vshrl.u32 %v189, 7
  %v191 = vsub.s32 0, %v190
  %v192 = vrot.slane %v123, %v191
  %v194 = vadd.f32 %v184, %v192
  %v195 = vadd.f32 %v185, %v192
  %v196 = vadd.f32 %v186, %v192
  %v197 = vadd.f32 %v187, %v192
  %198 = vst.msk [vmem:[%s5] sm:$0xff] %vm124, %v194
  %199 = vst.msk [vmem:[%s5 + $0x8] sm:$0xff] %vm124, %v195
  %200 = vst.msk [vmem:[%s5 + $0x10] sm:$0xff] %vm124, %v196
  %201 = vst.msk [vmem:[%s5 + $0x18] sm:$0xff] %vm124, %v197
  // Predicated region
  $region22: #{_lambda_.7} parent=0 // pred_check
    _
  $region23: #{_lambda_.7} parent=0 // pred_check_branch
    %203 = sbr.rel (0) target = $region25
  $region24: #{_lambda_.7} parent=0 // pred_region
    _
  $region25: #{_lambda_.7} parent=0 // pred_fallthru
    _
  // Predicated region
  $region26: #{_lambda_.7} parent=0 // pred_check
    _
  $region27: #{_lambda_.7} parent=0 // pred_check_branch
    %205 = sbr.rel (0) target = $region29
  $region28: #{_lambda_.7} parent=0 // pred_region
    _
  $region29: #{_lambda_.7} parent=0 // pred_fallthru
    _

// kernel: _lambda_.8
$region0: #{_lambda_.8}
  #allocation0 [shape = 'u32[]', space=smem, size = 0x4, offset = 0x4, fixed_abs, tag = 'smem constant byte address 0x4 - core index']
  #allocation1 [shape = 'u32[144,128]{1,0:T(1,128)}', space=vmem, size = 0x12000, scoped, tag = 'internal scratch']
  %s0 = inlined_call_operand.vmem [shape: f32[2,16,32], index: 0, kind: input, shape index: {}]
  %s1 = inlined_call_operand.vmem [shape: bf16[32,96], index: 1, kind: input, shape index: {}]
  %s2 = inlined_call_operand.vmem [shape: f32[1,96], index: 2, kind: input, shape index: {}]
  %s3 = inlined_call_operand.vmem [shape: bf16[32,32], index: 3, kind: input, shape index: {}]
  %s4 = inlined_call_operand.vmem [shape: f32[1,32], index: 4, kind: input, shape index: {}, may-alias: {4,8,12,14}]
  %s5 = inlined_call_operand.vmem [shape: f32[2,16,16], index: 5, kind: input, shape index: {}]
  %s6 = inlined_call_operand.vmem [shape: f32[2,1,1], index: 6, kind: input, shape index: {}]
  %s7 = inlined_call_operand.vmem [shape: f32[1,32], index: 7, kind: input, shape index: {}, may-alias: {7,13}]
  %s8 = inlined_call_operand.vmem [shape: f32[1,32], index: 8, kind: input, shape index: {}, may-alias: {4,8,12,14}]
  %s9 = inlined_call_operand.vmem [shape: bf16[32,128], index: 9, kind: input, shape index: {}]
  %s10 = inlined_call_operand.vmem [shape: f32[1,128], index: 10, kind: input, shape index: {}]
  %s11 = inlined_call_operand.vmem [shape: bf16[128,32], index: 11, kind: input, shape index: {}]
  %s12 = inlined_call_operand.vmem [shape: f32[1,32], index: 12, kind: input, shape index: {}, may-alias: {4,8,12,14}]
  %s13 = inlined_call_operand.vmem [shape: f32[1,32], index: 13, kind: input, shape index: {}, may-alias: {7,13}]
  %s14 = inlined_call_operand.vmem [shape: f32[1,32], index: 14, kind: input, shape index: {}, may-alias: {4,8,12,14}]
  %s15 = inlined_call_operand.vmem [shape: f32[2,16,32], index: 15, kind: output, shape index: {}]
  %s16 = sld [smem:[#allocation0]]
  $region93: #{_lambda_.8} parent=0
    _
  %s18 = ssub.s32 1, %s16
  %s19 = scalar_select 0, %s18, %s16
  loop: start=0, step=1, limit=4
  $region2: #{_lambda_.8} parent=0 // loop_pre_header
    _
  $region3: #{_lambda_.8} parent=0 // loop_header
    %s21 = sphi 0, %s25
    %p22 = scmp.ge.s32.totalorder %s21, 4
    %s31 = sphi 0, %s33
    %s34 = sphi 0, %s31
    %s35 = sphi 0, %s34
    %s51 = sphi 0, %s35
    %s55 = sphi 0, %s55
    %s57 = sphi 0, %s55
    %s58 = sphi 0, %s57
    %s72 = sphi 0, %s58
    %s76 = sphi 0, %s76
    %s78 = sphi 0, %s76
    %s79 = sphi 0, %s78
    %s93 = sphi 0, %s79
    %s97 = sphi 0, %s97
    %s99 = sphi 0, %s97
    %s100 = sphi 0, %s99
    %s114 = sphi 0, %s100
    %s118 = sphi 0, %s118
    %s120 = sphi 0, %s118
    %s121 = sphi 0, %s120
    %s135 = sphi 0, %s121
    %s139 = sphi 0, %s139
    %s141 = sphi 0, %s139
    %s142 = sphi 0, %s141
    %s156 = sphi 0, %s142
    %s160 = sphi 0, %s160
    %s162 = sphi 0, %s160
    %s163 = sphi 0, %s162
    %s177 = sphi 0, %s163
    %s181 = sphi 0, %s181
    %s183 = sphi 0, %s181
    %s184 = sphi 0, %s183
    %s198 = sphi 0, %s184
    %s202 = sphi 0, %s202
    %s204 = sphi 0, %s202
    %s205 = sphi 0, %s204
    %s219 = sphi 0, %s205
    %s223 = sphi 0, %s223
    %s225 = sphi 0, %s223
    %s226 = sphi 0, %s225
    %s240 = sphi 0, %s226
    %s244 = sphi 0, %s244
    %s246 = sphi 0, %s244
    %s247 = sphi 0, %s246
    %s261 = sphi 0, %s247
    %s265 = sphi 0, %s265
    %s267 = sphi 0, %s265
    %s268 = sphi 0, %s267
    %s282 = sphi 0, %s268
    %s286 = sphi 0, %s286
    %s288 = sphi 0, %s286
    %s289 = sphi 0, %s288
    %s303 = sphi 0, %s289
    %s307 = sphi 0, %s307
    %s309 = sphi 0, %s307
    %s310 = sphi 0, %s309
    %s324 = sphi 0, %s310
    %s328 = sphi 0, %s328
    %s330 = sphi 0, %s328
    %s331 = sphi 0, %s330
    %s345 = sphi 0, %s331
    %s351 = sphi 0, %s353
    %s354 = sphi 0, %s351
    %s355 = sphi 0, %s354
    %s371 = sphi 0, %s355
  $region4: #{_lambda_.8} parent=0 // loop_header_branch
    %24 = sbr.rel (%p22) target = $region8
  $region5: #{_lambda_.8} parent=0 // loop_body
    %s26 = ssub.s32 %s21, 1
    %s27 = ssub.s32 %s21, 2
    %s28 = sadd.s32 %s21, 1
    %s29 = ssub.s32 %s21, %s28
    %p30 = scmp.eq.s32.totalorder %s29, 0
    %s32 = sadd.s32 %s31, 1
    %s33 = scalar_select %p30, %s31, %s32
    %p36 = pneg %p30
    %p37 = scmp.eq.s32.totalorder %s21, 1
    %p38 = por %p36, %p37
    %p39 = scmp.ne.s32.totalorder %s31, %s34
    %p40 = scmp.eq.s32.totalorder %s21, 0
    %p41 = por %p39, %p40
    %p42 = scmp.ne.s32.totalorder %s31, %s34
    %p43 = scmp.eq.s32.totalorder %s26, 1
    %p44 = por %p42, %p43
    %p45 = scmp.ne.s32.totalorder %s34, %s35
    %p46 = scmp.eq.s32.totalorder %s26, 0
    %p47 = por %p45, %p46
    %p48 = scmp.ne.s32.totalorder %s34, %s35
    %p49 = scmp.eq.s32.totalorder %s27, 1
    %p50 = por %p48, %p49
    %p52 = scmp.ne.s32.totalorder %s35, %s51
    %p53 = scmp.eq.s32.totalorder %s27, 0
    %p54 = por %p52, %p53
    %s56 = sadd.s32 %s55, 1
    %p59 = scmp.eq.s32.totalorder %s21, 1
    %p60 = scmp.ne.s32.totalorder %s55, %s57
    %p61 = scmp.eq.s32.totalorder %s21, 0
    %p62 = por %p60, %p61
    %p63 = scmp.ne.s32.totalorder %s55, %s57
    %p64 = scmp.eq.s32.totalorder %s26, 1
    %p65 = por %p63, %p64
    %p66 = scmp.ne.s32.totalorder %s57, %s58
    %p67 = scmp.eq.s32.totalorder %s26, 0
    %p68 = por %p66, %p67
    %p69 = scmp.ne.s32.totalorder %s57, %s58
    %p70 = scmp.eq.s32.totalorder %s27, 1
    %p71 = por %p69, %p70
    %p73 = scmp.ne.s32.totalorder %s58, %s72
    %p74 = scmp.eq.s32.totalorder %s27, 0
    %p75 = por %p73, %p74
    %s77 = sadd.s32 %s76, 1
    %p80 = scmp.eq.s32.totalorder %s21, 1
    %p81 = scmp.ne.s32.totalorder %s76, %s78
    %p82 = scmp.eq.s32.totalorder %s21, 0
    %p83 = por %p81, %p82
    %p84 = scmp.ne.s32.totalorder %s76, %s78
    %p85 = scmp.eq.s32.totalorder %s26, 1
    %p86 = por %p84, %p85
    %p87 = scmp.ne.s32.totalorder %s78, %s79
    %p88 = scmp.eq.s32.totalorder %s26, 0
    %p89 = por %p87, %p88
    %p90 = scmp.ne.s32.totalorder %s78, %s79
    %p91 = scmp.eq.s32.totalorder %s27, 1
    %p92 = por %p90, %p91
    %p94 = scmp.ne.s32.totalorder %s79, %s93
    %p95 = scmp.eq.s32.totalorder %s27, 0
    %p96 = por %p94, %p95
    %s98 = sadd.s32 %s97, 1
    %p101 = scmp.eq.s32.totalorder %s21, 1
    %p102 = scmp.ne.s32.totalorder %s97, %s99
    %p103 = scmp.eq.s32.totalorder %s21, 0
    %p104 = por %p102, %p103
    %p105 = scmp.ne.s32.totalorder %s97, %s99
    %p106 = scmp.eq.s32.totalorder %s26, 1
    %p107 = por %p105, %p106
    %p108 = scmp.ne.s32.totalorder %s99, %s100
    %p109 = scmp.eq.s32.totalorder %s26, 0
    %p110 = por %p108, %p109
    %p111 = scmp.ne.s32.totalorder %s99, %s100
    %p112 = scmp.eq.s32.totalorder %s27, 1
    %p113 = por %p111, %p112
    %p115 = scmp.ne.s32.totalorder %s100, %s114
    %p116 = scmp.eq.s32.totalorder %s27, 0
    %p117 = por %p115, %p116
    %s119 = sadd.s32 %s118, 1
    %p122 = scmp.eq.s32.totalorder %s21, 1
    %p123 = scmp.ne.s32.totalorder %s118, %s120
    %p124 = scmp.eq.s32.totalorder %s21, 0
    %p125 = por %p123, %p124
    %p126 = scmp.ne.s32.totalorder %s118, %s120
    %p127 = scmp.eq.s32.totalorder %s26, 1
    %p128 = por %p126, %p127
    %p129 = scmp.ne.s32.totalorder %s120, %s121
    %p130 = scmp.eq.s32.totalorder %s26, 0
    %p131 = por %p129, %p130
    %p132 = scmp.ne.s32.totalorder %s120, %s121
    %p133 = scmp.eq.s32.totalorder %s27, 1
    %p134 = por %p132, %p133
    %p136 = scmp.ne.s32.totalorder %s121, %s135
    %p137 = scmp.eq.s32.totalorder %s27, 0
    %p138 = por %p136, %p137
    %s140 = sadd.s32 %s139, 1
    %p143 = scmp.eq.s32.totalorder %s21, 1
    %p144 = scmp.ne.s32.totalorder %s139, %s141
    %p145 = scmp.eq.s32.totalorder %s21, 0
    %p146 = por %p144, %p145
    %p147 = scmp.ne.s32.totalorder %s139, %s141
    %p148 = scmp.eq.s32.totalorder %s26, 1
    %p149 = por %p147, %p148
    %p150 = scmp.ne.s32.totalorder %s141, %s142
    %p151 = scmp.eq.s32.totalorder %s26, 0
    %p152 = por %p150, %p151
    %p153 = scmp.ne.s32.totalorder %s141, %s142
    %p154 = scmp.eq.s32.totalorder %s27, 1
    %p155 = por %p153, %p154
    %p157 = scmp.ne.s32.totalorder %s142, %s156
    %p158 = scmp.eq.s32.totalorder %s27, 0
    %p159 = por %p157, %p158
    %s161 = sadd.s32 %s160, 1
    %p164 = scmp.eq.s32.totalorder %s21, 1
    %p165 = scmp.ne.s32.totalorder %s160, %s162
    %p166 = scmp.eq.s32.totalorder %s21, 0
    %p167 = por %p165, %p166
    %p168 = scmp.ne.s32.totalorder %s160, %s162
    %p169 = scmp.eq.s32.totalorder %s26, 1
    %p170 = por %p168, %p169
    %p171 = scmp.ne.s32.totalorder %s162, %s163
    %p172 = scmp.eq.s32.totalorder %s26, 0
    %p173 = por %p171, %p172
    %p174 = scmp.ne.s32.totalorder %s162, %s163
    %p175 = scmp.eq.s32.totalorder %s27, 1
    %p176 = por %p174, %p175
    %p178 = scmp.ne.s32.totalorder %s163, %s177
    %p179 = scmp.eq.s32.totalorder %s27, 0
    %p180 = por %p178, %p179
    %s182 = sadd.s32 %s181, 1
    %p185 = scmp.eq.s32.totalorder %s21, 1
    %p186 = scmp.ne.s32.totalorder %s181, %s183
    %p187 = scmp.eq.s32.totalorder %s21, 0
    %p188 = por %p186, %p187
    %p189 = scmp.ne.s32.totalorder %s181, %s183
    %p190 = scmp.eq.s32.totalorder %s26, 1
    %p191 = por %p189, %p190
    %p192 = scmp.ne.s32.totalorder %s183, %s184
    %p193 = scmp.eq.s32.totalorder %s26, 0
    %p194 = por %p192, %p193
    %p195 = scmp.ne.s32.totalorder %s183, %s184
    %p196 = scmp.eq.s32.totalorder %s27, 1
    %p197 = por %p195, %p196
    %p199 = scmp.ne.s32.totalorder %s184, %s198
    %p200 = scmp.eq.s32.totalorder %s27, 0
    %p201 = por %p199, %p200
    %s203 = sadd.s32 %s202, 1
    %p206 = scmp.eq.s32.totalorder %s21, 1
    %p207 = scmp.ne.s32.totalorder %s202, %s204
    %p208 = scmp.eq.s32.totalorder %s21, 0
    %p209 = por %p207, %p208
    %p210 = scmp.ne.s32.totalorder %s202, %s204
    %p211 = scmp.eq.s32.totalorder %s26, 1
    %p212 = por %p210, %p211
    %p213 = scmp.ne.s32.totalorder %s204, %s205
    %p214 = scmp.eq.s32.totalorder %s26, 0
    %p215 = por %p213, %p214
    %p216 = scmp.ne.s32.totalorder %s204, %s205
    %p217 = scmp.eq.s32.totalorder %s27, 1
    %p218 = por %p216, %p217
    %p220 = scmp.ne.s32.totalorder %s205, %s219
    %p221 = scmp.eq.s32.totalorder %s27, 0
    %p222 = por %p220, %p221
    %s224 = sadd.s32 %s223, 1
    %p227 = scmp.eq.s32.totalorder %s21, 1
    %p228 = scmp.ne.s32.totalorder %s223, %s225
    %p229 = scmp.eq.s32.totalorder %s21, 0
    %p230 = por %p228, %p229
    %p231 = scmp.ne.s32.totalorder %s223, %s225
    %p232 = scmp.eq.s32.totalorder %s26, 1
    %p233 = por %p231, %p232
    %p234 = scmp.ne.s32.totalorder %s225, %s226
    %p235 = scmp.eq.s32.totalorder %s26, 0
    %p236 = por %p234, %p235
    %p237 = scmp.ne.s32.totalorder %s225, %s226
    %p238 = scmp.eq.s32.totalorder %s27, 1
    %p239 = por %p237, %p238
    %p241 = scmp.ne.s32.totalorder %s226, %s240
    %p242 = scmp.eq.s32.totalorder %s27, 0
    %p243 = por %p241, %p242
    %s245 = sadd.s32 %s244, 1
    %p248 = scmp.eq.s32.totalorder %s21, 1
    %p249 = scmp.ne.s32.totalorder %s244, %s246
    %p250 = scmp.eq.s32.totalorder %s21, 0
    %p251 = por %p249, %p250
    %p252 = scmp.ne.s32.totalorder %s244, %s246
    %p253 = scmp.eq.s32.totalorder %s26, 1
    %p254 = por %p252, %p253
    %p255 = scmp.ne.s32.totalorder %s246, %s247
    %p256 = scmp.eq.s32.totalorder %s26, 0
    %p257 = por %p255, %p256
    %p258 = scmp.ne.s32.totalorder %s246, %s247
    %p259 = scmp.eq.s32.totalorder %s27, 1
    %p260 = por %p258, %p259
    %p262 = scmp.ne.s32.totalorder %s247, %s261
    %p263 = scmp.eq.s32.totalorder %s27, 0
    %p264 = por %p262, %p263
    %s266 = sadd.s32 %s265, 1
    %p269 = scmp.eq.s32.totalorder %s21, 1
    %p270 = scmp.ne.s32.totalorder %s265, %s267
    %p271 = scmp.eq.s32.totalorder %s21, 0
    %p272 = por %p270, %p271
    %p273 = scmp.ne.s32.totalorder %s265, %s267
    %p274 = scmp.eq.s32.totalorder %s26, 1
    %p275 = por %p273, %p274
    %p276 = scmp.ne.s32.totalorder %s267, %s268
    %p277 = scmp.eq.s32.totalorder %s26, 0
    %p278 = por %p276, %p277
    %p279 = scmp.ne.s32.totalorder %s267, %s268
    %p280 = scmp.eq.s32.totalorder %s27, 1
    %p281 = por %p279, %p280
    %p283 = scmp.ne.s32.totalorder %s268, %s282
    %p284 = scmp.eq.s32.totalorder %s27, 0
    %p285 = por %p283, %p284
    %s287 = sadd.s32 %s286, 1
    %p290 = scmp.eq.s32.totalorder %s21, 1
    %p291 = scmp.ne.s32.totalorder %s286, %s288
    %p292 = scmp.eq.s32.totalorder %s21, 0
    %p293 = por %p291, %p292
    %p294 = scmp.ne.s32.totalorder %s286, %s288
    %p295 = scmp.eq.s32.totalorder %s26, 1
    %p296 = por %p294, %p295
    %p297 = scmp.ne.s32.totalorder %s288, %s289
    %p298 = scmp.eq.s32.totalorder %s26, 0
    %p299 = por %p297, %p298
    %p300 = scmp.ne.s32.totalorder %s288, %s289
    %p301 = scmp.eq.s32.totalorder %s27, 1
    %p302 = por %p300, %p301
    %p304 = scmp.ne.s32.totalorder %s289, %s303
    %p305 = scmp.eq.s32.totalorder %s27, 0
    %p306 = por %p304, %p305
    %s308 = sadd.s32 %s307, 1
    %p311 = scmp.eq.s32.totalorder %s21, 1
    %p312 = scmp.ne.s32.totalorder %s307, %s309
    %p313 = scmp.eq.s32.totalorder %s21, 0
    %p314 = por %p312, %p313
    %p315 = scmp.ne.s32.totalorder %s307, %s309
    %p316 = scmp.eq.s32.totalorder %s26, 1
    %p317 = por %p315, %p316
    %p318 = scmp.ne.s32.totalorder %s309, %s310
    %p319 = scmp.eq.s32.totalorder %s26, 0
    %p320 = por %p318, %p319
    %p321 = scmp.ne.s32.totalorder %s309, %s310
    %p322 = scmp.eq.s32.totalorder %s27, 1
    %p323 = por %p321, %p322
    %p325 = scmp.ne.s32.totalorder %s310, %s324
    %p326 = scmp.eq.s32.totalorder %s27, 0
    %p327 = por %p325, %p326
    %s329 = sadd.s32 %s328, 1
    %p332 = scmp.eq.s32.totalorder %s21, 1
    %p333 = scmp.ne.s32.totalorder %s328, %s330
    %p334 = scmp.eq.s32.totalorder %s21, 0
    %p335 = por %p333, %p334
    %p336 = scmp.ne.s32.totalorder %s328, %s330
    %p337 = scmp.eq.s32.totalorder %s26, 1
    %p338 = por %p336, %p337
    %p339 = scmp.ne.s32.totalorder %s330, %s331
    %p340 = scmp.eq.s32.totalorder %s26, 0
    %p341 = por %p339, %p340
    %p342 = scmp.ne.s32.totalorder %s330, %s331
    %p343 = scmp.eq.s32.totalorder %s27, 1
    %p344 = por %p342, %p343
    %p346 = scmp.ne.s32.totalorder %s331, %s345
    %p347 = scmp.eq.s32.totalorder %s27, 0
    %p348 = por %p346, %p347
    %s349 = ssub.s32 %s21, %s28
    %p350 = scmp.eq.s32.totalorder %s349, 0
    %s352 = sadd.s32 %s351, 1
    %s353 = scalar_select %p350, %s351, %s352
    %p356 = pneg %p350
    %p357 = scmp.eq.s32.totalorder %s21, 1
    %p358 = por %p356, %p357
    %p359 = scmp.ne.s32.totalorder %s351, %s354
    %p360 = scmp.eq.s32.totalorder %s21, 0
    %p361 = por %p359, %p360
    %p362 = scmp.ne.s32.totalorder %s351, %s354
    %p363 = scmp.eq.s32.totalorder %s26, 1
    %p364 = por %p362, %p363
    %p365 = scmp.ne.s32.totalorder %s354, %s355
    %p366 = scmp.eq.s32.totalorder %s26, 0
    %p367 = por %p365, %p366
    %p368 = scmp.ne.s32.totalorder %s354, %s355
    %p369 = scmp.eq.s32.totalorder %s27, 1
    %p370 = por %p368, %p369
    %p372 = scmp.ne.s32.totalorder %s355, %s371
    %p373 = scmp.eq.s32.totalorder %s27, 0
    %p374 = por %p372, %p373
    %p375 = scmp.le.s32.totalorder 1, %s21
    %p376 = scmp.lt.s32.totalorder %s21, 3
    %p377 = pnand %p375, %p376
    %p378 = pneg %p377
    // Predicated region
    $region9: #{_lambda_.8} parent=5 // pred_check
      _
    $region10: #{_lambda_.8} parent=5 // pred_check_branch
      %380 = sbr.rel (%p377) target = $region12
    $region11: #{_lambda_.8} parent=5 // pred_region
      %s381 = ssub.s32 %s21, 1
      // Predicated region
      $region13: #{_lambda_.8} parent=11 // pred_check
        %p382 = pneg %p68
      $region14: #{_lambda_.8} parent=11 // pred_check_branch
        %384 = sbr.rel (%p382) target = $region16
      $region15: #{_lambda_.8} parent=11 // pred_region
        _
      $region16: #{_lambda_.8} parent=11 // pred_fallthru
        _
      // Predicated region
      $region17: #{_lambda_.8} parent=11 // pred_check
        %p385 = pneg %p89
      $region18: #{_lambda_.8} parent=11 // pred_check_branch
        %387 = sbr.rel (%p385) target = $region20
      $region19: #{_lambda_.8} parent=11 // pred_region
        _
      $region20: #{_lambda_.8} parent=11 // pred_fallthru
        _
      // Predicated region
      $region21: #{_lambda_.8} parent=11 // pred_check
        %p388 = pneg %p110
      $region22: #{_lambda_.8} parent=11 // pred_check_branch
        %390 = sbr.rel (%p388) target = $region24
      $region23: #{_lambda_.8} parent=11 // pred_region
        _
      $region24: #{_lambda_.8} parent=11 // pred_fallthru
        _
      // Predicated region
      $region25: #{_lambda_.8} parent=11 // pred_check
        %p391 = pneg %p131
      $region26: #{_lambda_.8} parent=11 // pred_check_branch
        %393 = sbr.rel (%p391) target = $region28
      $region27: #{_lambda_.8} parent=11 // pred_region
        _
      $region28: #{_lambda_.8} parent=11 // pred_fallthru
        _
      // Predicated region
      $region29: #{_lambda_.8} parent=11 // pred_check
        %p394 = pneg %p152
      $region30: #{_lambda_.8} parent=11 // pred_check_branch
        %396 = sbr.rel (%p394) target = $region32
      $region31: #{_lambda_.8} parent=11 // pred_region
        _
      $region32: #{_lambda_.8} parent=11 // pred_fallthru
        _
      // Predicated region
      $region33: #{_lambda_.8} parent=11 // pred_check
        %p397 = pneg %p173
      $region34: #{_lambda_.8} parent=11 // pred_check_branch
        %399 = sbr.rel (%p397) target = $region36
      $region35: #{_lambda_.8} parent=11 // pred_region
        _
      $region36: #{_lambda_.8} parent=11 // pred_fallthru
        _
      // Predicated region
      $region37: #{_lambda_.8} parent=11 // pred_check
        %p400 = pneg %p194
      $region38: #{_lambda_.8} parent=11 // pred_check_branch
        %402 = sbr.rel (%p400) target = $region40
      $region39: #{_lambda_.8} parent=11 // pred_region
        _
      $region40: #{_lambda_.8} parent=11 // pred_fallthru
        _
      // Predicated region
      $region41: #{_lambda_.8} parent=11 // pred_check
        %p403 = pneg %p215
      $region42: #{_lambda_.8} parent=11 // pred_check_branch
        %405 = sbr.rel (%p403) target = $region44
      $region43: #{_lambda_.8} parent=11 // pred_region
        _
      $region44: #{_lambda_.8} parent=11 // pred_fallthru
        _
      // Predicated region
      $region45: #{_lambda_.8} parent=11 // pred_check
        %p406 = pneg %p236
      $region46: #{_lambda_.8} parent=11 // pred_check_branch
        %408 = sbr.rel (%p406) target = $region48
      $region47: #{_lambda_.8} parent=11 // pred_region
        _
      $region48: #{_lambda_.8} parent=11 // pred_fallthru
        _
      // Predicated region
      $region49: #{_lambda_.8} parent=11 // pred_check
        %p409 = pneg %p257
      $region50: #{_lambda_.8} parent=11 // pred_check_branch
        %411 = sbr.rel (%p409) target = $region52
      $region51: #{_lambda_.8} parent=11 // pred_region
        _
      $region52: #{_lambda_.8} parent=11 // pred_fallthru
        _
      // Predicated region
      $region53: #{_lambda_.8} parent=11 // pred_check
        %p412 = pneg %p278
      $region54: #{_lambda_.8} parent=11 // pred_check_branch
        %414 = sbr.rel (%p412) target = $region56
      $region55: #{_lambda_.8} parent=11 // pred_region
        _
      $region56: #{_lambda_.8} parent=11 // pred_fallthru
        _
      // Predicated region
      $region57: #{_lambda_.8} parent=11 // pred_check
        %p415 = pneg %p299
      $region58: #{_lambda_.8} parent=11 // pred_check_branch
        %417 = sbr.rel (%p415) target = $region60
      $region59: #{_lambda_.8} parent=11 // pred_region
        _
      $region60: #{_lambda_.8} parent=11 // pred_fallthru
        _
      // Predicated region
      $region61: #{_lambda_.8} parent=11 // pred_check
        %p418 = pneg %p320
      $region62: #{_lambda_.8} parent=11 // pred_check_branch
        %420 = sbr.rel (%p418) target = $region64
      $region63: #{_lambda_.8} parent=11 // pred_region
        _
      $region64: #{_lambda_.8} parent=11 // pred_fallthru
        _
      // Predicated region
      $region65: #{_lambda_.8} parent=11 // pred_check
        %p421 = pneg %p341
      $region66: #{_lambda_.8} parent=11 // pred_check_branch
        %423 = sbr.rel (%p421) target = $region68
      $region67: #{_lambda_.8} parent=11 // pred_region
        _
      $region68: #{_lambda_.8} parent=11 // pred_fallthru
        _
    $region12: #{_lambda_.8} parent=5 // pred_fallthru
      _
    %p424 = scmp.lt.s32.totalorder %s21, 2
    // Predicated region
    $region69: #{_lambda_.8} parent=5 // pred_check
      %p425 = pneg %p424
    $region70: #{_lambda_.8} parent=5 // pred_check_branch
      %427 = sbr.rel (%p425) target = $region72
    $region71: #{_lambda_.8} parent=5 // pred_region
      // Predicated region
      $region73: #{_lambda_.8} parent=71 // pred_check
        %p428 = pneg %p41
      $region74: #{_lambda_.8} parent=71 // pred_check_branch
        %430 = sbr.rel (%p428) target = $region76
      $region75: #{_lambda_.8} parent=71 // pred_region
        %p431 = scmp.lt.s32.totalorder %s21, 1
        %s432 = scalar_select %p431, %s21, 1
        %s433 = smul.addr %s432, 2
        %s434 = smul.addr %s433, 8
        %s435 = scalar_lea.vmem %s0, %s434
      $region76: #{_lambda_.8} parent=71 // pred_fallthru
        _
    $region72: #{_lambda_.8} parent=5 // pred_fallthru
      _
    %p436 = scmp.le.s32.totalorder 1, %s21
    %p437 = scmp.lt.s32.totalorder %s21, 3
    %p438 = pnand %p436, %p437
    %p439 = pneg %p438
    // Predicated region
    $region77: #{_lambda_.8} parent=5 // pred_check
      _
    $region78: #{_lambda_.8} parent=5 // pred_check_branch
      %441 = sbr.rel (%p438) target = $region80
    $region79: #{_lambda_.8} parent=5 // pred_region
      %s442 = ssub.s32 %s21, 1
      %p443 = scmp.lt.s32.totalorder %s26, 1
      %s444 = scalar_select %p443, %s26, 1
      %s445 = smul.addr %s444, 2
      %s446 = smul.addr %s445, 8
      %s447 = scalar_lea.vmem %s0, %s446
      %p448 = pneg %p47
      %p449 = pneg %p44
      %p450 = pneg %p68
      %p451 = pneg %p65
      %p452 = pneg %p89
      %p453 = pneg %p86
      %p454 = pneg %p110
      %p455 = pneg %p107
      %p456 = pneg %p131
      %p457 = pneg %p128
      %p458 = pneg %p152
      %p459 = pneg %p149
      %p460 = pneg %p173
      %p461 = pneg %p170
      %p462 = pneg %p194
      %p463 = pneg %p191
      %p464 = pneg %p215
      %p465 = pneg %p212
      %p466 = pneg %p236
      %p467 = pneg %p233
      %p468 = pneg %p257
      %p469 = pneg %p254
      %p470 = pneg %p278
      %p471 = pneg %p275
      %p472 = pneg %p299
      %p473 = pneg %p296
      %p474 = pneg %p320
      %p475 = pneg %p317
      %p476 = pneg %p341
      %p477 = pneg %p338
      %p478 = pneg %p367
      %p479 = pneg %p364
      %p480 = scmp.lt.s32.totalorder %s26, 1
      %s481 = scalar_select %p480, %s26, 1
      %s482 = smul.addr %s481, 2
      %s483 = smul.addr %s482, 8
      %s484 = scalar_lea.vmem %s15, %s483
      %p485 = scmp.lt.s32.totalorder %s26, 1
      %s486 = scalar_select %p485, %s26, 1
      %s487 = smul.addr %s486, 2
      %s488 = smul.addr %s487, 8
      %s489 = scalar_lea.vmem %s0, %s488
      %p490 = scmp.lt.s32.totalorder %s26, 1
      %s491 = scalar_select %p490, %s26, 1
      %s492 = smul.addr %s491, 2
      %s493 = smul.addr %s492, 8
      %s494 = scalar_lea.vmem %s15, %s493
      %v496 = vld [vmem:[%s489] sm:$0xff]
      %v497 = vld [vmem:[%s489 + $0x8] sm:$0xff]
      %v498 = vpack.c.bf16 %v497, %v496
      %v499 = vld [vmem:[%s1] sm:$0xf]
      %v500 = vld [vmem:[%s1 + $0x4] sm:$0xf]
      %v501 = vld [vmem:[%s1 + $0x8] sm:$0xf]
      %v502 = vld [vmem:[%s1 + $0xc] sm:$0xf]
      %v503 = vld [vmem:[%s2] sm:$0x1]
      %v505 = vlaneseq
      %v506 = vshrl.u32 %v505, 7
      %v507 = vsub.s32 0, %v506
      %v508 = vrot.slane %v503, %v507
      %v514 = vunpack.c.l.b16 %v499
      %v515 = vunpack.c.l.b16 %v500
      %v516 = vunpack.c.l.b16 %v501
      %v517 = vunpack.c.l.b16 %v502
      %v518 = vpack.c.b16 %v515, %v514
      %v519 = vpack.c.b16 %v517, %v516
      %vm522 = vcmask 261120
      %v524 = vsel %vm522, %v498, 0
      %526 = vmatprep.subr.bf16.mxu0 0
      %527 = vmatpush1.bf16.msra.mxu0 %v518
      %528 = vmatprep.subr.bf16.mxu0 0
      %529 = vmatpush1.bf16.msra.mxu0 %v519
      %530 = vmatprep.subr.bf16.mxu0 0
      %531 = vmatpush1.bf16.msra.mxu0 0
      %532 = vmatprep.subr.bf16.mxu0 0
      %533 = vmatpush1.bf16.msra.mxu0 0
      %534 = vmatprep.subr.bf16.mxu0 0
      %535 = vmatpush1.bf16.msra.mxu0 0
      %536 = vmatprep.subr.bf16.mxu0 0
      %537 = vmatpush1.bf16.msra.mxu0 0
      %538 = vmatprep.subr.bf16.mxu0 0
      %539 = vmatpush1.bf16.msra.mxu0 0
      %540 = vmatprep.subr.bf16.mxu0 0
      %541 = vmatpush1.bf16.msra.mxu0 0
      %542 = vmatprep.subr.bf16.mxu0 0
      %543 = vmatpush1.bf16.msra.mxu0 0
      %544 = vmatprep.subr.bf16.mxu0 0
      %545 = vmatpush1.bf16.msra.mxu0 0
      %546 = vmatprep.subr.bf16.mxu0 0
      %547 = vmatpush1.bf16.msra.mxu0 0
      %548 = vmatprep.subr.bf16.mxu0 0
      %549 = vmatpush1.bf16.msra.mxu0 0
      %550 = vmatprep.subr.bf16.mxu0 0
      %551 = vmatpush1.bf16.msra.mxu0 0
      %552 = vmatprep.subr.bf16.mxu0 0
      %553 = vmatpush1.bf16.msra.mxu0 0
      %554 = vmatprep.subr.bf16.mxu0 0
      %555 = vmatpush1.bf16.msra.mxu0 0
      %556 = vmatprep.subr.bf16.mxu0 0
      %557 = vmatpush1.bf16.msra.mxu0 0
      %558 = vmatprep.mubr.bf16.mxu0 0
      %559 = vmatmul.mubr.bf16.gmra.mrb[0].mxu0 %v524
      %v560 = vpop.f32.mrb[0].mxu0
      %v561 = vadd.f32 %v508, %v560
      %v562 = vpop.f32.mrb[0].mxu0
      %v563 = vpop.f32.mrb[0].mxu0
      %v564 = vadd.f32 %v508, %v563
      %v565 = vpop.f32.mrb[0].mxu0
      %566 = vdwg.mxu0
      %v567 = vmul.f32 %v561, %v561
      %v568 = vmul.f32 %v564, %v564
      %vm569 = vcmask 130048
      %v570 = vsel %vm569, %v567, 0.0
      %571 = vadd.xlane.f32.xlu0 %v570
      %v572 = vpop.xlane.xlu0 %571
      %v573 = vsel %vm569, %v568, 0.0
      %574 = vadd.xlane.f32.xlu0 %v573
      %v575 = vpop.xlane.xlu0 %574
      %v576 = vmax.f32 %v572, 1e-24
      %v577 = vmax.f32 %v575, 1e-24
      %v578 = vrsqrt.pop %v576
      %v579 = vrsqrt.pop %v577
      %v580 = vmul.f32 %v561, %v578
      %v581 = vmul.f32 %v564, %v579
      %584 = vrot.lane.b32.xlu0 %v567, 96
      %v585 = vpop.permute.xlu0 %584
      %586 = vrot.lane.b32.xlu0 %v568, 96
      %v587 = vpop.permute.xlu0 %586
      %v590 = vsel %vm569, %v585, 0.0
      %591 = vadd.xlane.f32.xlu0 %v590
      %v592 = vpop.xlane.xlu0 %591
      %v593 = vsel %vm569, %v587, 0.0
      %594 = vadd.xlane.f32.xlu0 %v593
      %v595 = vpop.xlane.xlu0 %594
      %v596 = vmax.f32 %v592, 1e-24
      %v597 = vmax.f32 %v595, 1e-24
      %v598 = vrsqrt.pop %v596
      %v599 = vrsqrt.pop %v597
      %v600 = vmul.f32 %v561, %v598
      %v601 = vmul.f32 %v564, %v599
      %v602 = vpack.c.bf16 %v581, %v580
      %v603 = vpack.c.bf16 %v601, %v600
      %605 = vrot.lane.b32.xlu0 %v603, 96
      %v606 = vpop.permute.xlu0 %605
      %v608 = vsel %vm569, %v602, 0
      %v611 = vsel %vm569, %v606, 0
      %613 = vmatprep.subr.bf16.mxu0 0
      %614 = vmatpush1.bf16.xpose.msra.mxu0 %v611
      %615 = vmatprep.subr.bf16.mxu0 0
      %616 = vmatpush1.bf16.xpose.msra.mxu0 0
      %617 = vmatprep.subr.bf16.mxu0 0
      %618 = vmatpush1.bf16.xpose.msra.mxu0 0
      %619 = vmatprep.subr.bf16.mxu0 0
      %620 = vmatpush1.bf16.xpose.msra.mxu0 0
      %621 = vmatprep.subr.bf16.mxu0 0
      %622 = vmatpush1.bf16.xpose.msra.mxu0 0
      %623 = vmatprep.subr.bf16.mxu0 0
      %624 = vmatpush1.bf16.xpose.msra.mxu0 0
      %625 = vmatprep.subr.bf16.mxu0 0
      %626 = vmatpush1.bf16.xpose.msra.mxu0 0
      %627 = vmatprep.subr.bf16.mxu0 0
      %628 = vmatpush1.bf16.xpose.msra.mxu0 0
      %629 = vmatprep.subr.bf16.mxu0 0
      %630 = vmatpush1.bf16.xpose.msra.mxu0 0
      %631 = vmatprep.subr.bf16.mxu0 0
      %632 = vmatpush1.bf16.xpose.msra.mxu0 0
      %633 = vmatprep.subr.bf16.mxu0 0
      %634 = vmatpush1.bf16.xpose.msra.mxu0 0
      %635 = vmatprep.subr.bf16.mxu0 0
      %636 = vmatpush1.bf16.xpose.msra.mxu0 0
      %637 = vmatprep.subr.bf16.mxu0 0
      %638 = vmatpush1.bf16.xpose.msra.mxu0 0
      %639 = vmatprep.subr.bf16.mxu0 0
      %640 = vmatpush1.bf16.xpose.msra.mxu0 0
      %641 = vmatprep.subr.bf16.mxu0 0
      %642 = vmatpush1.bf16.xpose.msra.mxu0 0
      %643 = vmatprep.subr.bf16.mxu0 0
      %644 = vmatpush1.bf16.xpose.msra.mxu0 0
      %645 = vmatprep.mubr.bf16.mxu0 0
      %646 = vmatmul.mubr.bf16.gmra.mrb[0].mxu0 %v608
      %v647 = vpop.f32.mrb[0].mxu0
      %v648 = vadd.f32 0.0, %v647
      %v649 = vpop.f32.mrb[0].mxu0
      %v650 = vpop.f32.mrb[0].mxu0
      %v651 = vadd.f32 0.0, %v650
      %v652 = vpop.f32.mrb[0].mxu0
      %653 = vdwg.mxu0
      %v654 = vld [vmem:[%s6] sm:$0x1]
      %v656 = vlaneseq
      %v657 = vshrl.u32 %v656, 7
      %v658 = vsub.s32 0, %v657
      %v659 = vrot.slane %v654, %v658
      %660 = vset.pattern.permute.xlu0 0
      %661 = vperm.xlu0 %660, %v659
      %v662 = vpop.permute.xlu0 %661
      %v664 = vmul.f32 %v648, %v662
      %v665 = vmul.f32 %v651, %v662
      %v666 = vld [vmem:[%s5] sm:$0xff]
      %v667 = vld [vmem:[%s5 + $0x8] sm:$0xff]
      %v668 = vadd.f32 %v664, %v666
      %v669 = vadd.f32 %v665, %v667
      %v670 = vsel %vm569, %v668, -inf
      %671 = vmax.xlane.f32.xlu0 %v670
      %v672 = vpop.xlane.xlu0 %671
      %v673 = vsel %vm569, %v669, -inf
      %674 = vmax.xlane.f32.xlu0 %v673
      %v675 = vpop.xlane.xlu0 %674
      %v676 = vsub.f32 %v668, %v672
      %v677 = vsub.f32 %v669, %v675
      %v678 = vmul.f32 %v676, 1.442695
      %v679 = vpow.pop %v678
      %v680 = vmul.f32 %v677, 1.442695
      %v681 = vpow.pop %v680
      %v682 = vsel %vm569, %v679, 0.0
      %683 = vadd.xlane.f32.xlu0 %v682
      %v684 = vpop.xlane.xlu0 %683
      %v685 = vsel %vm569, %v681, 0.0
      %686 = vadd.xlane.f32.xlu0 %v685
      %v687 = vpop.xlane.xlu0 %686
      %v688 = vrcp.pop %v684
      %v689 = vrcp.pop %v687
      %v690 = vmul.f32 %v679, %v688
      %v691 = vmul.f32 %v681, %v689
      %v692 = vpack.c.bf16 %v691, %v690
      %v693 = vpack.c.bf16 %v564, %v561
      %695 = vrot.lane.b32.xlu0 %v693, 64
      %v696 = vpop.permute.xlu0 %695
      %v699 = vsel %vm569, %v692, 0
      %701 = vmatprep.subr.bf16.mxu0 0
      %702 = vmatpush1.bf16.msra.mxu0 %v696
      %703 = vmatprep.subr.bf16.mxu0 0
      %704 = vmatpush1.bf16.msra.mxu0 0
      %705 = vmatprep.subr.bf16.mxu0 0
      %706 = vmatpush1.bf16.msra.mxu0 0
      %707 = vmatprep.subr.bf16.mxu0 0
      %708 = vmatpush1.bf16.msra.mxu0 0
      %709 = vmatprep.subr.bf16.mxu0 0
      %710 = vmatpush1.bf16.msra.mxu0 0
      %711 = vmatprep.subr.bf16.mxu0 0
      %712 = vmatpush1.bf16.msra.mxu0 0
      %713 = vmatprep.subr.bf16.mxu0 0
      %714 = vmatpush1.bf16.msra.mxu0 0
      %715 = vmatprep.subr.bf16.mxu0 0
      %716 = vmatpush1.bf16.msra.mxu0 0
      %717 = vmatprep.subr.bf16.mxu0 0
      %718 = vmatpush1.bf16.msra.mxu0 0
      %719 = vmatprep.subr.bf16.mxu0 0
      %720 = vmatpush1.bf16.msra.mxu0 0
      %721 = vmatprep.subr.bf16.mxu0 0
      %722 = vmatpush1.bf16.msra.mxu0 0
      %723 = vmatprep.subr.bf16.mxu0 0
      %724 = vmatpush1.bf16.msra.mxu0 0
      %725 = vmatprep.subr.bf16.mxu0 0
      %726 = vmatpush1.bf16.msra.mxu0 0
      %727 = vmatprep.subr.bf16.mxu0 0
      %728 = vmatpush1.bf16.msra.mxu0 0
      %729 = vmatprep.subr.bf16.mxu0 0
      %730 = vmatpush1.bf16.msra.mxu0 0
      %731 = vmatprep.subr.bf16.mxu0 0
      %732 = vmatpush1.bf16.msra.mxu0 0
      %733 = vmatprep.mubr.bf16.mxu0 0
      %734 = vmatmul.mubr.bf16.gmra.mrb[0].mxu0 %v699
      %v735 = vpop.f32.mrb[0].mxu0
      %v736 = vadd.f32 0.0, %v735
      %v737 = vpop.f32.mrb[0].mxu0
      %v738 = vpop.f32.mrb[0].mxu0
      %v739 = vadd.f32 0.0, %v738
      %v740 = vpop.f32.mrb[0].mxu0
      %741 = vdwg.mxu0
      %742 = vrot.lane.b32.xlu0 %v567, 112
      %v743 = vpop.permute.xlu0 %742
      %744 = vrot.lane.b32.xlu0 %v568, 112
      %v745 = vpop.permute.xlu0 %744
      %v748 = vsel %vm569, %v743, 0.0
      %749 = vadd.xlane.f32.xlu0 %v748
      %v750 = vpop.xlane.xlu0 %749
      %v751 = vsel %vm569, %v745, 0.0
      %752 = vadd.xlane.f32.xlu0 %v751
      %v753 = vpop.xlane.xlu0 %752
      %v754 = vmax.f32 %v750, 1e-24
      %v755 = vmax.f32 %v753, 1e-24
      %v756 = vrsqrt.pop %v754
      %v757 = vrsqrt.pop %v755
      %v758 = vmul.f32 %v561, %v756
      %v759 = vmul.f32 %v564, %v757
      %760 = vrot.lane.b32.xlu0 %v567, 80
      %v761 = vpop.permute.xlu0 %760
      %762 = vrot.lane.b32.xlu0 %v568, 80
      %v763 = vpop.permute.xlu0 %762
      %v766 = vsel %vm569, %v761, 0.0
      %767 = vadd.xlane.f32.xlu0 %v766
      %v768 = vpop.xlane.xlu0 %767
      %v769 = vsel %vm569, %v763, 0.0
      %770 = vadd.xlane.f32.xlu0 %v769
      %v771 = vpop.xlane.xlu0 %770
      %v772 = vmax.f32 %v768, 1e-24
      %v773 = vmax.f32 %v771, 1e-24
      %v774 = vrsqrt.pop %v772
      %v775 = vrsqrt.pop %v773
      %v776 = vmul.f32 %v561, %v774
      %v777 = vmul.f32 %v564, %v775
      %v778 = vpack.c.bf16 %v759, %v758
      %v779 = vpack.c.bf16 %v777, %v776
      %781 = vrot.lane.b32.xlu0 %v778, 112
      %v782 = vpop.permute.xlu0 %781
      %784 = vrot.lane.b32.xlu0 %v779, 80
      %v785 = vpop.permute.xlu0 %784
      %v787 = vsel %vm569, %v782, 0
      %v790 = vsel %vm569, %v785, 0
      %792 = vmatprep.subr.bf16.mxu0 0
      %793 = vmatpush1.bf16.xpose.msra.mxu0 %v790
      %794 = vmatprep.subr.bf16.mxu0 0
      %795 = vmatpush1.bf16.xpose.msra.mxu0 0
      %796 = vmatprep.subr.bf16.mxu0 0
      %797 = vmatpush1.bf16.xpose.msra.mxu0 0
      %798 = vmatprep.subr.bf16.mxu0 0
      %799 = vmatpush1.bf16.xpose.msra.mxu0 0
      %800 = vmatprep.subr.bf16.mxu0 0
      %801 = vmatpush1.bf16.xpose.msra.mxu0 0
      %802 = vmatprep.subr.bf16.mxu0 0
      %803 = vmatpush1.bf16.xpose.msra.mxu0 0
      %804 = vmatprep.subr.bf16.mxu0 0
      %805 = vmatpush1.bf16.xpose.msra.mxu0 0
      %806 = vmatprep.subr.bf16.mxu0 0
      %807 = vmatpush1.bf16.xpose.msra.mxu0 0
      %808 = vmatprep.subr.bf16.mxu0 0
      %809 = vmatpush1.bf16.xpose.msra.mxu0 0
      %810 = vmatprep.subr.bf16.mxu0 0
      %811 = vmatpush1.bf16.xpose.msra.mxu0 0
      %812 = vmatprep.subr.bf16.mxu0 0
      %813 = vmatpush1.bf16.xpose.msra.mxu0 0
      %814 = vmatprep.subr.bf16.mxu0 0
      %815 = vmatpush1.bf16.xpose.msra.mxu0 0
      %816 = vmatprep.subr.bf16.mxu0 0
      %817 = vmatpush1.bf16.xpose.msra.mxu0 0
      %818 = vmatprep.subr.bf16.mxu0 0
      %819 = vmatpush1.bf16.xpose.msra.mxu0 0
      %820 = vmatprep.subr.bf16.mxu0 0
      %821 = vmatpush1.bf16.xpose.msra.mxu0 0
      %822 = vmatprep.subr.bf16.mxu0 0
      %823 = vmatpush1.bf16.xpose.msra.mxu0 0
      %824 = vmatprep.mubr.bf16.mxu0 0
      %825 = vmatmul.mubr.bf16.gmra.mrb[0].mxu0 %v787
      %v826 = vpop.f32.mrb[0].mxu0
      %v827 = vadd.f32 0.0, %v826
      %v828 = vpop.f32.mrb[0].mxu0
      %v829 = vpop.f32.mrb[0].mxu0
      %v830 = vadd.f32 0.0, %v829
      %v831 = vpop.f32.mrb[0].mxu0
      %832 = vdwg.mxu0
      %s833 = scalar_lea.vmem %s6, 1
      %v834 = vld [vmem:[%s833] sm:$0x1]
      %v836 = vlaneseq
      %v837 = vshrl.u32 %v836, 7
      %v838 = vsub.s32 0, %v837
      %v839 = vrot.slane %v834, %v838
      %840 = vset.pattern.permute.xlu0 0
      %841 = vperm.xlu0 %840, %v839
      %v842 = vpop.permute.xlu0 %841
      %v844 = vmul.f32 %v827, %v842
      %v845 = vmul.f32 %v830, %v842
      %s846 = scalar_lea.vmem %s5, 16
      %v847 = vld [vmem:[%s846] sm:$0xff]
      %v848 = vld [vmem:[%s846 + $0x8] sm:$0xff]
      %v849 = vadd.f32 %v844, %v847
      %v850 = vadd.f32 %v845, %v848
      %v851 = vsel %vm569, %v849, -inf
      %852 = vmax.xlane.f32.xlu0 %v851
      %v853 = vpop.xlane.xlu0 %852
      %v854 = vsel %vm569, %v850, -inf
      %855 = vmax.xlane.f32.xlu0 %v854
      %v856 = vpop.xlane.xlu0 %855
      %v857 = vsub.f32 %v849, %v853
      %v858 = vsub.f32 %v850, %v856
      %v859 = vmul.f32 %v857, 1.442695
      %v860 = vpow.pop %v859
      %v861 = vmul.f32 %v858, 1.442695
      %v862 = vpow.pop %v861
      %v863 = vsel %vm569, %v860, 0.0
      %864 = vadd.xlane.f32.xlu0 %v863
      %v865 = vpop.xlane.xlu0 %864
      %v866 = vsel %vm569, %v862, 0.0
      %867 = vadd.xlane.f32.xlu0 %v866
      %v868 = vpop.xlane.xlu0 %867
      %v869 = vrcp.pop %v865
      %v870 = vrcp.pop %v868
      %v871 = vmul.f32 %v860, %v869
      %v872 = vmul.f32 %v862, %v870
      %v873 = vpack.c.bf16 %v872, %v871
      %874 = vrot.lane.b32.xlu0 %v693, 48
      %v875 = vpop.permute.xlu0 %874
      %v878 = vsel %vm569, %v873, 0
      %880 = vmatprep.subr.bf16.mxu0 0
      %881 = vmatpush1.bf16.msra.mxu0 %v875
      %882 = vmatprep.subr.bf16.mxu0 0
      %883 = vmatpush1.bf16.msra.mxu0 0
      %884 = vmatprep.subr.bf16.mxu0 0
      %885 = vmatpush1.bf16.msra.mxu0 0
      %886 = vmatprep.subr.bf16.mxu0 0
      %887 = vmatpush1.bf16.msra.mxu0 0
      %888 = vmatprep.subr.bf16.mxu0 0
      %889 = vmatpush1.bf16.msra.mxu0 0
      %890 = vmatprep.subr.bf16.mxu0 0
      %891 = vmatpush1.bf16.msra.mxu0 0
      %892 = vmatprep.subr.bf16.mxu0 0
      %893 = vmatpush1.bf16.msra.mxu0 0
      %894 = vmatprep.subr.bf16.mxu0 0
      %895 = vmatpush1.bf16.msra.mxu0 0
      %896 = vmatprep.subr.bf16.mxu0 0
      %897 = vmatpush1.bf16.msra.mxu0 0
      %898 = vmatprep.subr.bf16.mxu0 0
      %899 = vmatpush1.bf16.msra.mxu0 0
      %900 = vmatprep.subr.bf16.mxu0 0
      %901 = vmatpush1.bf16.msra.mxu0 0
      %902 = vmatprep.subr.bf16.mxu0 0
      %903 = vmatpush1.bf16.msra.mxu0 0
      %904 = vmatprep.subr.bf16.mxu0 0
      %905 = vmatpush1.bf16.msra.mxu0 0
      %906 = vmatprep.subr.bf16.mxu0 0
      %907 = vmatpush1.bf16.msra.mxu0 0
      %908 = vmatprep.subr.bf16.mxu0 0
      %909 = vmatpush1.bf16.msra.mxu0 0
      %910 = vmatprep.subr.bf16.mxu0 0
      %911 = vmatpush1.bf16.msra.mxu0 0
      %912 = vmatprep.mubr.bf16.mxu0 0
      %913 = vmatmul.mubr.bf16.gmra.mrb[0].mxu0 %v878
      %v914 = vpop.f32.mrb[0].mxu0
      %v915 = vadd.f32 0.0, %v914
      %v916 = vpop.f32.mrb[0].mxu0
      %v917 = vpop.f32.mrb[0].mxu0
      %v918 = vadd.f32 0.0, %v917
      %v919 = vpop.f32.mrb[0].mxu0
      %920 = vdwg.mxu0
      %923 = vrot.lane.b32.xlu0 %v915, 16
      %v924 = vpop.permute.xlu0 %923
      %925 = vrot.lane.b32.xlu0 %v918, 16
      %v926 = vpop.permute.xlu0 %925
      %v929 = vsel %vm569, %v736, %v924
      %v930 = vsel %vm569, %v739, %v926
      %v931 = vpack.c.bf16 %v930, %v929
      %v932 = vld [vmem:[%s3] sm:$0xf]
      %v933 = vld [vmem:[%s3 + $0x4] sm:$0xf]
      %v934 = vld [vmem:[%s3 + $0x8] sm:$0xf]
      %v935 = vld [vmem:[%s3 + $0xc] sm:$0xf]
      %v936 = vld [vmem:[%s4] sm:$0x1]
      %v938 = vlaneseq
      %v939 = vshrl.u32 %v938, 7
      %v940 = vsub.s32 0, %v939
      %v941 = vrot.slane %v936, %v940
      %v947 = vunpack.c.l.b16 %v932
      %v948 = vunpack.c.l.b16 %v933
      %v949 = vunpack.c.l.b16 %v934
      %v950 = vunpack.c.l.b16 %v935
      %v951 = vpack.c.b16 %v948, %v947
      %v952 = vpack.c.b16 %v950, %v949
      %v956 = vsel %vm522, %v931, 0
      %958 = vmatprep.subr.bf16.mxu0 0
      %959 = vmatpush1.bf16.msra.mxu0 %v951
      %960 = vmatprep.subr.bf16.mxu0 0
      %961 = vmatpush1.bf16.msra.mxu0 %v952
      %962 = vmatprep.subr.bf16.mxu0 0
      %963 = vmatpush1.bf16.msra.mxu0 0
      %964 = vmatprep.subr.bf16.mxu0 0
      %965 = vmatpush1.bf16.msra.mxu0 0
      %966 = vmatprep.subr.bf16.mxu0 0
      %967 = vmatpush1.bf16.msra.mxu0 0
      %968 = vmatprep.subr.bf16.mxu0 0
      %969 = vmatpush1.bf16.msra.mxu0 0
      %970 = vmatprep.subr.bf16.mxu0 0
      %971 = vmatpush1.bf16.msra.mxu0 0
      %972 = vmatprep.subr.bf16.mxu0 0
      %973 = vmatpush1.bf16.msra.mxu0 0
      %974 = vmatprep.subr.bf16.mxu0 0
      %975 = vmatpush1.bf16.msra.mxu0 0
      %976 = vmatprep.subr.bf16.mxu0 0
      %977 = vmatpush1.bf16.msra.mxu0 0
      %978 = vmatprep.subr.bf16.mxu0 0
      %979 = vmatpush1.bf16.msra.mxu0 0
      %980 = vmatprep.subr.bf16.mxu0 0
      %981 = vmatpush1.bf16.msra.mxu0 0
      %982 = vmatprep.subr.bf16.mxu0 0
      %983 = vmatpush1.bf16.msra.mxu0 0
      %984 = vmatprep.subr.bf16.mxu0 0
      %985 = vmatpush1.bf16.msra.mxu0 0
      %986 = vmatprep.subr.bf16.mxu0 0
      %987 = vmatpush1.bf16.msra.mxu0 0
      %988 = vmatprep.subr.bf16.mxu0 0
      %989 = vmatpush1.bf16.msra.mxu0 0
      %990 = vmatprep.mubr.bf16.mxu0 0
      %991 = vmatmul.mubr.bf16.gmra.mrb[0].mxu0 %v956
      %v992 = vpop.f32.mrb[0].mxu0
      %v993 = vadd.f32 %v941, %v992
      %v994 = vpop.f32.mrb[0].mxu0
      %v995 = vpop.f32.mrb[0].mxu0
      %v996 = vadd.f32 %v941, %v995
      %v997 = vpop.f32.mrb[0].mxu0
      %998 = vdwg.mxu0
      %v999 = vld [vmem:[%s7] sm:$0x1]
      %v1000 = vld [vmem:[%s8] sm:$0x1]
      %v1001 = vsel %vm522, %v993, 0.0
      %1002 = vadd.xlane.f32.xlu0 %v1001
      %v1003 = vpop.xlane.xlu0 %1002
      %v1004 = vsel %vm522, %v996, 0.0
      %1005 = vadd.xlane.f32.xlu0 %v1004
      %v1006 = vpop.xlane.xlu0 %1005
      %v1007 = vrcp.pop 32.0
      %v1008 = vmul.f32 %v1003, %v1007
      %v1009 = vmul.f32 %v1006, %v1007
      %v1010 = vsub.f32 %v993, %v1008
      %v1011 = vsub.f32 %v996, %v1009
      %v1012 = vmul.f32 %v1010, %v1010
      %v1013 = vmul.f32 %v1011, %v1011
      %v1014 = vsel %vm522, %v1012, 0.0
      %1015 = vadd.xlane.f32.xlu0 %v1014
      %v1016 = vpop.xlane.xlu0 %1015
      %v1017 = vsel %vm522, %v1013, 0.0
      %1018 = vadd.xlane.f32.xlu0 %v1017
      %v1019 = vpop.xlane.xlu0 %1018
      %v1020 = vmul.f32 %v1016, %v1007
      %v1021 = vmul.f32 %v1019, %v1007
      %v1022 = vadd.f32 %v1020, 1e-05
      %v1023 = vadd.f32 %v1021, 1e-05
      %v1024 = vrsqrt.pop %v1022
      %v1025 = vrsqrt.pop %v1023
      %v1026 = vmul.f32 %v1010, %v1024
      %v1027 = vmul.f32 %v1011, %v1025
      %v1029 = vlaneseq
      %v1030 = vshrl.u32 %v1029, 7
      %v1031 = vsub.s32 0, %v1030
      %v1032 = vrot.slane %v999, %v1031
      %v1034 = vmul.f32 %v1026, %v1032
      %v1035 = vmul.f32 %v1027, %v1032
      %v1037 = vlaneseq
      %v1038 = vshrl.u32 %v1037, 7
      %v1039 = vsub.s32 0, %v1038
      %v1040 = vrot.slane %v1000, %v1039
      %v1042 = vadd.f32 %v1034, %v1040
      %v1043 = vadd.f32 %v1035, %v1040
      %v1044 = vadd.f32 %v496, %v1042
      %v1045 = vadd.f32 %v497, %v1043
      %v1046 = vpack.c.bf16 %v1045, %v1044
      %v1047 = vld [vmem:[%s9] sm:$0xf]
      %v1048 = vld [vmem:[%s9 + $0x4] sm:$0xf]
      %v1049 = vld [vmem:[%s9 + $0x8] sm:$0xf]
      %v1050 = vld [vmem:[%s9 + $0xc] sm:$0xf]
      %v1051 = vld [vmem:[%s10] sm:$0x1]
      %v1053 = vlaneseq
      %v1054 = vshrl.u32 %v1053, 7
      %v1055 = vsub.s32 0, %v1054
      %v1056 = vrot.slane %v1051, %v1055
      %v1062 = vunpack.c.l.b16 %v1047
      %v1063 = vunpack.c.l.b16 %v1048
      %v1064 = vunpack.c.l.b16 %v1049
      %v1065 = vunpack.c.l.b16 %v1050
      %v1066 = vpack.c.b16 %v1063, %v1062
      %v1067 = vpack.c.b16 %v1065, %v1064
      %v1071 = vsel %vm522, %v1046, 0
      %1073 = vmatprep.subr.bf16.mxu0 0
      %1074 = vmatpush1.bf16.msra.mxu0 %v1066
      %1075 = vmatprep.subr.bf16.mxu0 0
      %1076 = vmatpush1.bf16.msra.mxu0 %v1067
      %1077 = vmatprep.subr.bf16.mxu0 0
      %1078 = vmatpush1.bf16.msra.mxu0 0
      %1079 = vmatprep.subr.bf16.mxu0 0
      %1080 = vmatpush1.bf16.msra.mxu0 0
      %1081 = vmatprep.subr.bf16.mxu0 0
      %1082 = vmatpush1.bf16.msra.mxu0 0
      %1083 = vmatprep.subr.bf16.mxu0 0
      %1084 = vmatpush1.bf16.msra.mxu0 0
      %1085 = vmatprep.subr.bf16.mxu0 0
      %1086 = vmatpush1.bf16.msra.mxu0 0
      %1087 = vmatprep.subr.bf16.mxu0 0
      %1088 = vmatpush1.bf16.msra.mxu0 0
      %1089 = vmatprep.subr.bf16.mxu0 0
      %1090 = vmatpush1.bf16.msra.mxu0 0
      %1091 = vmatprep.subr.bf16.mxu0 0
      %1092 = vmatpush1.bf16.msra.mxu0 0
      %1093 = vmatprep.subr.bf16.mxu0 0
      %1094 = vmatpush1.bf16.msra.mxu0 0
      %1095 = vmatprep.subr.bf16.mxu0 0
      %1096 = vmatpush1.bf16.msra.mxu0 0
      %1097 = vmatprep.subr.bf16.mxu0 0
      %1098 = vmatpush1.bf16.msra.mxu0 0
      %1099 = vmatprep.subr.bf16.mxu0 0
      %1100 = vmatpush1.bf16.msra.mxu0 0
      %1101 = vmatprep.subr.bf16.mxu0 0
      %1102 = vmatpush1.bf16.msra.mxu0 0
      %1103 = vmatprep.subr.bf16.mxu0 0
      %1104 = vmatpush1.bf16.msra.mxu0 0
      %1105 = vmatprep.mubr.bf16.mxu0 0
      %1106 = vmatmul.mubr.bf16.gmra.mrb[0].mxu0 %v1071
      %v1107 = vpop.f32.mrb[0].mxu0
      %v1108 = vadd.f32 %v1056, %v1107
      %v1109 = vpop.f32.mrb[0].mxu0
      %v1110 = vpop.f32.mrb[0].mxu0
      %v1111 = vadd.f32 %v1056, %v1110
      %v1112 = vpop.f32.mrb[0].mxu0
      %1113 = vdwg.mxu0
      %v1114 = vmul.f32 %v1108, 0.5
      %v1115 = vmul.f32 %v1111, 0.5
      %v1116 = vmul.f32 %v1108, 0.044715
      %v1117 = vmul.f32 %v1111, 0.044715
      %v1118 = vmul.f32 %v1116, %v1108
      %v1119 = vmul.f32 %v1117, %v1111
      %v1120 = vmul.f32 %v1118, %v1108
      %v1121 = vmul.f32 %v1119, %v1111
      %v1122 = vadd.f32 %v1108, %v1120
      %v1123 = vadd.f32 %v1111, %v1121
      %v1124 = vmul.f32 %v1122, 0.7978846
      %v1125 = vmul.f32 %v1123, 0.7978846
      %v1126 = vtanh.pop %v1124
      %v1127 = vtanh.pop %v1125
      %v1128 = vadd.f32 %v1126, 1.0
      %v1129 = vadd.f32 %v1127, 1.0
      %v1130 = vmul.f32 %v1114, %v1128
      %v1131 = vmul.f32 %v1115, %v1129
      %v1132 = vpack.c.bf16 %v1131, %v1130
      %v1133 = vld [vmem:[%s11] sm:$0xf]
      %v1134 = vld [vmem:[%s11 + $0x4] sm:$0xf]
      %v1135 = vld [vmem:[%s11 + $0x8] sm:$0xf]
      %v1136 = vld [vmem:[%s11 + $0xc] sm:$0xf]
      %v1137 = vld [vmem:[%s11 + $0x10] sm:$0xf]
      %v1138 = vld [vmem:[%s11 + $0x14] sm:$0xf]
      %v1139 = vld [vmem:[%s11 + $0x18] sm:$0xf]
      %v1140 = vld [vmem:[%s11 + $0x1c] sm:$0xf]
      %v1141 = vld [vmem:[%s11 + $0x20] sm:$0xf]
      %v1142 = vld [vmem:[%s11 + $0x24] sm:$0xf]
      %v1143 = vld [vmem:[%s11 + $0x28] sm:$0xf]
      %v1144 = vld [vmem:[%s11 + $0x2c] sm:$0xf]
      %v1145 = vld [vmem:[%s11 + $0x30] sm:$0xf]
      %v1146 = vld [vmem:[%s11 + $0x34] sm:$0xf]
      %v1147 = vld [vmem:[%s11 + $0x38] sm:$0xf]
      %v1148 = vld [vmem:[%s11 + $0x3c] sm:$0xf]
      %v1149 = vld [vmem:[%s12] sm:$0x1]
      %v1151 = vlaneseq
      %v1152 = vshrl.u32 %v1151, 7
      %v1153 = vsub.s32 0, %v1152
      %v1154 = vrot.slane %v1149, %v1153
      %v1172 = vunpack.c.l.b16 %v1133
      %v1173 = vunpack.c.l.b16 %v1134
      %v1174 = vunpack.c.l.b16 %v1135
      %v1175 = vunpack.c.l.b16 %v1136
      %v1176 = vunpack.c.l.b16 %v1137
      %v1177 = vunpack.c.l.b16 %v1138
      %v1178 = vunpack.c.l.b16 %v1139
      %v1179 = vunpack.c.l.b16 %v1140
      %v1180 = vunpack.c.l.b16 %v1141
      %v1181 = vunpack.c.l.b16 %v1142
      %v1182 = vunpack.c.l.b16 %v1143
      %v1183 = vunpack.c.l.b16 %v1144
      %v1184 = vunpack.c.l.b16 %v1145
      %v1185 = vunpack.c.l.b16 %v1146
      %v1186 = vunpack.c.l.b16 %v1147
      %v1187 = vunpack.c.l.b16 %v1148
      %v1188 = vpack.c.b16 %v1173, %v1172
      %v1189 = vpack.c.b16 %v1175, %v1174
      %v1190 = vpack.c.b16 %v1177, %v1176
      %v1191 = vpack.c.b16 %v1179, %v1178
      %v1192 = vpack.c.b16 %v1181, %v1180
      %v1193 = vpack.c.b16 %v1183, %v1182
      %v1194 = vpack.c.b16 %v1185, %v1184
      %v1195 = vpack.c.b16 %v1187, %v1186
      %1204 = vmatprep.subr.bf16.mxu0 0
      %1205 = vmatpush1.bf16.msra.mxu0 %v1188
      %1206 = vmatprep.subr.bf16.mxu0 0
      %1207 = vmatpush1.bf16.msra.mxu0 %v1189
      %1208 = vmatprep.subr.bf16.mxu0 0
      %1209 = vmatpush1.bf16.msra.mxu0 %v1190
      %1210 = vmatprep.subr.bf16.mxu0 0
      %1211 = vmatpush1.bf16.msra.mxu0 %v1191
      %1212 = vmatprep.subr.bf16.mxu0 0
      %1213 = vmatpush1.bf16.msra.mxu0 %v1192
      %1214 = vmatprep.subr.bf16.mxu0 0
      %1215 = vmatpush1.bf16.msra.mxu0 %v1193
      %1216 = vmatprep.subr.bf16.mxu0 0
      %1217 = vmatpush1.bf16.msra.mxu0 %v1194
      %1218 = vmatprep.subr.bf16.mxu0 0
      %1219 = vmatpush1.bf16.msra.mxu0 %v1195
      %1220 = vmatprep.subr.bf16.mxu0 0
      %1221 = vmatpush1.bf16.msra.mxu0 0
      %1222 = vmatprep.subr.bf16.mxu0 0
      %1223 = vmatpush1.bf16.msra.mxu0 0
      %1224 = vmatprep.subr.bf16.mxu0 0
      %1225 = vmatpush1.bf16.msra.mxu0 0
      %1226 = vmatprep.subr.bf16.mxu0 0
      %1227 = vmatpush1.bf16.msra.mxu0 0
      %1228 = vmatprep.subr.bf16.mxu0 0
      %1229 = vmatpush1.bf16.msra.mxu0 0
      %1230 = vmatprep.subr.bf16.mxu0 0
      %1231 = vmatpush1.bf16.msra.mxu0 0
      %1232 = vmatprep.subr.bf16.mxu0 0
      %1233 = vmatpush1.bf16.msra.mxu0 0
      %1234 = vmatprep.subr.bf16.mxu0 0
      %1235 = vmatpush1.bf16.msra.mxu0 0
      %1236 = vmatprep.mubr.bf16.mxu0 0
      %1237 = vmatmul.mubr.bf16.gmra.mrb[0].mxu0 %v1132
      %v1238 = vpop.f32.mrb[0].mxu0
      %v1239 = vadd.f32 %v1154, %v1238
      %v1240 = vpop.f32.mrb[0].mxu0
      %v1241 = vpop.f32.mrb[0].mxu0
      %v1242 = vadd.f32 %v1154, %v1241
      %v1243 = vpop.f32.mrb[0].mxu0
      %1244 = vdwg.mxu0
      %v1245 = vld [vmem:[%s13] sm:$0x1]
      %v1246 = vld [vmem:[%s14] sm:$0x1]
      %v1247 = vsel %vm522, %v1239, 0.0
      %1248 = vadd.xlane.f32.xlu0 %v1247
      %v1249 = vpop.xlane.xlu0 %1248
      %v1250 = vsel %vm522, %v1242, 0.0
      %1251 = vadd.xlane.f32.xlu0 %v1250
      %v1252 = vpop.xlane.xlu0 %1251
      %v1253 = vmul.f32 %v1249, %v1007
      %v1254 = vmul.f32 %v1252, %v1007
      %v1255 = vsub.f32 %v1239, %v1253
      %v1256 = vsub.f32 %v1242, %v1254
      %v1257 = vmul.f32 %v1255, %v1255
      %v1258 = vmul.f32 %v1256, %v1256
      %v1259 = vsel %vm522, %v1257, 0.0
      %1260 = vadd.xlane.f32.xlu0 %v1259
      %v1261 = vpop.xlane.xlu0 %1260
      %v1262 = vsel %vm522, %v1258, 0.0
      %1263 = vadd.xlane.f32.xlu0 %v1262
      %v1264 = vpop.xlane.xlu0 %1263
      %v1265 = vmul.f32 %v1261, %v1007
      %v1266 = vmul.f32 %v1264, %v1007
      %v1267 = vadd.f32 %v1265, 1e-05
      %v1268 = vadd.f32 %v1266, 1e-05
      %v1269 = vrsqrt.pop %v1267
      %v1270 = vrsqrt.pop %v1268
      %v1271 = vmul.f32 %v1255, %v1269
      %v1272 = vmul.f32 %v1256, %v1270
      %v1274 = vlaneseq
      %v1275 = vshrl.u32 %v1274, 7
      %v1276 = vsub.s32 0, %v1275
      %v1277 = vrot.slane %v1245, %v1276
      %v1279 = vmul.f32 %v1271, %v1277
      %v1280 = vmul.f32 %v1272, %v1277
      %v1282 = vlaneseq
      %v1283 = vshrl.u32 %v1282, 7
      %v1284 = vsub.s32 0, %v1283
      %v1285 = vrot.slane %v1246, %v1284
      %v1287 = vadd.f32 %v1279, %v1285
      %v1288 = vadd.f32 %v1280, %v1285
      %v1289 = vadd.f32 %v1044, %v1287
      %v1290 = vadd.f32 %v1045, %v1288
      %1291 = vst.msk [vmem:[%s494] sm:$0xff] %vm522, %v1289
      %1292 = vst.msk [vmem:[%s494 + $0x8] sm:$0xff] %vm522, %v1290
      %p1293 = scmp.lt.s32.totalorder %s26, 1
      %s1294 = scalar_select %p1293, %s26, 1
      %s1295 = smul.addr %s1294, 2
      %s1296 = smul.addr %s1295, 8
      %s1297 = scalar_lea.vmem %s15, %s1296
      // Predicated region
      $region81: #{_lambda_.8} parent=79 // pred_check
        %p1298 = pneg %p364
      $region82: #{_lambda_.8} parent=79 // pred_check_branch
        %1300 = sbr.rel (%p1298) target = $region84
      $region83: #{_lambda_.8} parent=79 // pred_region
        _
      $region84: #{_lambda_.8} parent=79 // pred_fallthru
        _
    $region80: #{_lambda_.8} parent=5 // pred_fallthru
      _
    %p1301 = scmp.le.s32.totalorder 2, %s21
    // Predicated region
    $region85: #{_lambda_.8} parent=5 // pred_check
      %p1302 = pneg %p1301
    $region86: #{_lambda_.8} parent=5 // pred_check_branch
      %1304 = sbr.rel (%p1302) target = $region88
    $region87: #{_lambda_.8} parent=5 // pred_region
      %s1305 = ssub.s32 %s21, 2
      // Predicated region
      $region89: #{_lambda_.8} parent=87 // pred_check
        %p1306 = pneg %p370
      $region90: #{_lambda_.8} parent=87 // pred_check_branch
        %1308 = sbr.rel (%p1306) target = $region92
      $region91: #{_lambda_.8} parent=87 // pred_region
        %p1309 = scmp.lt.s32.totalorder %s27, 1
        %s1310 = scalar_select %p1309, %s27, 1
        %s1311 = smul.addr %s1310, 2
        %s1312 = smul.addr %s1311, 8
        %s1313 = scalar_lea.vmem %s15, %s1312
      $region92: #{_lambda_.8} parent=87 // pred_fallthru
        _
    $region88: #{_lambda_.8} parent=5 // pred_fallthru
      _
  $region6: #{_lambda_.8} parent=0 // loop_footer
    %s25 = sadd.s32 1, %s21
  $region7: #{_lambda_.8} parent=0 // loop_footer_branch
    %20 = sbr.rel target = $region3
  $region8: #{_lambda_.8} parent=0 // loop_exit
    _

// kernel: _lambda_.10
$region0: #{_lambda_.10}
  #allocation0 [shape = 'u32[]', space=smem, size = 0x4, offset = 0x4, fixed_abs, tag = 'smem constant byte address 0x4 - core index']
  #allocation1 [shape = 'u32[144,128]{1,0:T(1,128)}', space=vmem, size = 0x12000, scoped, tag = 'internal scratch']
  %s0 = inlined_call_operand.vmem [shape: f32[8,128], index: 0, kind: input, shape index: {}]
  %s1 = inlined_call_operand.vmem [shape: bf16[128,64], index: 1, kind: input, shape index: {}]
  %s2 = inlined_call_operand.vmem [shape: f32[1,64], index: 2, kind: input, shape index: {}, may-alias: {2,4}]
  %s3 = inlined_call_operand.vmem [shape: f32[1,64], index: 3, kind: input, shape index: {}]
  %s4 = inlined_call_operand.vmem [shape: f32[1,64], index: 4, kind: input, shape index: {}, may-alias: {2,4}]
  %s5 = inlined_call_operand.vmem [shape: f32[8,64], index: 5, kind: output, shape index: {}]
  %s6 = sld [smem:[#allocation0]]
  $region30: #{_lambda_.10} parent=0
    _
  %s8 = ssub.s32 1, %s6
  %s9 = scalar_select 0, %s8, %s6
  // Predicated region
  $region2: #{_lambda_.10} parent=0 // pred_check
    _
  $region3: #{_lambda_.10} parent=0 // pred_check_branch
    %11 = sbr.rel (0) target = $region5
  $region4: #{_lambda_.10} parent=0 // pred_region
    _
  $region5: #{_lambda_.10} parent=0 // pred_fallthru
    _
  // Predicated region
  $region6: #{_lambda_.10} parent=0 // pred_check
    _
  $region7: #{_lambda_.10} parent=0 // pred_check_branch
    %13 = sbr.rel (0) target = $region9
  $region8: #{_lambda_.10} parent=0 // pred_region
    _
  $region9: #{_lambda_.10} parent=0 // pred_fallthru
    _
  // Predicated region
  $region10: #{_lambda_.10} parent=0 // pred_check
    _
  $region11: #{_lambda_.10} parent=0 // pred_check_branch
    %15 = sbr.rel (0) target = $region13
  $region12: #{_lambda_.10} parent=0 // pred_region
    _
  $region13: #{_lambda_.10} parent=0 // pred_fallthru
    _
  // Predicated region
  $region14: #{_lambda_.10} parent=0 // pred_check
    _
  $region15: #{_lambda_.10} parent=0 // pred_check_branch
    %17 = sbr.rel (0) target = $region17
  $region16: #{_lambda_.10} parent=0 // pred_region
    _
  $region17: #{_lambda_.10} parent=0 // pred_fallthru
    _
  // Predicated region
  $region18: #{_lambda_.10} parent=0 // pred_check
    _
  $region19: #{_lambda_.10} parent=0 // pred_check_branch
    %19 = sbr.rel (0) target = $region21
  $region20: #{_lambda_.10} parent=0 // pred_region
    _
  $region21: #{_lambda_.10} parent=0 // pred_fallthru
    _
  %v21 = vld [vmem:[%s0] sm:$0xff]
  %v22 = vpack.c.bf16 %v21, %v21
  %v23 = vld [vmem:[%s1] sm:$0xf]
  %v24 = vld [vmem:[%s1 + $0x4] sm:$0xf]
  %v25 = vld [vmem:[%s1 + $0x8] sm:$0xf]
  %v26 = vld [vmem:[%s1 + $0xc] sm:$0xf]
  %v27 = vld [vmem:[%s1 + $0x10] sm:$0xf]
  %v28 = vld [vmem:[%s1 + $0x14] sm:$0xf]
  %v29 = vld [vmem:[%s1 + $0x18] sm:$0xf]
  %v30 = vld [vmem:[%s1 + $0x1c] sm:$0xf]
  %v31 = vld [vmem:[%s1 + $0x20] sm:$0xf]
  %v32 = vld [vmem:[%s1 + $0x24] sm:$0xf]
  %v33 = vld [vmem:[%s1 + $0x28] sm:$0xf]
  %v34 = vld [vmem:[%s1 + $0x2c] sm:$0xf]
  %v35 = vld [vmem:[%s1 + $0x30] sm:$0xf]
  %v36 = vld [vmem:[%s1 + $0x34] sm:$0xf]
  %v37 = vld [vmem:[%s1 + $0x38] sm:$0xf]
  %v38 = vld [vmem:[%s1 + $0x3c] sm:$0xf]
  %v39 = vld [vmem:[%s2] sm:$0x1]
  %v41 = vlaneseq
  %v42 = vshrl.u32 %v41, 7
  %v43 = vsub.s32 0, %v42
  %v44 = vrot.slane %v39, %v43
  %v62 = vunpack.c.l.b16 %v23
  %v63 = vunpack.c.l.b16 %v24
  %v64 = vunpack.c.l.b16 %v25
  %v65 = vunpack.c.l.b16 %v26
  %v66 = vunpack.c.l.b16 %v27
  %v67 = vunpack.c.l.b16 %v28
  %v68 = vunpack.c.l.b16 %v29
  %v69 = vunpack.c.l.b16 %v30
  %v70 = vunpack.c.l.b16 %v31
  %v71 = vunpack.c.l.b16 %v32
  %v72 = vunpack.c.l.b16 %v33
  %v73 = vunpack.c.l.b16 %v34
  %v74 = vunpack.c.l.b16 %v35
  %v75 = vunpack.c.l.b16 %v36
  %v76 = vunpack.c.l.b16 %v37
  %v77 = vunpack.c.l.b16 %v38
  %v78 = vpack.c.b16 %v63, %v62
  %v79 = vpack.c.b16 %v65, %v64
  %v80 = vpack.c.b16 %v67, %v66
  %v81 = vpack.c.b16 %v69, %v68
  %v82 = vpack.c.b16 %v71, %v70
  %v83 = vpack.c.b16 %v73, %v72
  %v84 = vpack.c.b16 %v75, %v74
  %v85 = vpack.c.b16 %v77, %v76
  %94 = vmatprep.subr.bf16.mxu0 0
  %95 = vmatpush1.bf16.msra.mxu0 %v78
  %96 = vmatprep.subr.bf16.mxu0 0
  %97 = vmatpush1.bf16.msra.mxu0 %v79
  %98 = vmatprep.subr.bf16.mxu0 0
  %99 = vmatpush1.bf16.msra.mxu0 %v80
  %100 = vmatprep.subr.bf16.mxu0 0
  %101 = vmatpush1.bf16.msra.mxu0 %v81
  %102 = vmatprep.subr.bf16.mxu0 0
  %103 = vmatpush1.bf16.msra.mxu0 %v82
  %104 = vmatprep.subr.bf16.mxu0 0
  %105 = vmatpush1.bf16.msra.mxu0 %v83
  %106 = vmatprep.subr.bf16.mxu0 0
  %107 = vmatpush1.bf16.msra.mxu0 %v84
  %108 = vmatprep.subr.bf16.mxu0 0
  %109 = vmatpush1.bf16.msra.mxu0 %v85
  %110 = vmatprep.subr.bf16.mxu0 0
  %111 = vmatpush1.bf16.msra.mxu0 0
  %112 = vmatprep.subr.bf16.mxu0 0
  %113 = vmatpush1.bf16.msra.mxu0 0
  %114 = vmatprep.subr.bf16.mxu0 0
  %115 = vmatpush1.bf16.msra.mxu0 0
  %116 = vmatprep.subr.bf16.mxu0 0
  %117 = vmatpush1.bf16.msra.mxu0 0
  %118 = vmatprep.subr.bf16.mxu0 0
  %119 = vmatpush1.bf16.msra.mxu0 0
  %120 = vmatprep.subr.bf16.mxu0 0
  %121 = vmatpush1.bf16.msra.mxu0 0
  %122 = vmatprep.subr.bf16.mxu0 0
  %123 = vmatpush1.bf16.msra.mxu0 0
  %124 = vmatprep.subr.bf16.mxu0 0
  %125 = vmatpush1.bf16.msra.mxu0 0
  %126 = vmatprep.mubr.bf16.mxu0 0
  %127 = vmatmul.mubr.bf16.gmra.mrb[0].mxu0 %v22
  %v128 = vpop.f32.mrb[0].mxu0
  %v129 = vadd.f32 %v44, %v128
  %v130 = vpop.f32.mrb[0].mxu0
  %v131 = vpop.f32.mrb[0].mxu0
  %v132 = vpop.f32.mrb[0].mxu0
  %133 = vdwg.mxu0
  %v134 = vld [vmem:[%s3] sm:$0x1]
  %v135 = vld [vmem:[%s4] sm:$0x1]
  %vm136 = vcmask 523264
  %v137 = vsel %vm136, %v129, 0.0
  %138 = vadd.xlane.f32.xlu0 %v137
  %v139 = vpop.xlane.xlu0 %138
  %v140 = vrcp.pop 64.0
  %v141 = vmul.f32 %v139, %v140
  %v142 = vsub.f32 %v129, %v141
  %v143 = vmul.f32 %v142, %v142
  %v144 = vsel %vm136, %v143, 0.0
  %145 = vadd.xlane.f32.xlu0 %v144
  %v146 = vpop.xlane.xlu0 %145
  %v147 = vmul.f32 %v146, %v140
  %v148 = vadd.f32 %v147, 1e-05
  %v149 = vrsqrt.pop %v148
  %v150 = vmul.f32 %v142, %v149
  %v152 = vlaneseq
  %v153 = vshrl.u32 %v152, 7
  %v154 = vsub.s32 0, %v153
  %v155 = vrot.slane %v134, %v154
  %v157 = vmul.f32 %v150, %v155
  %v159 = vlaneseq
  %v160 = vshrl.u32 %v159, 7
  %v161 = vsub.s32 0, %v160
  %v162 = vrot.slane %v135, %v161
  %v164 = vadd.f32 %v157, %v162
  %165 = vst.msk [vmem:[%s5] sm:$0xff] %vm136, %v164
  // Predicated region
  $region22: #{_lambda_.10} parent=0 // pred_check
    _
  $region23: #{_lambda_.10} parent=0 // pred_check_branch
    %167 = sbr.rel (0) target = $region25
  $region24: #{_lambda_.10} parent=0 // pred_region
    _
  $region25: #{_lambda_.10} parent=0 // pred_fallthru
    _
  // Predicated region
  $region26: #{_lambda_.10} parent=0 // pred_check
    _
  $region27: #{_lambda_.10} parent=0 // pred_check_branch
    %169 = sbr.rel (0) target = $region29
  $region28: #{_lambda_.10} parent=0 // pred_region
    _
  $region29: #{_lambda_.10} parent=0 // pred_fallthru
    _

// kernel: _lambda_.13
$region0: #{_lambda_.13}
  #allocation0 [shape = 'u32[]', space=smem, size = 0x4, offset = 0x4, fixed_abs, tag = 'smem constant byte address 0x4 - core index']
  #allocation1 [shape = 'u32[144,128]{1,0:T(1,128)}', space=vmem, size = 0x12000, scoped, tag = 'internal scratch']
  %s0 = inlined_call_operand.vmem [shape: f32[2,4,64], index: 0, kind: input, shape index: {}]
  %s1 = inlined_call_operand.vmem [shape: f32[1,64], index: 1, kind: input, shape index: {}]
  %s2 = inlined_call_operand.vmem [shape: f32[1,64], index: 2, kind: input, shape index: {}]
  %s3 = inlined_call_operand.vmem [shape: bf16[64,10], index: 3, kind: input, shape index: {}]
  %s4 = inlined_call_operand.vmem [shape: f32[1,10], index: 4, kind: input, shape index: {}]
  %s5 = inlined_call_operand.hbm [shape: f32[2,10], index: 5, kind: output, shape index: {}]
  %s6 = sld [smem:[#allocation0]]
  $region30: #{_lambda_.13} parent=0
    _
  %s8 = ssub.s32 1, %s6
  %s9 = scalar_select 0, %s8, %s6
  $region1: #{_lambda_.13} parent=0
    #allocation2 [shape = 'u8[1024]{0}', space=vmem, size = 0x400, scoped, tag = 'output window, operand 0, single buffered']
    #allocation3 [shape = 's32[1]{0}', space=sflag, size = 0x4, scoped, tag = 'scoped memory for _lambda_.13']
    %10 = vsyncpa [#allocation3], 0
    // Predicated region
    $region2: #{_lambda_.13} parent=1 // pred_check
      _
    $region3: #{_lambda_.13} parent=1 // pred_check_branch
      %12 = sbr.rel (0) target = $region5
    $region4: #{_lambda_.13} parent=1 // pred_region
      _
    $region5: #{_lambda_.13} parent=1 // pred_fallthru
      _
    // Predicated region
    $region6: #{_lambda_.13} parent=1 // pred_check
      _
    $region7: #{_lambda_.13} parent=1 // pred_check_branch
      %14 = sbr.rel (0) target = $region9
    $region8: #{_lambda_.13} parent=1 // pred_region
      _
    $region9: #{_lambda_.13} parent=1 // pred_fallthru
      _
    // Predicated region
    $region10: #{_lambda_.13} parent=1 // pred_check
      _
    $region11: #{_lambda_.13} parent=1 // pred_check_branch
      %16 = sbr.rel (0) target = $region13
    $region12: #{_lambda_.13} parent=1 // pred_region
      _
    $region13: #{_lambda_.13} parent=1 // pred_fallthru
      _
    // Predicated region
    $region14: #{_lambda_.13} parent=1 // pred_check
      _
    $region15: #{_lambda_.13} parent=1 // pred_check_branch
      %18 = sbr.rel (0) target = $region17
    $region16: #{_lambda_.13} parent=1 // pred_region
      _
    $region17: #{_lambda_.13} parent=1 // pred_fallthru
      _
    // Predicated region
    $region18: #{_lambda_.13} parent=1 // pred_check
      _
    $region19: #{_lambda_.13} parent=1 // pred_check_branch
      %20 = sbr.rel (0) target = $region21
    $region20: #{_lambda_.13} parent=1 // pred_region
      _
    $region21: #{_lambda_.13} parent=1 // pred_fallthru
      _
    %v22 = vld [vmem:[%s0] sm:$0xf]
    %v23 = vld [vmem:[%s0 + $0x4] sm:$0xf]
    %v24 = vld [vmem:[%s1] sm:$0x1]
    %v25 = vld [vmem:[%s2] sm:$0x1]
    %vm26 = vcmask 519168
    %v27 = vsel %vm26, %v22, 0.0
    %28 = vadd.xlane.f32.xlu0 %v27
    %v29 = vpop.xlane.xlu0 %28
    %v30 = vsel %vm26, %v23, 0.0
    %31 = vadd.xlane.f32.xlu0 %v30
    %v32 = vpop.xlane.xlu0 %31
    %v33 = vrcp.pop 64.0
    %v34 = vmul.f32 %v29, %v33
    %v35 = vmul.f32 %v32, %v33
    %v36 = vsub.f32 %v22, %v34
    %v37 = vsub.f32 %v23, %v35
    %v38 = vmul.f32 %v36, %v36
    %v39 = vmul.f32 %v37, %v37
    %v40 = vsel %vm26, %v38, 0.0
    %41 = vadd.xlane.f32.xlu0 %v40
    %v42 = vpop.xlane.xlu0 %41
    %v43 = vsel %vm26, %v39, 0.0
    %44 = vadd.xlane.f32.xlu0 %v43
    %v45 = vpop.xlane.xlu0 %44
    %v46 = vmul.f32 %v42, %v33
    %v47 = vmul.f32 %v45, %v33
    %v48 = vadd.f32 %v46, 1e-05
    %v49 = vadd.f32 %v47, 1e-05
    %v50 = vrsqrt.pop %v48
    %v51 = vrsqrt.pop %v49
    %v52 = vmul.f32 %v36, %v50
    %v53 = vmul.f32 %v37, %v51
    %v55 = vlaneseq
    %v56 = vshrl.u32 %v55, 7
    %v57 = vsub.s32 0, %v56
    %v58 = vrot.slane %v24, %v57
    %v60 = vmul.f32 %v52, %v58
    %v61 = vmul.f32 %v53, %v58
    %v63 = vlaneseq
    %v64 = vshrl.u32 %v63, 7
    %v65 = vsub.s32 0, %v64
    %v66 = vrot.slane %v25, %v65
    %v68 = vadd.f32 %v60, %v66
    %v69 = vadd.f32 %v61, %v66
    %v70 = vsel %vm26, %v68, 0.0
    %v71 = vrot.slane %v70, 4
    %v72 = vadd.f32 %v70, %v71
    %v73 = vrot.slane %v72, 2
    %v74 = vadd.f32 %v72, %v73
    %v75 = vrot.slane %v74, 1
    %v76 = vadd.f32 %v74, %v75
    %v77 = vsel %vm26, %v69, 0.0
    %v78 = vrot.slane %v77, 4
    %v79 = vadd.f32 %v77, %v78
    %v80 = vrot.slane %v79, 2
    %v81 = vadd.f32 %v79, %v80
    %v82 = vrot.slane %v81, 1
    %v83 = vadd.f32 %v81, %v82
    %v84 = vrcp.pop 4.0
    %v85 = vmul.f32 %v76, %v84
    %v86 = vmul.f32 %v83, %v84
    %v87 = vpack.c.bf16 %v85, %v85
    %v88 = vpack.c.bf16 %v86, %v86
    %v89 = vld [vmem:[%s3] sm:$0xf]
    %v90 = vld [vmem:[%s3 + $0x4] sm:$0xf]
    %v91 = vld [vmem:[%s3 + $0x8] sm:$0xf]
    %v92 = vld [vmem:[%s3 + $0xc] sm:$0xf]
    %v93 = vld [vmem:[%s3 + $0x10] sm:$0xf]
    %v94 = vld [vmem:[%s3 + $0x14] sm:$0xf]
    %v95 = vld [vmem:[%s3 + $0x18] sm:$0xf]
    %v96 = vld [vmem:[%s3 + $0x1c] sm:$0xf]
    %v97 = vld [vmem:[%s4] sm:$0x1]
    %v99 = vlaneseq
    %v100 = vshrl.u32 %v99, 7
    %v101 = vsub.s32 0, %v100
    %v102 = vrot.slane %v97, %v101
    %v106 = vunpack.c.l.b16 %v87
    %v107 = vunpack.c.l.b16 %v88
    %vm108 = vcmask 1041409
    %v109 = vsel %vm108, %v107, %v106
    %v110 = vpack.c.b16 %v109, %v109
    %v119 = vunpack.c.l.b16 %v89
    %v120 = vunpack.c.l.b16 %v90
    %v121 = vunpack.c.l.b16 %v91
    %v122 = vunpack.c.l.b16 %v92
    %v123 = vunpack.c.l.b16 %v93
    %v124 = vunpack.c.l.b16 %v94
    %v125 = vunpack.c.l.b16 %v95
    %v126 = vunpack.c.l.b16 %v96
    %v127 = vpack.c.b16 %v120, %v119
    %v128 = vpack.c.b16 %v122, %v121
    %v129 = vpack.c.b16 %v124, %v123
    %v130 = vpack.c.b16 %v126, %v125
    %vm135 = vcmask 523264
    %v137 = vsel %vm135, %v110, 0
    %139 = vmatprep.subr.bf16.mxu0 0
    %140 = vmatpush1.bf16.msra.mxu0 %v127
    %141 = vmatprep.subr.bf16.mxu0 0
    %142 = vmatpush1.bf16.msra.mxu0 %v128
    %143 = vmatprep.subr.bf16.mxu0 0
    %144 = vmatpush1.bf16.msra.mxu0 %v129
    %145 = vmatprep.subr.bf16.mxu0 0
    %146 = vmatpush1.bf16.msra.mxu0 %v130
    %147 = vmatprep.subr.bf16.mxu0 0
    %148 = vmatpush1.bf16.msra.mxu0 0
    %149 = vmatprep.subr.bf16.mxu0 0
    %150 = vmatpush1.bf16.msra.mxu0 0
    %151 = vmatprep.subr.bf16.mxu0 0
    %152 = vmatpush1.bf16.msra.mxu0 0
    %153 = vmatprep.subr.bf16.mxu0 0
    %154 = vmatpush1.bf16.msra.mxu0 0
    %155 = vmatprep.subr.bf16.mxu0 0
    %156 = vmatpush1.bf16.msra.mxu0 0
    %157 = vmatprep.subr.bf16.mxu0 0
    %158 = vmatpush1.bf16.msra.mxu0 0
    %159 = vmatprep.subr.bf16.mxu0 0
    %160 = vmatpush1.bf16.msra.mxu0 0
    %161 = vmatprep.subr.bf16.mxu0 0
    %162 = vmatpush1.bf16.msra.mxu0 0
    %163 = vmatprep.subr.bf16.mxu0 0
    %164 = vmatpush1.bf16.msra.mxu0 0
    %165 = vmatprep.subr.bf16.mxu0 0
    %166 = vmatpush1.bf16.msra.mxu0 0
    %167 = vmatprep.subr.bf16.mxu0 0
    %168 = vmatpush1.bf16.msra.mxu0 0
    %169 = vmatprep.subr.bf16.mxu0 0
    %170 = vmatpush1.bf16.msra.mxu0 0
    %171 = vmatprep.mubr.bf16.mxu0 0
    %172 = vmatmul.mubr.bf16.gmra.mrb[0].mxu0 %v137
    %v173 = vpop.f32.mrb[0].mxu0
    %v174 = vadd.f32 %v102, %v173
    %v175 = vpop.f32.mrb[0].mxu0
    %v176 = vpop.f32.mrb[0].mxu0
    %v177 = vpop.f32.mrb[0].mxu0
    %178 = vdwg.mxu0
    %vm179 = vcmask 74752
    %180 = vst.msk [vmem:[#allocation2] sm:$0x3] %vm179, %v174
    // Predicated region
    $region22: #{_lambda_.13} parent=1 // pred_check
      _
    $region23: #{_lambda_.13} parent=1 // pred_check_branch
      %182 = sbr.rel (0) target = $region25
    $region24: #{_lambda_.13} parent=1 // pred_region
      %s184 = ssub.s32 32, 32
      %185 = vsyncadd [#allocation3], %s184
      %s187 = sshll.u32 [#allocation2], 4
      %s188 = int_to_ptr.vmem [resolvable:$true] %s187
      %190 = dma.vmem_to_hbm [thread:$0]  %s188, 32, %s5, [#allocation3]
    $region25: #{_lambda_.13} parent=1 // pred_fallthru
      _
    // Predicated region
    $region26: #{_lambda_.13} parent=1 // pred_check
      _
    $region27: #{_lambda_.13} parent=1 // pred_check_branch
      %192 = sbr.rel (0) target = $region29
    $region28: #{_lambda_.13} parent=1 // pred_region
      %193 = dma.done [#allocation3], 32
    $region29: #{_lambda_.13} parent=1 // pred_fallthru
      _
    %194 = vsyncpa [#allocation3], 1

// kernel: _lambda_.11
$region0: #{_lambda_.11}
  #allocation0 [shape = 'u32[]', space=smem, size = 0x4, offset = 0x4, fixed_abs, tag = 'smem constant byte address 0x4 - core index']
  #allocation1 [shape = 'u32[144,128]{1,0:T(1,128)}', space=vmem, size = 0x12000, scoped, tag = 'internal scratch']
  %s0 = inlined_call_operand.vmem [shape: f32[2,4,64], index: 0, kind: input, shape index: {}]
  %s1 = inlined_call_operand.vmem [shape: bf16[64,192], index: 1, kind: input, shape index: {}]
  %s2 = inlined_call_operand.vmem [shape: f32[1,192], index: 2, kind: input, shape index: {}]
  %s3 = inlined_call_operand.vmem [shape: bf16[64,64], index: 3, kind: input, shape index: {}]
  %s4 = inlined_call_operand.vmem [shape: f32[1,64], index: 4, kind: input, shape index: {}, may-alias: {4,8,12,14}]
  %s5 = inlined_call_operand.vmem [shape: f32[4,4,4], index: 5, kind: input, shape index: {}]
  %s6 = inlined_call_operand.vmem [shape: f32[4,1,1], index: 6, kind: input, shape index: {}]
  %s7 = inlined_call_operand.vmem [shape: f32[1,64], index: 7, kind: input, shape index: {}, may-alias: {7,13}]
  %s8 = inlined_call_operand.vmem [shape: f32[1,64], index: 8, kind: input, shape index: {}, may-alias: {4,8,12,14}]
  %s9 = inlined_call_operand.vmem [shape: bf16[64,256], index: 9, kind: input, shape index: {}]
  %s10 = inlined_call_operand.vmem [shape: f32[1,256], index: 10, kind: input, shape index: {}]
  %s11 = inlined_call_operand.vmem [shape: bf16[256,64], index: 11, kind: input, shape index: {}]
  %s12 = inlined_call_operand.vmem [shape: f32[1,64], index: 12, kind: input, shape index: {}, may-alias: {4,8,12,14}]
  %s13 = inlined_call_operand.vmem [shape: f32[1,64], index: 13, kind: input, shape index: {}, may-alias: {7,13}]
  %s14 = inlined_call_operand.vmem [shape: f32[1,64], index: 14, kind: input, shape index: {}, may-alias: {4,8,12,14}]
  %s15 = inlined_call_operand.vmem [shape: f32[2,4,64], index: 15, kind: output, shape index: {}]
  %s16 = sld [smem:[#allocation0]]
  $region93: #{_lambda_.11} parent=0
    _
  %s18 = ssub.s32 1, %s16
  %s19 = scalar_select 0, %s18, %s16
  loop: start=0, step=1, limit=4
  $region2: #{_lambda_.11} parent=0 // loop_pre_header
    _
  $region3: #{_lambda_.11} parent=0 // loop_header
    %s21 = sphi 0, %s25
    %p22 = scmp.ge.s32.totalorder %s21, 4
    %s31 = sphi 0, %s33
    %s34 = sphi 0, %s31
    %s35 = sphi 0, %s34
    %s51 = sphi 0, %s35
    %s55 = sphi 0, %s55
    %s57 = sphi 0, %s55
    %s58 = sphi 0, %s57
    %s72 = sphi 0, %s58
    %s76 = sphi 0, %s76
    %s78 = sphi 0, %s76
    %s79 = sphi 0, %s78
    %s93 = sphi 0, %s79
    %s97 = sphi 0, %s97
    %s99 = sphi 0, %s97
    %s100 = sphi 0, %s99
    %s114 = sphi 0, %s100
    %s118 = sphi 0, %s118
    %s120 = sphi 0, %s118
    %s121 = sphi 0, %s120
    %s135 = sphi 0, %s121
    %s139 = sphi 0, %s139
    %s141 = sphi 0, %s139
    %s142 = sphi 0, %s141
    %s156 = sphi 0, %s142
    %s160 = sphi 0, %s160
    %s162 = sphi 0, %s160
    %s163 = sphi 0, %s162
    %s177 = sphi 0, %s163
    %s181 = sphi 0, %s181
    %s183 = sphi 0, %s181
    %s184 = sphi 0, %s183
    %s198 = sphi 0, %s184
    %s202 = sphi 0, %s202
    %s204 = sphi 0, %s202
    %s205 = sphi 0, %s204
    %s219 = sphi 0, %s205
    %s223 = sphi 0, %s223
    %s225 = sphi 0, %s223
    %s226 = sphi 0, %s225
    %s240 = sphi 0, %s226
    %s244 = sphi 0, %s244
    %s246 = sphi 0, %s244
    %s247 = sphi 0, %s246
    %s261 = sphi 0, %s247
    %s265 = sphi 0, %s265
    %s267 = sphi 0, %s265
    %s268 = sphi 0, %s267
    %s282 = sphi 0, %s268
    %s286 = sphi 0, %s286
    %s288 = sphi 0, %s286
    %s289 = sphi 0, %s288
    %s303 = sphi 0, %s289
    %s307 = sphi 0, %s307
    %s309 = sphi 0, %s307
    %s310 = sphi 0, %s309
    %s324 = sphi 0, %s310
    %s328 = sphi 0, %s328
    %s330 = sphi 0, %s328
    %s331 = sphi 0, %s330
    %s345 = sphi 0, %s331
    %s351 = sphi 0, %s353
    %s354 = sphi 0, %s351
    %s355 = sphi 0, %s354
    %s371 = sphi 0, %s355
  $region4: #{_lambda_.11} parent=0 // loop_header_branch
    %24 = sbr.rel (%p22) target = $region8
  $region5: #{_lambda_.11} parent=0 // loop_body
    %s26 = ssub.s32 %s21, 1
    %s27 = ssub.s32 %s21, 2
    %s28 = sadd.s32 %s21, 1
    %s29 = ssub.s32 %s21, %s28
    %p30 = scmp.eq.s32.totalorder %s29, 0
    %s32 = sadd.s32 %s31, 1
    %s33 = scalar_select %p30, %s31, %s32
    %p36 = pneg %p30
    %p37 = scmp.eq.s32.totalorder %s21, 1
    %p38 = por %p36, %p37
    %p39 = scmp.ne.s32.totalorder %s31, %s34
    %p40 = scmp.eq.s32.totalorder %s21, 0
    %p41 = por %p39, %p40
    %p42 = scmp.ne.s32.totalorder %s31, %s34
    %p43 = scmp.eq.s32.totalorder %s26, 1
    %p44 = por %p42, %p43
    %p45 = scmp.ne.s32.totalorder %s34, %s35
    %p46 = scmp.eq.s32.totalorder %s26, 0
    %p47 = por %p45, %p46
    %p48 = scmp.ne.s32.totalorder %s34, %s35
    %p49 = scmp.eq.s32.totalorder %s27, 1
    %p50 = por %p48, %p49
    %p52 = scmp.ne.s32.totalorder %s35, %s51
    %p53 = scmp.eq.s32.totalorder %s27, 0
    %p54 = por %p52, %p53
    %s56 = sadd.s32 %s55, 1
    %p59 = scmp.eq.s32.totalorder %s21, 1
    %p60 = scmp.ne.s32.totalorder %s55, %s57
    %p61 = scmp.eq.s32.totalorder %s21, 0
    %p62 = por %p60, %p61
    %p63 = scmp.ne.s32.totalorder %s55, %s57
    %p64 = scmp.eq.s32.totalorder %s26, 1
    %p65 = por %p63, %p64
    %p66 = scmp.ne.s32.totalorder %s57, %s58
    %p67 = scmp.eq.s32.totalorder %s26, 0
    %p68 = por %p66, %p67
    %p69 = scmp.ne.s32.totalorder %s57, %s58
    %p70 = scmp.eq.s32.totalorder %s27, 1
    %p71 = por %p69, %p70
    %p73 = scmp.ne.s32.totalorder %s58, %s72
    %p74 = scmp.eq.s32.totalorder %s27, 0
    %p75 = por %p73, %p74
    %s77 = sadd.s32 %s76, 1
    %p80 = scmp.eq.s32.totalorder %s21, 1
    %p81 = scmp.ne.s32.totalorder %s76, %s78
    %p82 = scmp.eq.s32.totalorder %s21, 0
    %p83 = por %p81, %p82
    %p84 = scmp.ne.s32.totalorder %s76, %s78
    %p85 = scmp.eq.s32.totalorder %s26, 1
    %p86 = por %p84, %p85
    %p87 = scmp.ne.s32.totalorder %s78, %s79
    %p88 = scmp.eq.s32.totalorder %s26, 0
    %p89 = por %p87, %p88
    %p90 = scmp.ne.s32.totalorder %s78, %s79
    %p91 = scmp.eq.s32.totalorder %s27, 1
    %p92 = por %p90, %p91
    %p94 = scmp.ne.s32.totalorder %s79, %s93
    %p95 = scmp.eq.s32.totalorder %s27, 0
    %p96 = por %p94, %p95
    %s98 = sadd.s32 %s97, 1
    %p101 = scmp.eq.s32.totalorder %s21, 1
    %p102 = scmp.ne.s32.totalorder %s97, %s99
    %p103 = scmp.eq.s32.totalorder %s21, 0
    %p104 = por %p102, %p103
    %p105 = scmp.ne.s32.totalorder %s97, %s99
    %p106 = scmp.eq.s32.totalorder %s26, 1
    %p107 = por %p105, %p106
    %p108 = scmp.ne.s32.totalorder %s99, %s100
    %p109 = scmp.eq.s32.totalorder %s26, 0
    %p110 = por %p108, %p109
    %p111 = scmp.ne.s32.totalorder %s99, %s100
    %p112 = scmp.eq.s32.totalorder %s27, 1
    %p113 = por %p111, %p112
    %p115 = scmp.ne.s32.totalorder %s100, %s114
    %p116 = scmp.eq.s32.totalorder %s27, 0
    %p117 = por %p115, %p116
    %s119 = sadd.s32 %s118, 1
    %p122 = scmp.eq.s32.totalorder %s21, 1
    %p123 = scmp.ne.s32.totalorder %s118, %s120
    %p124 = scmp.eq.s32.totalorder %s21, 0
    %p125 = por %p123, %p124
    %p126 = scmp.ne.s32.totalorder %s118, %s120
    %p127 = scmp.eq.s32.totalorder %s26, 1
    %p128 = por %p126, %p127
    %p129 = scmp.ne.s32.totalorder %s120, %s121
    %p130 = scmp.eq.s32.totalorder %s26, 0
    %p131 = por %p129, %p130
    %p132 = scmp.ne.s32.totalorder %s120, %s121
    %p133 = scmp.eq.s32.totalorder %s27, 1
    %p134 = por %p132, %p133
    %p136 = scmp.ne.s32.totalorder %s121, %s135
    %p137 = scmp.eq.s32.totalorder %s27, 0
    %p138 = por %p136, %p137
    %s140 = sadd.s32 %s139, 1
    %p143 = scmp.eq.s32.totalorder %s21, 1
    %p144 = scmp.ne.s32.totalorder %s139, %s141
    %p145 = scmp.eq.s32.totalorder %s21, 0
    %p146 = por %p144, %p145
    %p147 = scmp.ne.s32.totalorder %s139, %s141
    %p148 = scmp.eq.s32.totalorder %s26, 1
    %p149 = por %p147, %p148
    %p150 = scmp.ne.s32.totalorder %s141, %s142
    %p151 = scmp.eq.s32.totalorder %s26, 0
    %p152 = por %p150, %p151
    %p153 = scmp.ne.s32.totalorder %s141, %s142
    %p154 = scmp.eq.s32.totalorder %s27, 1
    %p155 = por %p153, %p154
    %p157 = scmp.ne.s32.totalorder %s142, %s156
    %p158 = scmp.eq.s32.totalorder %s27, 0
    %p159 = por %p157, %p158
    %s161 = sadd.s32 %s160, 1
    %p164 = scmp.eq.s32.totalorder %s21, 1
    %p165 = scmp.ne.s32.totalorder %s160, %s162
    %p166 = scmp.eq.s32.totalorder %s21, 0
    %p167 = por %p165, %p166
    %p168 = scmp.ne.s32.totalorder %s160, %s162
    %p169 = scmp.eq.s32.totalorder %s26, 1
    %p170 = por %p168, %p169
    %p171 = scmp.ne.s32.totalorder %s162, %s163
    %p172 = scmp.eq.s32.totalorder %s26, 0
    %p173 = por %p171, %p172
    %p174 = scmp.ne.s32.totalorder %s162, %s163
    %p175 = scmp.eq.s32.totalorder %s27, 1
    %p176 = por %p174, %p175
    %p178 = scmp.ne.s32.totalorder %s163, %s177
    %p179 = scmp.eq.s32.totalorder %s27, 0
    %p180 = por %p178, %p179
    %s182 = sadd.s32 %s181, 1
    %p185 = scmp.eq.s32.totalorder %s21, 1
    %p186 = scmp.ne.s32.totalorder %s181, %s183
    %p187 = scmp.eq.s32.totalorder %s21, 0
    %p188 = por %p186, %p187
    %p189 = scmp.ne.s32.totalorder %s181, %s183
    %p190 = scmp.eq.s32.totalorder %s26, 1
    %p191 = por %p189, %p190
    %p192 = scmp.ne.s32.totalorder %s183, %s184
    %p193 = scmp.eq.s32.totalorder %s26, 0
    %p194 = por %p192, %p193
    %p195 = scmp.ne.s32.totalorder %s183, %s184
    %p196 = scmp.eq.s32.totalorder %s27, 1
    %p197 = por %p195, %p196
    %p199 = scmp.ne.s32.totalorder %s184, %s198
    %p200 = scmp.eq.s32.totalorder %s27, 0
    %p201 = por %p199, %p200
    %s203 = sadd.s32 %s202, 1
    %p206 = scmp.eq.s32.totalorder %s21, 1
    %p207 = scmp.ne.s32.totalorder %s202, %s204
    %p208 = scmp.eq.s32.totalorder %s21, 0
    %p209 = por %p207, %p208
    %p210 = scmp.ne.s32.totalorder %s202, %s204
    %p211 = scmp.eq.s32.totalorder %s26, 1
    %p212 = por %p210, %p211
    %p213 = scmp.ne.s32.totalorder %s204, %s205
    %p214 = scmp.eq.s32.totalorder %s26, 0
    %p215 = por %p213, %p214
    %p216 = scmp.ne.s32.totalorder %s204, %s205
    %p217 = scmp.eq.s32.totalorder %s27, 1
    %p218 = por %p216, %p217
    %p220 = scmp.ne.s32.totalorder %s205, %s219
    %p221 = scmp.eq.s32.totalorder %s27, 0
    %p222 = por %p220, %p221
    %s224 = sadd.s32 %s223, 1
    %p227 = scmp.eq.s32.totalorder %s21, 1
    %p228 = scmp.ne.s32.totalorder %s223, %s225
    %p229 = scmp.eq.s32.totalorder %s21, 0
    %p230 = por %p228, %p229
    %p231 = scmp.ne.s32.totalorder %s223, %s225
    %p232 = scmp.eq.s32.totalorder %s26, 1
    %p233 = por %p231, %p232
    %p234 = scmp.ne.s32.totalorder %s225, %s226
    %p235 = scmp.eq.s32.totalorder %s26, 0
    %p236 = por %p234, %p235
    %p237 = scmp.ne.s32.totalorder %s225, %s226
    %p238 = scmp.eq.s32.totalorder %s27, 1
    %p239 = por %p237, %p238
    %p241 = scmp.ne.s32.totalorder %s226, %s240
    %p242 = scmp.eq.s32.totalorder %s27, 0
    %p243 = por %p241, %p242
    %s245 = sadd.s32 %s244, 1
    %p248 = scmp.eq.s32.totalorder %s21, 1
    %p249 = scmp.ne.s32.totalorder %s244, %s246
    %p250 = scmp.eq.s32.totalorder %s21, 0
    %p251 = por %p249, %p250
    %p252 = scmp.ne.s32.totalorder %s244, %s246
    %p253 = scmp.eq.s32.totalorder %s26, 1
    %p254 = por %p252, %p253
    %p255 = scmp.ne.s32.totalorder %s246, %s247
    %p256 = scmp.eq.s32.totalorder %s26, 0
    %p257 = por %p255, %p256
    %p258 = scmp.ne.s32.totalorder %s246, %s247
    %p259 = scmp.eq.s32.totalorder %s27, 1
    %p260 = por %p258, %p259
    %p262 = scmp.ne.s32.totalorder %s247, %s261
    %p263 = scmp.eq.s32.totalorder %s27, 0
    %p264 = por %p262, %p263
    %s266 = sadd.s32 %s265, 1
    %p269 = scmp.eq.s32.totalorder %s21, 1
    %p270 = scmp.ne.s32.totalorder %s265, %s267
    %p271 = scmp.eq.s32.totalorder %s21, 0
    %p272 = por %p270, %p271
    %p273 = scmp.ne.s32.totalorder %s265, %s267
    %p274 = scmp.eq.s32.totalorder %s26, 1
    %p275 = por %p273, %p274
    %p276 = scmp.ne.s32.totalorder %s267, %s268
    %p277 = scmp.eq.s32.totalorder %s26, 0
    %p278 = por %p276, %p277
    %p279 = scmp.ne.s32.totalorder %s267, %s268
    %p280 = scmp.eq.s32.totalorder %s27, 1
    %p281 = por %p279, %p280
    %p283 = scmp.ne.s32.totalorder %s268, %s282
    %p284 = scmp.eq.s32.totalorder %s27, 0
    %p285 = por %p283, %p284
    %s287 = sadd.s32 %s286, 1
    %p290 = scmp.eq.s32.totalorder %s21, 1
    %p291 = scmp.ne.s32.totalorder %s286, %s288
    %p292 = scmp.eq.s32.totalorder %s21, 0
    %p293 = por %p291, %p292
    %p294 = scmp.ne.s32.totalorder %s286, %s288
    %p295 = scmp.eq.s32.totalorder %s26, 1
    %p296 = por %p294, %p295
    %p297 = scmp.ne.s32.totalorder %s288, %s289
    %p298 = scmp.eq.s32.totalorder %s26, 0
    %p299 = por %p297, %p298
    %p300 = scmp.ne.s32.totalorder %s288, %s289
    %p301 = scmp.eq.s32.totalorder %s27, 1
    %p302 = por %p300, %p301
    %p304 = scmp.ne.s32.totalorder %s289, %s303
    %p305 = scmp.eq.s32.totalorder %s27, 0
    %p306 = por %p304, %p305
    %s308 = sadd.s32 %s307, 1
    %p311 = scmp.eq.s32.totalorder %s21, 1
    %p312 = scmp.ne.s32.totalorder %s307, %s309
    %p313 = scmp.eq.s32.totalorder %s21, 0
    %p314 = por %p312, %p313
    %p315 = scmp.ne.s32.totalorder %s307, %s309
    %p316 = scmp.eq.s32.totalorder %s26, 1
    %p317 = por %p315, %p316
    %p318 = scmp.ne.s32.totalorder %s309, %s310
    %p319 = scmp.eq.s32.totalorder %s26, 0
    %p320 = por %p318, %p319
    %p321 = scmp.ne.s32.totalorder %s309, %s310
    %p322 = scmp.eq.s32.totalorder %s27, 1
    %p323 = por %p321, %p322
    %p325 = scmp.ne.s32.totalorder %s310, %s324
    %p326 = scmp.eq.s32.totalorder %s27, 0
    %p327 = por %p325, %p326
    %s329 = sadd.s32 %s328, 1
    %p332 = scmp.eq.s32.totalorder %s21, 1
    %p333 = scmp.ne.s32.totalorder %s328, %s330
    %p334 = scmp.eq.s32.totalorder %s21, 0
    %p335 = por %p333, %p334
    %p336 = scmp.ne.s32.totalorder %s328, %s330
    %p337 = scmp.eq.s32.totalorder %s26, 1
    %p338 = por %p336, %p337
    %p339 = scmp.ne.s32.totalorder %s330, %s331
    %p340 = scmp.eq.s32.totalorder %s26, 0
    %p341 = por %p339, %p340
    %p342 = scmp.ne.s32.totalorder %s330, %s331
    %p343 = scmp.eq.s32.totalorder %s27, 1
    %p344 = por %p342, %p343
    %p346 = scmp.ne.s32.totalorder %s331, %s345
    %p347 = scmp.eq.s32.totalorder %s27, 0
    %p348 = por %p346, %p347
    %s349 = ssub.s32 %s21, %s28
    %p350 = scmp.eq.s32.totalorder %s349, 0
    %s352 = sadd.s32 %s351, 1
    %s353 = scalar_select %p350, %s351, %s352
    %p356 = pneg %p350
    %p357 = scmp.eq.s32.totalorder %s21, 1
    %p358 = por %p356, %p357
    %p359 = scmp.ne.s32.totalorder %s351, %s354
    %p360 = scmp.eq.s32.totalorder %s21, 0
    %p361 = por %p359, %p360
    %p362 = scmp.ne.s32.totalorder %s351, %s354
    %p363 = scmp.eq.s32.totalorder %s26, 1
    %p364 = por %p362, %p363
    %p365 = scmp.ne.s32.totalorder %s354, %s355
    %p366 = scmp.eq.s32.totalorder %s26, 0
    %p367 = por %p365, %p366
    %p368 = scmp.ne.s32.totalorder %s354, %s355
    %p369 = scmp.eq.s32.totalorder %s27, 1
    %p370 = por %p368, %p369
    %p372 = scmp.ne.s32.totalorder %s355, %s371
    %p373 = scmp.eq.s32.totalorder %s27, 0
    %p374 = por %p372, %p373
    %p375 = scmp.le.s32.totalorder 1, %s21
    %p376 = scmp.lt.s32.totalorder %s21, 3
    %p377 = pnand %p375, %p376
    %p378 = pneg %p377
    // Predicated region
    $region9: #{_lambda_.11} parent=5 // pred_check
      _
    $region10: #{_lambda_.11} parent=5 // pred_check_branch
      %380 = sbr.rel (%p377) target = $region12
    $region11: #{_lambda_.11} parent=5 // pred_region
      %s381 = ssub.s32 %s21, 1
      // Predicated region
      $region13: #{_lambda_.11} parent=11 // pred_check
        %p382 = pneg %p68
      $region14: #{_lambda_.11} parent=11 // pred_check_branch
        %384 = sbr.rel (%p382) target = $region16
      $region15: #{_lambda_.11} parent=11 // pred_region
        _
      $region16: #{_lambda_.11} parent=11 // pred_fallthru
        _
      // Predicated region
      $region17: #{_lambda_.11} parent=11 // pred_check
        %p385 = pneg %p89
      $region18: #{_lambda_.11} parent=11 // pred_check_branch
        %387 = sbr.rel (%p385) target = $region20
      $region19: #{_lambda_.11} parent=11 // pred_region
        _
      $region20: #{_lambda_.11} parent=11 // pred_fallthru
        _
      // Predicated region
      $region21: #{_lambda_.11} parent=11 // pred_check
        %p388 = pneg %p110
      $region22: #{_lambda_.11} parent=11 // pred_check_branch
        %390 = sbr.rel (%p388) target = $region24
      $region23: #{_lambda_.11} parent=11 // pred_region
        _
      $region24: #{_lambda_.11} parent=11 // pred_fallthru
        _
      // Predicated region
      $region25: #{_lambda_.11} parent=11 // pred_check
        %p391 = pneg %p131
      $region26: #{_lambda_.11} parent=11 // pred_check_branch
        %393 = sbr.rel (%p391) target = $region28
      $region27: #{_lambda_.11} parent=11 // pred_region
        _
      $region28: #{_lambda_.11} parent=11 // pred_fallthru
        _
      // Predicated region
      $region29: #{_lambda_.11} parent=11 // pred_check
        %p394 = pneg %p152
      $region30: #{_lambda_.11} parent=11 // pred_check_branch
        %396 = sbr.rel (%p394) target = $region32
      $region31: #{_lambda_.11} parent=11 // pred_region
        _
      $region32: #{_lambda_.11} parent=11 // pred_fallthru
        _
      // Predicated region
      $region33: #{_lambda_.11} parent=11 // pred_check
        %p397 = pneg %p173
      $region34: #{_lambda_.11} parent=11 // pred_check_branch
        %399 = sbr.rel (%p397) target = $region36
      $region35: #{_lambda_.11} parent=11 // pred_region
        _
      $region36: #{_lambda_.11} parent=11 // pred_fallthru
        _
      // Predicated region
      $region37: #{_lambda_.11} parent=11 // pred_check
        %p400 = pneg %p194
      $region38: #{_lambda_.11} parent=11 // pred_check_branch
        %402 = sbr.rel (%p400) target = $region40
      $region39: #{_lambda_.11} parent=11 // pred_region
        _
      $region40: #{_lambda_.11} parent=11 // pred_fallthru
        _
      // Predicated region
      $region41: #{_lambda_.11} parent=11 // pred_check
        %p403 = pneg %p215
      $region42: #{_lambda_.11} parent=11 // pred_check_branch
        %405 = sbr.rel (%p403) target = $region44
      $region43: #{_lambda_.11} parent=11 // pred_region
        _
      $region44: #{_lambda_.11} parent=11 // pred_fallthru
        _
      // Predicated region
      $region45: #{_lambda_.11} parent=11 // pred_check
        %p406 = pneg %p236
      $region46: #{_lambda_.11} parent=11 // pred_check_branch
        %408 = sbr.rel (%p406) target = $region48
      $region47: #{_lambda_.11} parent=11 // pred_region
        _
      $region48: #{_lambda_.11} parent=11 // pred_fallthru
        _
      // Predicated region
      $region49: #{_lambda_.11} parent=11 // pred_check
        %p409 = pneg %p257
      $region50: #{_lambda_.11} parent=11 // pred_check_branch
        %411 = sbr.rel (%p409) target = $region52
      $region51: #{_lambda_.11} parent=11 // pred_region
        _
      $region52: #{_lambda_.11} parent=11 // pred_fallthru
        _
      // Predicated region
      $region53: #{_lambda_.11} parent=11 // pred_check
        %p412 = pneg %p278
      $region54: #{_lambda_.11} parent=11 // pred_check_branch
        %414 = sbr.rel (%p412) target = $region56
      $region55: #{_lambda_.11} parent=11 // pred_region
        _
      $region56: #{_lambda_.11} parent=11 // pred_fallthru
        _
      // Predicated region
      $region57: #{_lambda_.11} parent=11 // pred_check
        %p415 = pneg %p299
      $region58: #{_lambda_.11} parent=11 // pred_check_branch
        %417 = sbr.rel (%p415) target = $region60
      $region59: #{_lambda_.11} parent=11 // pred_region
        _
      $region60: #{_lambda_.11} parent=11 // pred_fallthru
        _
      // Predicated region
      $region61: #{_lambda_.11} parent=11 // pred_check
        %p418 = pneg %p320
      $region62: #{_lambda_.11} parent=11 // pred_check_branch
        %420 = sbr.rel (%p418) target = $region64
      $region63: #{_lambda_.11} parent=11 // pred_region
        _
      $region64: #{_lambda_.11} parent=11 // pred_fallthru
        _
      // Predicated region
      $region65: #{_lambda_.11} parent=11 // pred_check
        %p421 = pneg %p341
      $region66: #{_lambda_.11} parent=11 // pred_check_branch
        %423 = sbr.rel (%p421) target = $region68
      $region67: #{_lambda_.11} parent=11 // pred_region
        _
      $region68: #{_lambda_.11} parent=11 // pred_fallthru
        _
    $region12: #{_lambda_.11} parent=5 // pred_fallthru
      _
    %p424 = scmp.lt.s32.totalorder %s21, 2
    // Predicated region
    $region69: #{_lambda_.11} parent=5 // pred_check
      %p425 = pneg %p424
    $region70: #{_lambda_.11} parent=5 // pred_check_branch
      %427 = sbr.rel (%p425) target = $region72
    $region71: #{_lambda_.11} parent=5 // pred_region
      // Predicated region
      $region73: #{_lambda_.11} parent=71 // pred_check
        %p428 = pneg %p41
      $region74: #{_lambda_.11} parent=71 // pred_check_branch
        %430 = sbr.rel (%p428) target = $region76
      $region75: #{_lambda_.11} parent=71 // pred_region
        %p431 = scmp.lt.s32.totalorder %s21, 1
        %s432 = scalar_select %p431, %s21, 1
        %s433 = smul.addr %s432, 4
        %s434 = scalar_lea.vmem %s0, %s433
      $region76: #{_lambda_.11} parent=71 // pred_fallthru
        _
    $region72: #{_lambda_.11} parent=5 // pred_fallthru
      _
    %p435 = scmp.le.s32.totalorder 1, %s21
    %p436 = scmp.lt.s32.totalorder %s21, 3
    %p437 = pnand %p435, %p436
    %p438 = pneg %p437
    // Predicated region
    $region77: #{_lambda_.11} parent=5 // pred_check
      _
    $region78: #{_lambda_.11} parent=5 // pred_check_branch
      %440 = sbr.rel (%p437) target = $region80
    $region79: #{_lambda_.11} parent=5 // pred_region
      %s441 = ssub.s32 %s21, 1
      %p442 = scmp.lt.s32.totalorder %s26, 1
      %s443 = scalar_select %p442, %s26, 1
      %s444 = smul.addr %s443, 4
      %s445 = scalar_lea.vmem %s0, %s444
      %p446 = pneg %p47
      %p447 = pneg %p44
      %p448 = pneg %p68
      %p449 = pneg %p65
      %p450 = pneg %p89
      %p451 = pneg %p86
      %p452 = pneg %p110
      %p453 = pneg %p107
      %p454 = pneg %p131
      %p455 = pneg %p128
      %p456 = pneg %p152
      %p457 = pneg %p149
      %p458 = pneg %p173
      %p459 = pneg %p170
      %p460 = pneg %p194
      %p461 = pneg %p191
      %p462 = pneg %p215
      %p463 = pneg %p212
      %p464 = pneg %p236
      %p465 = pneg %p233
      %p466 = pneg %p257
      %p467 = pneg %p254
      %p468 = pneg %p278
      %p469 = pneg %p275
      %p470 = pneg %p299
      %p471 = pneg %p296
      %p472 = pneg %p320
      %p473 = pneg %p317
      %p474 = pneg %p341
      %p475 = pneg %p338
      %p476 = pneg %p367
      %p477 = pneg %p364
      %p478 = scmp.lt.s32.totalorder %s26, 1
      %s479 = scalar_select %p478, %s26, 1
      %s480 = smul.addr %s479, 4
      %s481 = scalar_lea.vmem %s15, %s480
      %p482 = scmp.lt.s32.totalorder %s26, 1
      %s483 = scalar_select %p482, %s26, 1
      %s484 = smul.addr %s483, 4
      %s485 = scalar_lea.vmem %s0, %s484
      %p486 = scmp.lt.s32.totalorder %s26, 1
      %s487 = scalar_select %p486, %s26, 1
      %s488 = smul.addr %s487, 4
      %s489 = scalar_lea.vmem %s15, %s488
      %v491 = vld [vmem:[%s485] sm:$0xf]
      %v492 = vpack.c.bf16 %v491, %v491
      %v493 = vld [vmem:[%s1] sm:$0xff]
      %v494 = vld [vmem:[%s1 + $0x8] sm:$0xff]
      %v495 = vld [vmem:[%s1 + $0x10] sm:$0xff]
      %v496 = vld [vmem:[%s1 + $0x18] sm:$0xff]
      %v497 = vld [vmem:[%s1 + $0x20] sm:$0xff]
      %v498 = vld [vmem:[%s1 + $0x28] sm:$0xff]
      %v499 = vld [vmem:[%s1 + $0x30] sm:$0xff]
      %v500 = vld [vmem:[%s1 + $0x38] sm:$0xff]
      %v501 = vld [vmem:[%s2] sm:$0x3]
      %v503 = vlaneseq
      %v504 = vshrl.u32 %v503, 7
      %v505 = vsub.s32 0, %v504
      %v506 = vrot.slane %v501, %v505
      %v507 = vlaneseq
      %v508 = vshrl.u32 %v507, 7
      %v509 = vsub.s32 1, %v508
      %v510 = vrot.slane %v501, %v509
      %v521 = vunpack.c.l.b16 %v493
      %v522 = vunpack.c.h.b16 %v493
      %v523 = vunpack.c.l.b16 %v494
      %v524 = vunpack.c.h.b16 %v494
      %v525 = vunpack.c.l.b16 %v495
      %v526 = vunpack.c.h.b16 %v495
      %v527 = vunpack.c.l.b16 %v496
      %v528 = vunpack.c.h.b16 %v496
      %v529 = vunpack.c.l.b16 %v497
      %v530 = vunpack.c.h.b16 %v497
      %v531 = vunpack.c.l.b16 %v498
      %v532 = vunpack.c.h.b16 %v498
      %v533 = vunpack.c.l.b16 %v499
      %v534 = vunpack.c.h.b16 %v499
      %v535 = vunpack.c.l.b16 %v500
      %v536 = vunpack.c.h.b16 %v500
      %v537 = vpack.c.b16 %v523, %v521
      %v538 = vpack.c.b16 %v524, %v522
      %v539 = vpack.c.b16 %v527, %v525
      %v540 = vpack.c.b16 %v528, %v526
      %v541 = vpack.c.b16 %v531, %v529
      %v542 = vpack.c.b16 %v532, %v530
      %v543 = vpack.c.b16 %v535, %v533
      %v544 = vpack.c.b16 %v536, %v534
      %vm553 = vcmask 523264
      %v555 = vsel %vm553, %v492, 0
      %557 = vmatprep.subr.bf16.mxu0 %v538
      %558 = vmatpush1.bf16.msra.mxu0 %v537
      %559 = vmatprep.subr.bf16.mxu0 %v540
      %560 = vmatpush1.bf16.msra.mxu0 %v539
      %561 = vmatprep.subr.bf16.mxu0 %v542
      %562 = vmatpush1.bf16.msra.mxu0 %v541
      %563 = vmatprep.subr.bf16.mxu0 %v544
      %564 = vmatpush1.bf16.msra.mxu0 %v543
      %565 = vmatprep.subr.bf16.mxu0 0
      %566 = vmatpush1.bf16.msra.mxu0 0
      %567 = vmatprep.subr.bf16.mxu0 0
      %568 = vmatpush1.bf16.msra.mxu0 0
      %569 = vmatprep.subr.bf16.mxu0 0
      %570 = vmatpush1.bf16.msra.mxu0 0
      %571 = vmatprep.subr.bf16.mxu0 0
      %572 = vmatpush1.bf16.msra.mxu0 0
      %573 = vmatprep.subr.bf16.mxu0 0
      %574 = vmatpush1.bf16.msra.mxu0 0
      %575 = vmatprep.subr.bf16.mxu0 0
      %576 = vmatpush1.bf16.msra.mxu0 0
      %577 = vmatprep.subr.bf16.mxu0 0
      %578 = vmatpush1.bf16.msra.mxu0 0
      %579 = vmatprep.subr.bf16.mxu0 0
      %580 = vmatpush1.bf16.msra.mxu0 0
      %581 = vmatprep.subr.bf16.mxu0 0
      %582 = vmatpush1.bf16.msra.mxu0 0
      %583 = vmatprep.subr.bf16.mxu0 0
      %584 = vmatpush1.bf16.msra.mxu0 0
      %585 = vmatprep.subr.bf16.mxu0 0
      %586 = vmatpush1.bf16.msra.mxu0 0
      %587 = vmatprep.subr.bf16.mxu0 0
      %588 = vmatpush1.bf16.msra.mxu0 0
      %589 = vmatprep.mubr.bf16.mxu0 0
      %590 = vmatmul.mubr.bf16.gmra.mrb[0].mxu0 %v555
      %v591 = vpop.f32.mrb[0].mxu0
      %v592 = vadd.f32 %v506, %v591
      %v593 = vpop.f32.mrb[0].mxu0
      %v594 = vadd.f32 %v510, %v593
      %v595 = vpop.f32.mrb[0].mxu0
      %v596 = vpop.f32.mrb[0].mxu0
      %597 = vdwg.mxu0
      %v598 = vmul.f32 %v592, %v592
      %vm599 = vcmask 125952
      %v600 = vsel %vm599, %v598, 0.0
      %601 = vadd.xlane.f32.xlu0 %v600
      %v602 = vpop.xlane.xlu0 %601
      %v603 = vmax.f32 %v602, 1e-24
      %v604 = vrsqrt.pop %v603
      %v605 = vmul.f32 %v592, %v604
      %607 = vrot.lane.b32.xlu0 %v598, 64
      %v608 = vpop.permute.xlu0 %607
      %v610 = vsel %vm599, %v608, 0.0
      %611 = vadd.xlane.f32.xlu0 %v610
      %v612 = vpop.xlane.xlu0 %611
      %v613 = vmax.f32 %v612, 1e-24
      %v614 = vrsqrt.pop %v613
      %v615 = vmul.f32 %v592, %v614
      %v616 = vpack.c.bf16 %v605, %v605
      %v617 = vpack.c.bf16 %v615, %v615
      %619 = vrot.lane.b32.xlu0 %v617, 64
      %v620 = vpop.permute.xlu0 %619
      %vm621 = vcmask 130048
      %v623 = vsel %vm621, %v616, 0
      %v626 = vsel %vm621, %v620, 0
      %628 = vmatprep.subr.bf16.mxu0 0
      %629 = vmatpush1.bf16.xpose.msra.mxu0 %v626
      %630 = vmatprep.subr.bf16.mxu0 0
      %631 = vmatpush1.bf16.xpose.msra.mxu0 0
      %632 = vmatprep.subr.bf16.mxu0 0
      %633 = vmatpush1.bf16.xpose.msra.mxu0 0
      %634 = vmatprep.subr.bf16.mxu0 0
      %635 = vmatpush1.bf16.xpose.msra.mxu0 0
      %636 = vmatprep.subr.bf16.mxu0 0
      %637 = vmatpush1.bf16.xpose.msra.mxu0 0
      %638 = vmatprep.subr.bf16.mxu0 0
      %639 = vmatpush1.bf16.xpose.msra.mxu0 0
      %640 = vmatprep.subr.bf16.mxu0 0
      %641 = vmatpush1.bf16.xpose.msra.mxu0 0
      %642 = vmatprep.subr.bf16.mxu0 0
      %643 = vmatpush1.bf16.xpose.msra.mxu0 0
      %644 = vmatprep.subr.bf16.mxu0 0
      %645 = vmatpush1.bf16.xpose.msra.mxu0 0
      %646 = vmatprep.subr.bf16.mxu0 0
      %647 = vmatpush1.bf16.xpose.msra.mxu0 0
      %648 = vmatprep.subr.bf16.mxu0 0
      %649 = vmatpush1.bf16.xpose.msra.mxu0 0
      %650 = vmatprep.subr.bf16.mxu0 0
      %651 = vmatpush1.bf16.xpose.msra.mxu0 0
      %652 = vmatprep.subr.bf16.mxu0 0
      %653 = vmatpush1.bf16.xpose.msra.mxu0 0
      %654 = vmatprep.subr.bf16.mxu0 0
      %655 = vmatpush1.bf16.xpose.msra.mxu0 0
      %656 = vmatprep.subr.bf16.mxu0 0
      %657 = vmatpush1.bf16.xpose.msra.mxu0 0
      %658 = vmatprep.subr.bf16.mxu0 0
      %659 = vmatpush1.bf16.xpose.msra.mxu0 0
      %660 = vmatprep.mubr.bf16.mxu0 0
      %661 = vmatmul.mubr.bf16.gmra.mrb[0].mxu0 %v623
      %v662 = vpop.f32.mrb[0].mxu0
      %v663 = vadd.f32 0.0, %v662
      %v664 = vpop.f32.mrb[0].mxu0
      %v665 = vpop.f32.mrb[0].mxu0
      %v666 = vpop.f32.mrb[0].mxu0
      %667 = vdwg.mxu0
      %v668 = vld [vmem:[%s6] sm:$0x1]
      %v670 = vlaneseq
      %v671 = vshrl.u32 %v670, 7
      %v672 = vsub.s32 0, %v671
      %v673 = vrot.slane %v668, %v672
      %674 = vset.pattern.permute.xlu0 0
      %675 = vperm.xlu0 %674, %v673
      %v676 = vpop.permute.xlu0 %675
      %v678 = vmul.f32 %v663, %v676
      %v679 = vld [vmem:[%s5] sm:$0xf]
      %v680 = vadd.f32 %v678, %v679
      %vm681 = vcmask 27648
      %v682 = vsel %vm681, %v680, -inf
      %683 = vmax.xlane.f32.xlu0 %v682
      %v684 = vpop.xlane.xlu0 %683
      %v685 = vsub.f32 %v680, %v684
      %v686 = vmul.f32 %v685, 1.442695
      %v687 = vpow.pop %v686
      %v688 = vsel %vm681, %v687, 0.0
      %689 = vadd.xlane.f32.xlu0 %v688
      %v690 = vpop.xlane.xlu0 %689
      %v691 = vrcp.pop %v690
      %v692 = vmul.f32 %v687, %v691
      %v693 = vpack.c.bf16 %v692, %v692
      %v694 = vpack.c.bf16 %v594, %v594
      %vm695 = vcmask 31744
      %v697 = vsel %vm695, %v693, 0
      %vm699 = vcmask 1041408
      %v701 = vsel %vm699, %v694, 0
      %703 = vmatprep.subr.bf16.mxu0 0
      %704 = vmatpush1.bf16.msra.mxu0 %v701
      %705 = vmatprep.subr.bf16.mxu0 0
      %706 = vmatpush1.bf16.msra.mxu0 0
      %707 = vmatprep.subr.bf16.mxu0 0
      %708 = vmatpush1.bf16.msra.mxu0 0
      %709 = vmatprep.subr.bf16.mxu0 0
      %710 = vmatpush1.bf16.msra.mxu0 0
      %711 = vmatprep.subr.bf16.mxu0 0
      %712 = vmatpush1.bf16.msra.mxu0 0
      %713 = vmatprep.subr.bf16.mxu0 0
      %714 = vmatpush1.bf16.msra.mxu0 0
      %715 = vmatprep.subr.bf16.mxu0 0
      %716 = vmatpush1.bf16.msra.mxu0 0
      %717 = vmatprep.subr.bf16.mxu0 0
      %718 = vmatpush1.bf16.msra.mxu0 0
      %719 = vmatprep.subr.bf16.mxu0 0
      %720 = vmatpush1.bf16.msra.mxu0 0
      %721 = vmatprep.subr.bf16.mxu0 0
      %722 = vmatpush1.bf16.msra.mxu0 0
      %723 = vmatprep.subr.bf16.mxu0 0
      %724 = vmatpush1.bf16.msra.mxu0 0
      %725 = vmatprep.subr.bf16.mxu0 0
      %726 = vmatpush1.bf16.msra.mxu0 0
      %727 = vmatprep.subr.bf16.mxu0 0
      %728 = vmatpush1.bf16.msra.mxu0 0
      %729 = vmatprep.subr.bf16.mxu0 0
      %730 = vmatpush1.bf16.msra.mxu0 0
      %731 = vmatprep.subr.bf16.mxu0 0
      %732 = vmatpush1.bf16.msra.mxu0 0
      %733 = vmatprep.subr.bf16.mxu0 0
      %734 = vmatpush1.bf16.msra.mxu0 0
      %735 = vmatprep.mubr.bf16.mxu0 0
      %736 = vmatmul.mubr.bf16.gmra.mrb[0].mxu0 %v697
      %v737 = vpop.f32.mrb[0].mxu0
      %v738 = vadd.f32 0.0, %v737
      %v739 = vpop.f32.mrb[0].mxu0
      %v740 = vpop.f32.mrb[0].mxu0
      %v741 = vpop.f32.mrb[0].mxu0
      %742 = vdwg.mxu0
      %743 = vrot.lane.b32.xlu0 %v598, 112
      %v744 = vpop.permute.xlu0 %743
      %v746 = vsel %vm599, %v744, 0.0
      %747 = vadd.xlane.f32.xlu0 %v746
      %v748 = vpop.xlane.xlu0 %747
      %v749 = vmax.f32 %v748, 1e-24
      %v750 = vrsqrt.pop %v749
      %v751 = vmul.f32 %v592, %v750
      %752 = vrot.lane.b32.xlu0 %v598, 48
      %v753 = vpop.permute.xlu0 %752
      %v755 = vsel %vm599, %v753, 0.0
      %756 = vadd.xlane.f32.xlu0 %v755
      %v757 = vpop.xlane.xlu0 %756
      %v758 = vmax.f32 %v757, 1e-24
      %v759 = vrsqrt.pop %v758
      %v760 = vmul.f32 %v592, %v759
      %v761 = vpack.c.bf16 %v751, %v751
      %v762 = vpack.c.bf16 %v760, %v760
      %764 = vrot.lane.b32.xlu0 %v761, 112
      %v765 = vpop.permute.xlu0 %764
      %767 = vrot.lane.b32.xlu0 %v762, 48
      %v768 = vpop.permute.xlu0 %767
      %v770 = vsel %vm621, %v765, 0
      %v773 = vsel %vm621, %v768, 0
      %775 = vmatprep.subr.bf16.mxu0 0
      %776 = vmatpush1.bf16.xpose.msra.mxu0 %v773
      %777 = vmatprep.subr.bf16.mxu0 0
      %778 = vmatpush1.bf16.xpose.msra.mxu0 0
      %779 = vmatprep.subr.bf16.mxu0 0
      %780 = vmatpush1.bf16.xpose.msra.mxu0 0
      %781 = vmatprep.subr.bf16.mxu0 0
      %782 = vmatpush1.bf16.xpose.msra.mxu0 0
      %783 = vmatprep.subr.bf16.mxu0 0
      %784 = vmatpush1.bf16.xpose.msra.mxu0 0
      %785 = vmatprep.subr.bf16.mxu0 0
      %786 = vmatpush1.bf16.xpose.msra.mxu0 0
      %787 = vmatprep.subr.bf16.mxu0 0
      %788 = vmatpush1.bf16.xpose.msra.mxu0 0
      %789 = vmatprep.subr.bf16.mxu0 0
      %790 = vmatpush1.bf16.xpose.msra.mxu0 0
      %791 = vmatprep.subr.bf16.mxu0 0
      %792 = vmatpush1.bf16.xpose.msra.mxu0 0
      %793 = vmatprep.subr.bf16.mxu0 0
      %794 = vmatpush1.bf16.xpose.msra.mxu0 0
      %795 = vmatprep.subr.bf16.mxu0 0
      %796 = vmatpush1.bf16.xpose.msra.mxu0 0
      %797 = vmatprep.subr.bf16.mxu0 0
      %798 = vmatpush1.bf16.xpose.msra.mxu0 0
      %799 = vmatprep.subr.bf16.mxu0 0
      %800 = vmatpush1.bf16.xpose.msra.mxu0 0
      %801 = vmatprep.subr.bf16.mxu0 0
      %802 = vmatpush1.bf16.xpose.msra.mxu0 0
      %803 = vmatprep.subr.bf16.mxu0 0
      %804 = vmatpush1.bf16.xpose.msra.mxu0 0
      %805 = vmatprep.subr.bf16.mxu0 0
      %806 = vmatpush1.bf16.xpose.msra.mxu0 0
      %807 = vmatprep.mubr.bf16.mxu0 0
      %808 = vmatmul.mubr.bf16.gmra.mrb[0].mxu0 %v770
      %v809 = vpop.f32.mrb[0].mxu0
      %v810 = vadd.f32 0.0, %v809
      %v811 = vpop.f32.mrb[0].mxu0
      %v812 = vpop.f32.mrb[0].mxu0
      %v813 = vpop.f32.mrb[0].mxu0
      %814 = vdwg.mxu0
      %s815 = scalar_lea.vmem %s6, 1
      %v816 = vld [vmem:[%s815] sm:$0x1]
      %v818 = vlaneseq
      %v819 = vshrl.u32 %v818, 7
      %v820 = vsub.s32 0, %v819
      %v821 = vrot.slane %v816, %v820
      %822 = vset.pattern.permute.xlu0 0
      %823 = vperm.xlu0 %822, %v821
      %v824 = vpop.permute.xlu0 %823
      %v826 = vmul.f32 %v810, %v824
      %s827 = scalar_lea.vmem %s5, 4
      %v828 = vld [vmem:[%s827] sm:$0xf]
      %v829 = vadd.f32 %v826, %v828
      %v830 = vsel %vm681, %v829, -inf
      %831 = vmax.xlane.f32.xlu0 %v830
      %v832 = vpop.xlane.xlu0 %831
      %v833 = vsub.f32 %v829, %v832
      %v834 = vmul.f32 %v833, 1.442695
      %v835 = vpow.pop %v834
      %v836 = vsel %vm681, %v835, 0.0
      %837 = vadd.xlane.f32.xlu0 %v836
      %v838 = vpop.xlane.xlu0 %837
      %v839 = vrcp.pop %v838
      %v840 = vmul.f32 %v835, %v839
      %v841 = vpack.c.bf16 %v840, %v840
      %843 = vrot.lane.b32.xlu0 %v694, 112
      %v844 = vpop.permute.xlu0 %843
      %v846 = vsel %vm695, %v841, 0
      %v849 = vsel %vm699, %v844, 0
      %851 = vmatprep.subr.bf16.mxu0 0
      %852 = vmatpush1.bf16.msra.mxu0 %v849
      %853 = vmatprep.subr.bf16.mxu0 0
      %854 = vmatpush1.bf16.msra.mxu0 0
      %855 = vmatprep.subr.bf16.mxu0 0
      %856 = vmatpush1.bf16.msra.mxu0 0
      %857 = vmatprep.subr.bf16.mxu0 0
      %858 = vmatpush1.bf16.msra.mxu0 0
      %859 = vmatprep.subr.bf16.mxu0 0
      %860 = vmatpush1.bf16.msra.mxu0 0
      %861 = vmatprep.subr.bf16.mxu0 0
      %862 = vmatpush1.bf16.msra.mxu0 0
      %863 = vmatprep.subr.bf16.mxu0 0
      %864 = vmatpush1.bf16.msra.mxu0 0
      %865 = vmatprep.subr.bf16.mxu0 0
      %866 = vmatpush1.bf16.msra.mxu0 0
      %867 = vmatprep.subr.bf16.mxu0 0
      %868 = vmatpush1.bf16.msra.mxu0 0
      %869 = vmatprep.subr.bf16.mxu0 0
      %870 = vmatpush1.bf16.msra.mxu0 0
      %871 = vmatprep.subr.bf16.mxu0 0
      %872 = vmatpush1.bf16.msra.mxu0 0
      %873 = vmatprep.subr.bf16.mxu0 0
      %874 = vmatpush1.bf16.msra.mxu0 0
      %875 = vmatprep.subr.bf16.mxu0 0
      %876 = vmatpush1.bf16.msra.mxu0 0
      %877 = vmatprep.subr.bf16.mxu0 0
      %878 = vmatpush1.bf16.msra.mxu0 0
      %879 = vmatprep.subr.bf16.mxu0 0
      %880 = vmatpush1.bf16.msra.mxu0 0
      %881 = vmatprep.subr.bf16.mxu0 0
      %882 = vmatpush1.bf16.msra.mxu0 0
      %883 = vmatprep.mubr.bf16.mxu0 0
      %884 = vmatmul.mubr.bf16.gmra.mrb[0].mxu0 %v846
      %v885 = vpop.f32.mrb[0].mxu0
      %v886 = vadd.f32 0.0, %v885
      %v887 = vpop.f32.mrb[0].mxu0
      %v888 = vpop.f32.mrb[0].mxu0
      %v889 = vpop.f32.mrb[0].mxu0
      %890 = vdwg.mxu0
      %891 = vrot.lane.b32.xlu0 %v598, 96
      %v892 = vpop.permute.xlu0 %891
      %v894 = vsel %vm599, %v892, 0.0
      %895 = vadd.xlane.f32.xlu0 %v894
      %v896 = vpop.xlane.xlu0 %895
      %v897 = vmax.f32 %v896, 1e-24
      %v898 = vrsqrt.pop %v897
      %v899 = vmul.f32 %v592, %v898
      %900 = vrot.lane.b32.xlu0 %v598, 32
      %v901 = vpop.permute.xlu0 %900
      %v903 = vsel %vm599, %v901, 0.0
      %904 = vadd.xlane.f32.xlu0 %v903
      %v905 = vpop.xlane.xlu0 %904
      %v906 = vmax.f32 %v905, 1e-24
      %v907 = vrsqrt.pop %v906
      %v908 = vmul.f32 %v592, %v907
      %v909 = vpack.c.bf16 %v899, %v899
      %v910 = vpack.c.bf16 %v908, %v908
      %912 = vrot.lane.b32.xlu0 %v909, 96
      %v913 = vpop.permute.xlu0 %912
      %915 = vrot.lane.b32.xlu0 %v910, 32
      %v916 = vpop.permute.xlu0 %915
      %v918 = vsel %vm621, %v913, 0
      %v921 = vsel %vm621, %v916, 0
      %923 = vmatprep.subr.bf16.mxu0 0
      %924 = vmatpush1.bf16.xpose.msra.mxu0 %v921
      %925 = vmatprep.subr.bf16.mxu0 0
      %926 = vmatpush1.bf16.xpose.msra.mxu0 0
      %927 = vmatprep.subr.bf16.mxu0 0
      %928 = vmatpush1.bf16.xpose.msra.mxu0 0
      %929 = vmatprep.subr.bf16.mxu0 0
      %930 = vmatpush1.bf16.xpose.msra.mxu0 0
      %931 = vmatprep.subr.bf16.mxu0 0
      %932 = vmatpush1.bf16.xpose.msra.mxu0 0
      %933 = vmatprep.subr.bf16.mxu0 0
      %934 = vmatpush1.bf16.xpose.msra.mxu0 0
      %935 = vmatprep.subr.bf16.mxu0 0
      %936 = vmatpush1.bf16.xpose.msra.mxu0 0
      %937 = vmatprep.subr.bf16.mxu0 0
      %938 = vmatpush1.bf16.xpose.msra.mxu0 0
      %939 = vmatprep.subr.bf16.mxu0 0
      %940 = vmatpush1.bf16.xpose.msra.mxu0 0
      %941 = vmatprep.subr.bf16.mxu0 0
      %942 = vmatpush1.bf16.xpose.msra.mxu0 0
      %943 = vmatprep.subr.bf16.mxu0 0
      %944 = vmatpush1.bf16.xpose.msra.mxu0 0
      %945 = vmatprep.subr.bf16.mxu0 0
      %946 = vmatpush1.bf16.xpose.msra.mxu0 0
      %947 = vmatprep.subr.bf16.mxu0 0
      %948 = vmatpush1.bf16.xpose.msra.mxu0 0
      %949 = vmatprep.subr.bf16.mxu0 0
      %950 = vmatpush1.bf16.xpose.msra.mxu0 0
      %951 = vmatprep.subr.bf16.mxu0 0
      %952 = vmatpush1.bf16.xpose.msra.mxu0 0
      %953 = vmatprep.subr.bf16.mxu0 0
      %954 = vmatpush1.bf16.xpose.msra.mxu0 0
      %955 = vmatprep.mubr.bf16.mxu0 0
      %956 = vmatmul.mubr.bf16.gmra.mrb[0].mxu0 %v918
      %v957 = vpop.f32.mrb[0].mxu0
      %v958 = vadd.f32 0.0, %v957
      %v959 = vpop.f32.mrb[0].mxu0
      %v960 = vpop.f32.mrb[0].mxu0
      %v961 = vpop.f32.mrb[0].mxu0
      %962 = vdwg.mxu0
      %s963 = scalar_lea.vmem %s6, 2
      %v964 = vld [vmem:[%s963] sm:$0x1]
      %v966 = vlaneseq
      %v967 = vshrl.u32 %v966, 7
      %v968 = vsub.s32 0, %v967
      %v969 = vrot.slane %v964, %v968
      %970 = vset.pattern.permute.xlu0 0
      %971 = vperm.xlu0 %970, %v969
      %v972 = vpop.permute.xlu0 %971
      %v974 = vmul.f32 %v958, %v972
      %s975 = scalar_lea.vmem %s5, 8
      %v976 = vld [vmem:[%s975] sm:$0xf]
      %v977 = vadd.f32 %v974, %v976
      %v978 = vsel %vm681, %v977, -inf
      %979 = vmax.xlane.f32.xlu0 %v978
      %v980 = vpop.xlane.xlu0 %979
      %v981 = vsub.f32 %v977, %v980
      %v982 = vmul.f32 %v981, 1.442695
      %v983 = vpow.pop %v982
      %v984 = vsel %vm681, %v983, 0.0
      %985 = vadd.xlane.f32.xlu0 %v984
      %v986 = vpop.xlane.xlu0 %985
      %v987 = vrcp.pop %v986
      %v988 = vmul.f32 %v983, %v987
      %v989 = vpack.c.bf16 %v988, %v988
      %990 = vrot.lane.b32.xlu0 %v694, 96
      %v991 = vpop.permute.xlu0 %990
      %v993 = vsel %vm695, %v989, 0
      %v996 = vsel %vm699, %v991, 0
      %998 = vmatprep.subr.bf16.mxu0 0
      %999 = vmatpush1.bf16.msra.mxu0 %v996
      %1000 = vmatprep.subr.bf16.mxu0 0
      %1001 = vmatpush1.bf16.msra.mxu0 0
      %1002 = vmatprep.subr.bf16.mxu0 0
      %1003 = vmatpush1.bf16.msra.mxu0 0
      %1004 = vmatprep.subr.bf16.mxu0 0
      %1005 = vmatpush1.bf16.msra.mxu0 0
      %1006 = vmatprep.subr.bf16.mxu0 0
      %1007 = vmatpush1.bf16.msra.mxu0 0
      %1008 = vmatprep.subr.bf16.mxu0 0
      %1009 = vmatpush1.bf16.msra.mxu0 0
      %1010 = vmatprep.subr.bf16.mxu0 0
      %1011 = vmatpush1.bf16.msra.mxu0 0
      %1012 = vmatprep.subr.bf16.mxu0 0
      %1013 = vmatpush1.bf16.msra.mxu0 0
      %1014 = vmatprep.subr.bf16.mxu0 0
      %1015 = vmatpush1.bf16.msra.mxu0 0
      %1016 = vmatprep.subr.bf16.mxu0 0
      %1017 = vmatpush1.bf16.msra.mxu0 0
      %1018 = vmatprep.subr.bf16.mxu0 0
      %1019 = vmatpush1.bf16.msra.mxu0 0
      %1020 = vmatprep.subr.bf16.mxu0 0
      %1021 = vmatpush1.bf16.msra.mxu0 0
      %1022 = vmatprep.subr.bf16.mxu0 0
      %1023 = vmatpush1.bf16.msra.mxu0 0
      %1024 = vmatprep.subr.bf16.mxu0 0
      %1025 = vmatpush1.bf16.msra.mxu0 0
      %1026 = vmatprep.subr.bf16.mxu0 0
      %1027 = vmatpush1.bf16.msra.mxu0 0
      %1028 = vmatprep.subr.bf16.mxu0 0
      %1029 = vmatpush1.bf16.msra.mxu0 0
      %1030 = vmatprep.mubr.bf16.mxu0 0
      %1031 = vmatmul.mubr.bf16.gmra.mrb[0].mxu0 %v993
      %v1032 = vpop.f32.mrb[0].mxu0
      %v1033 = vadd.f32 0.0, %v1032
      %v1034 = vpop.f32.mrb[0].mxu0
      %v1035 = vpop.f32.mrb[0].mxu0
      %v1036 = vpop.f32.mrb[0].mxu0
      %1037 = vdwg.mxu0
      %1038 = vrot.lane.b32.xlu0 %v598, 80
      %v1039 = vpop.permute.xlu0 %1038
      %v1041 = vsel %vm599, %v1039, 0.0
      %1042 = vadd.xlane.f32.xlu0 %v1041
      %v1043 = vpop.xlane.xlu0 %1042
      %v1044 = vmax.f32 %v1043, 1e-24
      %v1045 = vrsqrt.pop %v1044
      %v1046 = vmul.f32 %v592, %v1045
      %1047 = vrot.lane.b32.xlu0 %v598, 16
      %v1048 = vpop.permute.xlu0 %1047
      %v1050 = vsel %vm599, %v1048, 0.0
      %1051 = vadd.xlane.f32.xlu0 %v1050
      %v1052 = vpop.xlane.xlu0 %1051
      %v1053 = vmax.f32 %v1052, 1e-24
      %v1054 = vrsqrt.pop %v1053
      %v1055 = vmul.f32 %v592, %v1054
      %v1056 = vpack.c.bf16 %v1046, %v1046
      %v1057 = vpack.c.bf16 %v1055, %v1055
      %1059 = vrot.lane.b32.xlu0 %v1056, 80
      %v1060 = vpop.permute.xlu0 %1059
      %1062 = vrot.lane.b32.xlu0 %v1057, 16
      %v1063 = vpop.permute.xlu0 %1062
      %v1065 = vsel %vm621, %v1060, 0
      %v1068 = vsel %vm621, %v1063, 0
      %1070 = vmatprep.subr.bf16.mxu0 0
      %1071 = vmatpush1.bf16.xpose.msra.mxu0 %v1068
      %1072 = vmatprep.subr.bf16.mxu0 0
      %1073 = vmatpush1.bf16.xpose.msra.mxu0 0
      %1074 = vmatprep.subr.bf16.mxu0 0
      %1075 = vmatpush1.bf16.xpose.msra.mxu0 0
      %1076 = vmatprep.subr.bf16.mxu0 0
      %1077 = vmatpush1.bf16.xpose.msra.mxu0 0
      %1078 = vmatprep.subr.bf16.mxu0 0
      %1079 = vmatpush1.bf16.xpose.msra.mxu0 0
      %1080 = vmatprep.subr.bf16.mxu0 0
      %1081 = vmatpush1.bf16.xpose.msra.mxu0 0
      %1082 = vmatprep.subr.bf16.mxu0 0
      %1083 = vmatpush1.bf16.xpose.msra.mxu0 0
      %1084 = vmatprep.subr.bf16.mxu0 0
      %1085 = vmatpush1.bf16.xpose.msra.mxu0 0
      %1086 = vmatprep.subr.bf16.mxu0 0
      %1087 = vmatpush1.bf16.xpose.msra.mxu0 0
      %1088 = vmatprep.subr.bf16.mxu0 0
      %1089 = vmatpush1.bf16.xpose.msra.mxu0 0
      %1090 = vmatprep.subr.bf16.mxu0 0
      %1091 = vmatpush1.bf16.xpose.msra.mxu0 0
      %1092 = vmatprep.subr.bf16.mxu0 0
      %1093 = vmatpush1.bf16.xpose.msra.mxu0 0
      %1094 = vmatprep.subr.bf16.mxu0 0
      %1095 = vmatpush1.bf16.xpose.msra.mxu0 0
      %1096 = vmatprep.subr.bf16.mxu0 0
      %1097 = vmatpush1.bf16.xpose.msra.mxu0 0
      %1098 = vmatprep.subr.bf16.mxu0 0
      %1099 = vmatpush1.bf16.xpose.msra.mxu0 0
      %1100 = vmatprep.subr.bf16.mxu0 0
      %1101 = vmatpush1.bf16.xpose.msra.mxu0 0
      %1102 = vmatprep.mubr.bf16.mxu0 0
      %1103 = vmatmul.mubr.bf16.gmra.mrb[0].mxu0 %v1065
      %v1104 = vpop.f32.mrb[0].mxu0
      %v1105 = vadd.f32 0.0, %v1104
      %v1106 = vpop.f32.mrb[0].mxu0
      %v1107 = vpop.f32.mrb[0].mxu0
      %v1108 = vpop.f32.mrb[0].mxu0
      %1109 = vdwg.mxu0
      %s1110 = scalar_lea.vmem %s6, 3
      %v1111 = vld [vmem:[%s1110] sm:$0x1]
      %v1113 = vlaneseq
      %v1114 = vshrl.u32 %v1113, 7
      %v1115 = vsub.s32 0, %v1114
      %v1116 = vrot.slane %v1111, %v1115
      %1117 = vset.pattern.permute.xlu0 0
      %1118 = vperm.xlu0 %1117, %v1116
      %v1119 = vpop.permute.xlu0 %1118
      %v1121 = vmul.f32 %v1105, %v1119
      %s1122 = scalar_lea.vmem %s5, 12
      %v1123 = vld [vmem:[%s1122] sm:$0xf]
      %v1124 = vadd.f32 %v1121, %v1123
      %v1125 = vsel %vm681, %v1124, -inf
      %1126 = vmax.xlane.f32.xlu0 %v1125
      %v1127 = vpop.xlane.xlu0 %1126
      %v1128 = vsub.f32 %v1124, %v1127
      %v1129 = vmul.f32 %v1128, 1.442695
      %v1130 = vpow.pop %v1129
      %v1131 = vsel %vm681, %v1130, 0.0
      %1132 = vadd.xlane.f32.xlu0 %v1131
      %v1133 = vpop.xlane.xlu0 %1132
      %v1134 = vrcp.pop %v1133
      %v1135 = vmul.f32 %v1130, %v1134
      %v1136 = vpack.c.bf16 %v1135, %v1135
      %1137 = vrot.lane.b32.xlu0 %v694, 80
      %v1138 = vpop.permute.xlu0 %1137
      %v1140 = vsel %vm695, %v1136, 0
      %v1143 = vsel %vm699, %v1138, 0
      %1145 = vmatprep.subr.bf16.mxu0 0
      %1146 = vmatpush1.bf16.msra.mxu0 %v1143
      %1147 = vmatprep.subr.bf16.mxu0 0
      %1148 = vmatpush1.bf16.msra.mxu0 0
      %1149 = vmatprep.subr.bf16.mxu0 0
      %1150 = vmatpush1.bf16.msra.mxu0 0
      %1151 = vmatprep.subr.bf16.mxu0 0
      %1152 = vmatpush1.bf16.msra.mxu0 0
      %1153 = vmatprep.subr.bf16.mxu0 0
      %1154 = vmatpush1.bf16.msra.mxu0 0
      %1155 = vmatprep.subr.bf16.mxu0 0
      %1156 = vmatpush1.bf16.msra.mxu0 0
      %1157 = vmatprep.subr.bf16.mxu0 0
      %1158 = vmatpush1.bf16.msra.mxu0 0
      %1159 = vmatprep.subr.bf16.mxu0 0
      %1160 = vmatpush1.bf16.msra.mxu0 0
      %1161 = vmatprep.subr.bf16.mxu0 0
      %1162 = vmatpush1.bf16.msra.mxu0 0
      %1163 = vmatprep.subr.bf16.mxu0 0
      %1164 = vmatpush1.bf16.msra.mxu0 0
      %1165 = vmatprep.subr.bf16.mxu0 0
      %1166 = vmatpush1.bf16.msra.mxu0 0
      %1167 = vmatprep.subr.bf16.mxu0 0
      %1168 = vmatpush1.bf16.msra.mxu0 0
      %1169 = vmatprep.subr.bf16.mxu0 0
      %1170 = vmatpush1.bf16.msra.mxu0 0
      %1171 = vmatprep.subr.bf16.mxu0 0
      %1172 = vmatpush1.bf16.msra.mxu0 0
      %1173 = vmatprep.subr.bf16.mxu0 0
      %1174 = vmatpush1.bf16.msra.mxu0 0
      %1175 = vmatprep.subr.bf16.mxu0 0
      %1176 = vmatpush1.bf16.msra.mxu0 0
      %1177 = vmatprep.mubr.bf16.mxu0 0
      %1178 = vmatmul.mubr.bf16.gmra.mrb[0].mxu0 %v1140
      %v1179 = vpop.f32.mrb[0].mxu0
      %v1180 = vadd.f32 0.0, %v1179
      %v1181 = vpop.f32.mrb[0].mxu0
      %v1182 = vpop.f32.mrb[0].mxu0
      %v1183 = vpop.f32.mrb[0].mxu0
      %1184 = vdwg.mxu0
      %1186 = vrot.lane.b32.xlu0 %v886, 16
      %v1187 = vpop.permute.xlu0 %1186
      %1190 = vrot.lane.b32.xlu0 %v1033, 32
      %v1191 = vpop.permute.xlu0 %1190
      %1194 = vrot.lane.b32.xlu0 %v1180, 48
      %v1195 = vpop.permute.xlu0 %1194
      %v1197 = vsel %vm621, %v738, %v1187
      %vm1198 = vcmask 261120
      %v1199 = vsel %vm1198, %v1197, %v1191
      %vm1200 = vcmask 392192
      %v1201 = vsel %vm1200, %v1199, %v1195
      %v1202 = vpack.c.bf16 %v1201, %v1201
      %v1203 = vld [vmem:[%s3] sm:$0xf]
      %v1204 = vld [vmem:[%s3 + $0x4] sm:$0xf]
      %v1205 = vld [vmem:[%s3 + $0x8] sm:$0xf]
      %v1206 = vld [vmem:[%s3 + $0xc] sm:$0xf]
      %v1207 = vld [vmem:[%s3 + $0x10] sm:$0xf]
      %v1208 = vld [vmem:[%s3 + $0x14] sm:$0xf]
      %v1209 = vld [vmem:[%s3 + $0x18] sm:$0xf]
      %v1210 = vld [vmem:[%s3 + $0x1c] sm:$0xf]
      %v1211 = vld [vmem:[%s4] sm:$0x1]
      %v1213 = vlaneseq
      %v1214 = vshrl.u32 %v1213, 7
      %v1215 = vsub.s32 0, %v1214
      %v1216 = vrot.slane %v1211, %v1215
      %v1226 = vunpack.c.l.b16 %v1203
      %v1227 = vunpack.c.l.b16 %v1204
      %v1228 = vunpack.c.l.b16 %v1205
      %v1229 = vunpack.c.l.b16 %v1206
      %v1230 = vunpack.c.l.b16 %v1207
      %v1231 = vunpack.c.l.b16 %v1208
      %v1232 = vunpack.c.l.b16 %v1209
      %v1233 = vunpack.c.l.b16 %v1210
      %v1234 = vpack.c.b16 %v1227, %v1226
      %v1235 = vpack.c.b16 %v1229, %v1228
      %v1236 = vpack.c.b16 %v1231, %v1230
      %v1237 = vpack.c.b16 %v1233, %v1232
      %v1243 = vsel %vm553, %v1202, 0
      %1245 = vmatprep.subr.bf16.mxu0 0
      %1246 = vmatpush1.bf16.msra.mxu0 %v1234
      %1247 = vmatprep.subr.bf16.mxu0 0
      %1248 = vmatpush1.bf16.msra.mxu0 %v1235
      %1249 = vmatprep.subr.bf16.mxu0 0
      %1250 = vmatpush1.bf16.msra.mxu0 %v1236
      %1251 = vmatprep.subr.bf16.mxu0 0
      %1252 = vmatpush1.bf16.msra.mxu0 %v1237
      %1253 = vmatprep.subr.bf16.mxu0 0
      %1254 = vmatpush1.bf16.msra.mxu0 0
      %1255 = vmatprep.subr.bf16.mxu0 0
      %1256 = vmatpush1.bf16.msra.mxu0 0
      %1257 = vmatprep.subr.bf16.mxu0 0
      %1258 = vmatpush1.bf16.msra.mxu0 0
      %1259 = vmatprep.subr.bf16.mxu0 0
      %1260 = vmatpush1.bf16.msra.mxu0 0
      %1261 = vmatprep.subr.bf16.mxu0 0
      %1262 = vmatpush1.bf16.msra.mxu0 0
      %1263 = vmatprep.subr.bf16.mxu0 0
      %1264 = vmatpush1.bf16.msra.mxu0 0
      %1265 = vmatprep.subr.bf16.mxu0 0
      %1266 = vmatpush1.bf16.msra.mxu0 0
      %1267 = vmatprep.subr.bf16.mxu0 0
      %1268 = vmatpush1.bf16.msra.mxu0 0
      %1269 = vmatprep.subr.bf16.mxu0 0
      %1270 = vmatpush1.bf16.msra.mxu0 0
      %1271 = vmatprep.subr.bf16.mxu0 0
      %1272 = vmatpush1.bf16.msra.mxu0 0
      %1273 = vmatprep.subr.bf16.mxu0 0
      %1274 = vmatpush1.bf16.msra.mxu0 0
      %1275 = vmatprep.subr.bf16.mxu0 0
      %1276 = vmatpush1.bf16.msra.mxu0 0
      %1277 = vmatprep.mubr.bf16.mxu0 0
      %1278 = vmatmul.mubr.bf16.gmra.mrb[0].mxu0 %v1243
      %v1279 = vpop.f32.mrb[0].mxu0
      %v1280 = vadd.f32 %v1216, %v1279
      %v1281 = vpop.f32.mrb[0].mxu0
      %v1282 = vpop.f32.mrb[0].mxu0
      %v1283 = vpop.f32.mrb[0].mxu0
      %1284 = vdwg.mxu0
      %v1285 = vld [vmem:[%s7] sm:$0x1]
      %v1286 = vld [vmem:[%s8] sm:$0x1]
      %vm1287 = vcmask 519168
      %v1288 = vsel %vm1287, %v1280, 0.0
      %1289 = vadd.xlane.f32.xlu0 %v1288
      %v1290 = vpop.xlane.xlu0 %1289
      %v1291 = vrcp.pop 64.0
      %v1292 = vmul.f32 %v1290, %v1291
      %v1293 = vsub.f32 %v1280, %v1292
      %v1294 = vmul.f32 %v1293, %v1293
      %v1295 = vsel %vm1287, %v1294, 0.0
      %1296 = vadd.xlane.f32.xlu0 %v1295
      %v1297 = vpop.xlane.xlu0 %1296
      %v1298 = vmul.f32 %v1297, %v1291
      %v1299 = vadd.f32 %v1298, 1e-05
      %v1300 = vrsqrt.pop %v1299
      %v1301 = vmul.f32 %v1293, %v1300
      %v1303 = vlaneseq
      %v1304 = vshrl.u32 %v1303, 7
      %v1305 = vsub.s32 0, %v1304
      %v1306 = vrot.slane %v1285, %v1305
      %v1308 = vmul.f32 %v1301, %v1306
      %v1310 = vlaneseq
      %v1311 = vshrl.u32 %v1310, 7
      %v1312 = vsub.s32 0, %v1311
      %v1313 = vrot.slane %v1286, %v1312
      %v1315 = vadd.f32 %v1308, %v1313
      %v1316 = vadd.f32 %v491, %v1315
      %v1317 = vpack.c.bf16 %v1316, %v1316
      %v1318 = vld [vmem:[%s9] sm:$0xff]
      %v1319 = vld [vmem:[%s9 + $0x8] sm:$0xff]
      %v1320 = vld [vmem:[%s9 + $0x10] sm:$0xff]
      %v1321 = vld [vmem:[%s9 + $0x18] sm:$0xff]
      %v1322 = vld [vmem:[%s9 + $0x20] sm:$0xff]
      %v1323 = vld [vmem:[%s9 + $0x28] sm:$0xff]
      %v1324 = vld [vmem:[%s9 + $0x30] sm:$0xff]
      %v1325 = vld [vmem:[%s9 + $0x38] sm:$0xff]
      %v1326 = vld [vmem:[%s10] sm:$0x3]
      %v1328 = vlaneseq
      %v1329 = vshrl.u32 %v1328, 7
      %v1330 = vsub.s32 0, %v1329
      %v1331 = vrot.slane %v1326, %v1330
      %v1332 = vlaneseq
      %v1333 = vshrl.u32 %v1332, 7
      %v1334 = vsub.s32 1, %v1333
      %v1335 = vrot.slane %v1326, %v1334
      %v1346 = vunpack.c.l.b16 %v1318
      %v1347 = vunpack.c.h.b16 %v1318
      %v1348 = vunpack.c.l.b16 %v1319
      %v1349 = vunpack.c.h.b16 %v1319
      %v1350 = vunpack.c.l.b16 %v1320
      %v1351 = vunpack.c.h.b16 %v1320
      %v1352 = vunpack.c.l.b16 %v1321
      %v1353 = vunpack.c.h.b16 %v1321
      %v1354 = vunpack.c.l.b16 %v1322
      %v1355 = vunpack.c.h.b16 %v1322
      %v1356 = vunpack.c.l.b16 %v1323
      %v1357 = vunpack.c.h.b16 %v1323
      %v1358 = vunpack.c.l.b16 %v1324
      %v1359 = vunpack.c.h.b16 %v1324
      %v1360 = vunpack.c.l.b16 %v1325
      %v1361 = vunpack.c.h.b16 %v1325
      %v1362 = vpack.c.b16 %v1348, %v1346
      %v1363 = vpack.c.b16 %v1349, %v1347
      %v1364 = vpack.c.b16 %v1352, %v1350
      %v1365 = vpack.c.b16 %v1353, %v1351
      %v1366 = vpack.c.b16 %v1356, %v1354
      %v1367 = vpack.c.b16 %v1357, %v1355
      %v1368 = vpack.c.b16 %v1360, %v1358
      %v1369 = vpack.c.b16 %v1361, %v1359
      %v1379 = vsel %vm553, %v1317, 0
      %1381 = vmatprep.subr.bf16.mxu0 %v1363
      %1382 = vmatpush1.bf16.msra.mxu0 %v1362
      %1383 = vmatprep.subr.bf16.mxu0 %v1365
      %1384 = vmatpush1.bf16.msra.mxu0 %v1364
      %1385 = vmatprep.subr.bf16.mxu0 %v1367
      %1386 = vmatpush1.bf16.msra.mxu0 %v1366
      %1387 = vmatprep.subr.bf16.mxu0 %v1369
      %1388 = vmatpush1.bf16.msra.mxu0 %v1368
      %1389 = vmatprep.subr.bf16.mxu0 0
      %1390 = vmatpush1.bf16.msra.mxu0 0
      %1391 = vmatprep.subr.bf16.mxu0 0
      %1392 = vmatpush1.bf16.msra.mxu0 0
      %1393 = vmatprep.subr.bf16.mxu0 0
      %1394 = vmatpush1.bf16.msra.mxu0 0
      %1395 = vmatprep.subr.bf16.mxu0 0
      %1396 = vmatpush1.bf16.msra.mxu0 0
      %1397 = vmatprep.subr.bf16.mxu0 0
      %1398 = vmatpush1.bf16.msra.mxu0 0
      %1399 = vmatprep.subr.bf16.mxu0 0
      %1400 = vmatpush1.bf16.msra.mxu0 0
      %1401 = vmatprep.subr.bf16.mxu0 0
      %1402 = vmatpush1.bf16.msra.mxu0 0
      %1403 = vmatprep.subr.bf16.mxu0 0
      %1404 = vmatpush1.bf16.msra.mxu0 0
      %1405 = vmatprep.subr.bf16.mxu0 0
      %1406 = vmatpush1.bf16.msra.mxu0 0
      %1407 = vmatprep.subr.bf16.mxu0 0
      %1408 = vmatpush1.bf16.msra.mxu0 0
      %1409 = vmatprep.subr.bf16.mxu0 0
      %1410 = vmatpush1.bf16.msra.mxu0 0
      %1411 = vmatprep.subr.bf16.mxu0 0
      %1412 = vmatpush1.bf16.msra.mxu0 0
      %1413 = vmatprep.mubr.bf16.mxu0 0
      %1414 = vmatmul.mubr.bf16.gmra.mrb[0].mxu0 %v1379
      %v1415 = vpop.f32.mrb[0].mxu0
      %v1416 = vadd.f32 %v1331, %v1415
      %v1417 = vpop.f32.mrb[0].mxu0
      %v1418 = vadd.f32 %v1335, %v1417
      %v1419 = vpop.f32.mrb[0].mxu0
      %v1420 = vpop.f32.mrb[0].mxu0
      %1421 = vdwg.mxu0
      %v1422 = vmul.f32 %v1416, 0.5
      %v1423 = vmul.f32 %v1418, 0.5
      %v1424 = vmul.f32 %v1416, 0.044715
      %v1425 = vmul.f32 %v1418, 0.044715
      %v1426 = vmul.f32 %v1424, %v1416
      %v1427 = vmul.f32 %v1425, %v1418
      %v1428 = vmul.f32 %v1426, %v1416
      %v1429 = vmul.f32 %v1427, %v1418
      %v1430 = vadd.f32 %v1416, %v1428
      %v1431 = vadd.f32 %v1418, %v1429
      %v1432 = vmul.f32 %v1430, 0.7978846
      %v1433 = vmul.f32 %v1431, 0.7978846
      %v1434 = vtanh.pop %v1432
      %v1435 = vtanh.pop %v1433
      %v1436 = vadd.f32 %v1434, 1.0
      %v1437 = vadd.f32 %v1435, 1.0
      %v1438 = vmul.f32 %v1422, %v1436
      %v1439 = vmul.f32 %v1423, %v1437
      %v1440 = vpack.c.bf16 %v1438, %v1438
      %v1441 = vpack.c.bf16 %v1439, %v1439
      %v1442 = vld [vmem:[%s11] sm:$0xf]
      %v1443 = vld [vmem:[%s11 + $0x4] sm:$0xf]
      %v1444 = vld [vmem:[%s11 + $0x8] sm:$0xf]
      %v1445 = vld [vmem:[%s11 + $0xc] sm:$0xf]
      %v1446 = vld [vmem:[%s11 + $0x10] sm:$0xf]
      %v1447 = vld [vmem:[%s11 + $0x14] sm:$0xf]
      %v1448 = vld [vmem:[%s11 + $0x18] sm:$0xf]
      %v1449 = vld [vmem:[%s11 + $0x1c] sm:$0xf]
      %v1450 = vld [vmem:[%s11 + $0x20] sm:$0xf]
      %v1451 = vld [vmem:[%s11 + $0x24] sm:$0xf]
      %v1452 = vld [vmem:[%s11 + $0x28] sm:$0xf]
      %v1453 = vld [vmem:[%s11 + $0x2c] sm:$0xf]
      %v1454 = vld [vmem:[%s11 + $0x30] sm:$0xf]
      %v1455 = vld [vmem:[%s11 + $0x34] sm:$0xf]
      %v1456 = vld [vmem:[%s11 + $0x38] sm:$0xf]
      %v1457 = vld [vmem:[%s11 + $0x3c] sm:$0xf]
      %v1458 = vld [vmem:[%s11 + $0x40] sm:$0xf]
      %v1459 = vld [vmem:[%s11 + $0x44] sm:$0xf]
      %v1460 = vld [vmem:[%s11 + $0x48] sm:$0xf]
      %v1461 = vld [vmem:[%s11 + $0x4c] sm:$0xf]
      %v1462 = vld [vmem:[%s11 + $0x50] sm:$0xf]
      %v1463 = vld [vmem:[%s11 + $0x54] sm:$0xf]
      %v1464 = vld [vmem:[%s11 + $0x58] sm:$0xf]
      %v1465 = vld [vmem:[%s11 + $0x5c] sm:$0xf]
      %v1466 = vld [vmem:[%s11 + $0x60] sm:$0xf]
      %v1467 = vld [vmem:[%s11 + $0x64] sm:$0xf]
      %v1468 = vld [vmem:[%s11 + $0x68] sm:$0xf]
      %v1469 = vld [vmem:[%s11 + $0x6c] sm:$0xf]
      %v1470 = vld [vmem:[%s11 + $0x70] sm:$0xf]
      %v1471 = vld [vmem:[%s11 + $0x74] sm:$0xf]
      %v1472 = vld [vmem:[%s11 + $0x78] sm:$0xf]
      %v1473 = vld [vmem:[%s11 + $0x7c] sm:$0xf]
      %v1474 = vld [vmem:[%s12] sm:$0x1]
      %v1476 = vlaneseq
      %v1477 = vshrl.u32 %v1476, 7
      %v1478 = vsub.s32 0, %v1477
      %v1479 = vrot.slane %v1474, %v1478
      %v1513 = vunpack.c.l.b16 %v1442
      %v1514 = vunpack.c.l.b16 %v1443
      %v1515 = vunpack.c.l.b16 %v1444
      %v1516 = vunpack.c.l.b16 %v1445
      %v1517 = vunpack.c.l.b16 %v1446
      %v1518 = vunpack.c.l.b16 %v1447
      %v1519 = vunpack.c.l.b16 %v1448
      %v1520 = vunpack.c.l.b16 %v1449
      %v1521 = vunpack.c.l.b16 %v1450
      %v1522 = vunpack.c.l.b16 %v1451
      %v1523 = vunpack.c.l.b16 %v1452
      %v1524 = vunpack.c.l.b16 %v1453
      %v1525 = vunpack.c.l.b16 %v1454
      %v1526 = vunpack.c.l.b16 %v1455
      %v1527 = vunpack.c.l.b16 %v1456
      %v1528 = vunpack.c.l.b16 %v1457
      %v1529 = vunpack.c.l.b16 %v1458
      %v1530 = vunpack.c.l.b16 %v1459
      %v1531 = vunpack.c.l.b16 %v1460
      %v1532 = vunpack.c.l.b16 %v1461
      %v1533 = vunpack.c.l.b16 %v1462
      %v1534 = vunpack.c.l.b16 %v1463
      %v1535 = vunpack.c.l.b16 %v1464
      %v1536 = vunpack.c.l.b16 %v1465
      %v1537 = vunpack.c.l.b16 %v1466
      %v1538 = vunpack.c.l.b16 %v1467
      %v1539 = vunpack.c.l.b16 %v1468
      %v1540 = vunpack.c.l.b16 %v1469
      %v1541 = vunpack.c.l.b16 %v1470
      %v1542 = vunpack.c.l.b16 %v1471
      %v1543 = vunpack.c.l.b16 %v1472
      %v1544 = vunpack.c.l.b16 %v1473
      %v1545 = vpack.c.b16 %v1514, %v1513
      %v1546 = vpack.c.b16 %v1516, %v1515
      %v1547 = vpack.c.b16 %v1518, %v1517
      %v1548 = vpack.c.b16 %v1520, %v1519
      %v1549 = vpack.c.b16 %v1522, %v1521
      %v1550 = vpack.c.b16 %v1524, %v1523
      %v1551 = vpack.c.b16 %v1526, %v1525
      %v1552 = vpack.c.b16 %v1528, %v1527
      %v1553 = vpack.c.b16 %v1530, %v1529
      %v1554 = vpack.c.b16 %v1532, %v1531
      %v1555 = vpack.c.b16 %v1534, %v1533
      %v1556 = vpack.c.b16 %v1536, %v1535
      %v1557 = vpack.c.b16 %v1538, %v1537
      %v1558 = vpack.c.b16 %v1540, %v1539
      %v1559 = vpack.c.b16 %v1542, %v1541
      %v1560 = vpack.c.b16 %v1544, %v1543
      %1577 = vmatprep.subr.bf16.mxu0 0
      %1578 = vmatpush1.bf16.msra.mxu0 %v1545
      %1579 = vmatprep.subr.bf16.mxu0 0
      %1580 = vmatpush1.bf16.msra.mxu0 %v1546
      %1581 = vmatprep.subr.bf16.mxu0 0
      %1582 = vmatpush1.bf16.msra.mxu0 %v1547
      %1583 = vmatprep.subr.bf16.mxu0 0
      %1584 = vmatpush1.bf16.msra.mxu0 %v1548
      %1585 = vmatprep.subr.bf16.mxu0 0
      %1586 = vmatpush1.bf16.msra.mxu0 %v1549
      %1587 = vmatprep.subr.bf16.mxu0 0
      %1588 = vmatpush1.bf16.msra.mxu0 %v1550
      %1589 = vmatprep.subr.bf16.mxu0 0
      %1590 = vmatpush1.bf16.msra.mxu0 %v1551
      %1591 = vmatprep.subr.bf16.mxu0 0
      %1592 = vmatpush1.bf16.msra.mxu0 %v1552
      %1593 = vmatprep.subr.bf16.mxu0 0
      %1594 = vmatpush1.bf16.msra.mxu0 %v1553
      %1595 = vmatprep.subr.bf16.mxu0 0
      %1596 = vmatpush1.bf16.msra.mxu0 %v1554
      %1597 = vmatprep.subr.bf16.mxu0 0
      %1598 = vmatpush1.bf16.msra.mxu0 %v1555
      %1599 = vmatprep.subr.bf16.mxu0 0
      %1600 = vmatpush1.bf16.msra.mxu0 %v1556
      %1601 = vmatprep.subr.bf16.mxu0 0
      %1602 = vmatpush1.bf16.msra.mxu0 %v1557
      %1603 = vmatprep.subr.bf16.mxu0 0
      %1604 = vmatpush1.bf16.msra.mxu0 %v1558
      %1605 = vmatprep.subr.bf16.mxu0 0
      %1606 = vmatpush1.bf16.msra.mxu0 %v1559
      %1607 = vmatprep.subr.bf16.mxu0 0
      %1608 = vmatpush1.bf16.msra.mxu0 %v1560
      %1609 = vmatprep.mubr.bf16.mxu0 %v1441
      %1610 = vmatmul.mubr.bf16.gmra.mrb[0].mxu0 %v1440
      %v1611 = vpop.f32.mrb[0].mxu0
      %v1612 = vadd.f32 %v1479, %v1611
      %v1613 = vpop.f32.mrb[0].mxu0
      %v1614 = vpop.f32.mrb[0].mxu0
      %v1615 = vpop.f32.mrb[0].mxu0
      %1616 = vdwg.mxu0
      %v1617 = vld [vmem:[%s13] sm:$0x1]
      %v1618 = vld [vmem:[%s14] sm:$0x1]
      %v1619 = vsel %vm1287, %v1612, 0.0
      %1620 = vadd.xlane.f32.xlu0 %v1619
      %v1621 = vpop.xlane.xlu0 %1620
      %v1622 = vmul.f32 %v1621, %v1291
      %v1623 = vsub.f32 %v1612, %v1622
      %v1624 = vmul.f32 %v1623, %v1623
      %v1625 = vsel %vm1287, %v1624, 0.0
      %1626 = vadd.xlane.f32.xlu0 %v1625
      %v1627 = vpop.xlane.xlu0 %1626
      %v1628 = vmul.f32 %v1627, %v1291
      %v1629 = vadd.f32 %v1628, 1e-05
      %v1630 = vrsqrt.pop %v1629
      %v1631 = vmul.f32 %v1623, %v1630
      %v1633 = vlaneseq
      %v1634 = vshrl.u32 %v1633, 7
      %v1635 = vsub.s32 0, %v1634
      %v1636 = vrot.slane %v1617, %v1635
      %v1638 = vmul.f32 %v1631, %v1636
      %v1640 = vlaneseq
      %v1641 = vshrl.u32 %v1640, 7
      %v1642 = vsub.s32 0, %v1641
      %v1643 = vrot.slane %v1618, %v1642
      %v1645 = vadd.f32 %v1638, %v1643
      %v1646 = vadd.f32 %v1316, %v1645
      %1647 = vst.msk [vmem:[%s489] sm:$0xf] %vm1287, %v1646
      %p1648 = scmp.lt.s32.totalorder %s26, 1
      %s1649 = scalar_select %p1648, %s26, 1
      %s1650 = smul.addr %s1649, 4
      %s1651 = scalar_lea.vmem %s15, %s1650
      // Predicated region
      $region81: #{_lambda_.11} parent=79 // pred_check
        %p1652 = pneg %p364
      $region82: #{_lambda_.11} parent=79 // pred_check_branch
        %1654 = sbr.rel (%p1652) target = $region84
      $region83: #{_lambda_.11} parent=79 // pred_region
        _
      $region84: #{_lambda_.11} parent=79 // pred_fallthru
        _
    $region80: #{_lambda_.11} parent=5 // pred_fallthru
      _
    %p1655 = scmp.le.s32.totalorder 2, %s21
    // Predicated region
    $region85: #{_lambda_.11} parent=5 // pred_check
      %p1656 = pneg %p1655
    $region86: #{_lambda_.11} parent=5 // pred_check_branch
      %1658 = sbr.rel (%p1656) target = $region88
    $region87: #{_lambda_.11} parent=5 // pred_region
      %s1659 = ssub.s32 %s21, 2
      // Predicated region
      $region89: #{_lambda_.11} parent=87 // pred_check
        %p1660 = pneg %p370
      $region90: #{_lambda_.11} parent=87 // pred_check_branch
        %1662 = sbr.rel (%p1660) target = $region92
      $region91: #{_lambda_.11} parent=87 // pred_region
        %p1663 = scmp.lt.s32.totalorder %s27, 1
        %s1664 = scalar_select %p1663, %s27, 1
        %s1665 = smul.addr %s1664, 4
        %s1666 = scalar_lea.vmem %s15, %s1665
      $region92: #{_lambda_.11} parent=87 // pred_fallthru
        _
    $region88: #{_lambda_.11} parent=5 // pred_fallthru
      _
  $region6: #{_lambda_.11} parent=0 // loop_footer
    %s25 = sadd.s32 1, %s21
  $region7: #{_lambda_.11} parent=0 // loop_footer_branch
    %20 = sbr.rel target = $region3
  $region8: #{_lambda_.11} parent=0 // loop_exit
    _

</llo_original>
